<compile_context>
chip_gen: v6e
topology: v6e:2x2x1
jax: 0.10.0
libtpu: 0.0.40
codegen_flags: <defaults>
</compile_context>

<pallas_src>
import jax
import jax.numpy as jnp
from jax.experimental import pallas as pl
from jax.experimental.pallas import tpu as pltpu


_TAPS = (0, 1, 14, 15)   # lane shift of a 2x2 tap (kh*14 + kw) on stride-14 rows
_H1_W = 181              # conv1 columns kept: r1 = oh*14+ow, r1 <= 12*14+12
_C2_W = 166              # conv2 columns kept: r2 = oh*14+ow, r2 <= 11*14+11
_TB = 8                  # samples per grid step (sublane-aligned)
_OUT_PAD = 128           # lane-dense logits slab: 10 real + 118 zero lanes


def _digitnet_kernel(x_ref, w1_ref, b1_ref, weff_ref, beff_ref,
                     wfc2_ref, bfc2_ref, o_ref):
    # x_ref: (TB, 196) -- TB flattened 14x14 images.
    x = x_ref[...]

    # Four lane-shifted views of the flattened images = the 2x2 conv taps.
    xs = [x[:, s:s + _H1_W] for s in _TAPS]               # 4 x (TB, 181)

    # conv1 (1->16, 2x2) + ReLU, fused per-channel with the folded
    # (conv2 ∘ fc1) linear map:
    #   h_c[b, r1] = relu(b1[c] + sum_t w1[c,t] * x[b, r1 + shift_t])   (VPU)
    #   acc[b, o] += h_c @ Weff[c]                                      (MXU)
    acc = beff_ref[...]                                    # (1, 64), broadcasts
    for c in range(16):
        h = (w1_ref[c, 0] * xs[0] + w1_ref[c, 1] * xs[1]
             + w1_ref[c, 2] * xs[2] + w1_ref[c, 3] * xs[3] + b1_ref[c])
        h = jnp.maximum(h, 0.0)                            # (TB, 181)
        acc = acc + jnp.dot(h, weff_ref[c],
                            preferred_element_type=jnp.float32)

    # fc1 ReLU, then fc2 into a 128-lane padded logits slab (unmasked store).
    h3 = jnp.maximum(acc, 0.0)                             # (TB, 64)
    out = jnp.dot(h3, wfc2_ref[...], preferred_element_type=jnp.float32)
    o_ref[...] = (out + bfc2_ref[...]).astype(o_ref.dtype)


def _round_up(n, m):
    return ((n + m - 1) // m) * m


def digitnet_forward(x, params):
    """x: (B, 1, 14, 14) float32 -> logits (B, 10) float32."""
    B = x.shape[0]
    B_pad = _round_up(B, _TB)

    # ---- host-side weight folding (tiny, once per weight set, under jit) ---
    w1 = params["conv1_w"].reshape(16, 4).astype(jnp.float32)   # [oc, kh*2+kw]
    b1 = params["conv1_b"].reshape(16).astype(jnp.float32)

    # fc1 weight on the stride-14 flattened conv2 grid, zero-stuffed at the
    # two garbage columns (ow2 = 12, 13) of every output row:
    #   wfc1_s[o, c2, r2] with r2 = oh2*14 + ow2.
    fc1_w4 = params["fc1_w"].reshape(64, 32, 12, 12)
    wfc1_s = jnp.pad(fc1_w4, ((0, 0), (0, 0), (0, 0), (0, 2)))      # width 12->14
    wfc1_s = wfc1_s.reshape(64, 32, 14 * 12)[:, :, :_C2_W]          # (64, 32, 166)

    # Fold conv2 into fc1 (valid: no nonlinearity between them):
    #   Weff[c1, r1, o] = sum_{kh,kw,c2} conv2_w[c2,c1,kh,kw]
    #                      * wfc1_s[o, c2, r1 - (kh*14 + kw)]
    # Zero-stuffed columns of wfc1_s make Weff exactly zero on conv1's
    # image-wrap garbage columns, so the kernel never has to mask them.
    w2 = params["conv2_w"].astype(jnp.float32)                      # (32,16,2,2)
    weff = jnp.zeros((16, _H1_W, 64), jnp.float32)
    for kh in range(2):
        for kw in range(2):
            s = kh * 14 + kw
            contrib = jnp.einsum("ci,ocr->iro", w2[:, :, kh, kw], wfc1_s)
            weff = weff.at[:, s:s + _C2_W, :].add(contrib)
    beff = params["fc1_b"] + jnp.einsum("c,ochw->o", params["conv2_b"], fc1_w4)
    beff = beff.reshape(1, 64).astype(jnp.float32)

    # fc2, zero-padded to a lane-dense 128-wide logits slab.
    wfc2 = jnp.pad(params["fc2_w"].T, ((0, 0), (0, _OUT_PAD - 10)))  # (64, 128)
    bfc2 = jnp.pad(params["fc2_b"].reshape(1, 10),
                   ((0, 0), (0, _OUT_PAD - 10)))                     # (1, 128)

    x_rows = x.reshape(B, 14 * 14).astype(jnp.float32)               # (B, 196)
    if B_pad != B:
        x_rows = jnp.pad(x_rows, ((0, B_pad - B), (0, 0)))

    rep2 = lambda b: (0, 0)
    rep3 = lambda b: (0, 0, 0)
    smem = pl.BlockSpec(memory_space=pltpu.MemorySpace.SMEM)

    out = pl.pallas_call(
        _digitnet_kernel,
        out_shape=jax.ShapeDtypeStruct((B_pad, _OUT_PAD), jnp.float32),
        grid=(B_pad // _TB,),
        in_specs=[
            pl.BlockSpec((_TB, 196), lambda b: (b, 0)),       # TB samples / step
            smem,                                             # w1 (16, 4) scalars
            smem,                                             # b1 (16,)   scalars
            pl.BlockSpec((16, _H1_W, 64), rep3),              # folded conv2∘fc1
            pl.BlockSpec((1, 64), rep2),                      # folded fc1 bias
            pl.BlockSpec((64, _OUT_PAD), rep2),               # fc2 weight (padded)
            pl.BlockSpec((1, _OUT_PAD), rep2),                # fc2 bias   (padded)
        ],
        out_specs=pl.BlockSpec((_TB, _OUT_PAD), lambda b: (b, 0)),
        compiler_params=pltpu.CompilerParams(
            dimension_semantics=("parallel",)),
    )(x_rows, w1, b1, weff, beff, wfc2, bfc2)
    return out[:B, :10]


# ---- pure-JAX reference (mirrors the PyTorch forward exactly) --------------
def digitnet_reference(x, params):
    dn = ("NCHW", "OIHW", "NCHW")
    y = jax.lax.conv_general_dilated(x, params["conv1_w"], (1, 1), "VALID",
                                     dimension_numbers=dn)
    y = jnp.maximum(y + params["conv1_b"][None, :, None, None], 0.0)
    y = jax.lax.conv_general_dilated(y, params["conv2_w"], (1, 1), "VALID",
                                     dimension_numbers=dn)
    y = y + params["conv2_b"][None, :, None, None]
    y = y.reshape(x.shape[0], -1)                     # torch.flatten(1), NCHW order
    y = jnp.maximum(y @ params["fc1_w"].T + params["fc1_b"], 0.0)
    return y @ params["fc2_w"].T + params["fc2_b"]


def init_params(key):
    ks = jax.random.split(key, 8)

    def w(k, shape, fan_in):
        return jax.random.normal(k, shape, jnp.float32) / jnp.sqrt(fan_in)

    return {
        "conv1_w": w(ks[0], (16, 1, 2, 2), 4),
        "conv1_b": w(ks[1], (16,), 4),
        "conv2_w": w(ks[2], (32, 16, 2, 2), 64),
        "conv2_b": w(ks[3], (32,), 64),
        "fc1_w": w(ks[4], (64, 32 * 12 * 12), 32 * 12 * 12),
        "fc1_b": w(ks[5], (64,), 32 * 12 * 12),
        "fc2_w": w(ks[6], (10, 64), 64),
        "fc2_b": w(ks[7], (10,), 64),
    }


if __name__ == "__main__":
    key = jax.random.PRNGKey(0)
    kx, kp = jax.random.split(key)

    # fc1 expects 32*12*12 features -> two 2x2/stride-1 convs imply a 14x14
    # single-channel input.
    x = jax.random.normal(kx, (2, 1, 14, 14), jnp.float32)
    params = init_params(kp)

    out = jax.block_until_ready(jax.jit(digitnet_forward)(x, params))
    ref = jax.block_until_ready(jax.jit(digitnet_reference)(x, params))

    assert out.shape == (2, 10)
    assert bool(jnp.all(jnp.isfinite(out)))
    err = float(jnp.max(jnp.abs(out - ref)))
    assert err < 5e-2, f"mismatch vs reference: max|diff|={err}"
    print("KERNEL_OK")
</pallas_src>

<mosaic_0001>
module attributes {stable_mosaic.version = 11 : i64} {
  func.func @_digitnet_kernel(%arg0: i32, %arg1: memref<8x196xf32, #tpu.memory_space<vmem>>, %arg2: memref<16x4xf32, #tpu.memory_space<smem>>, %arg3: memref<16xf32, #tpu.memory_space<smem>>, %arg4: memref<16x181x64xf32, #tpu.memory_space<vmem>>, %arg5: memref<1x64xf32, #tpu.memory_space<vmem>>, %arg6: memref<64x128xf32, #tpu.memory_space<vmem>>, %arg7: memref<1x128xf32, #tpu.memory_space<vmem>>, %arg8: memref<8x128xf32, #tpu.memory_space<vmem>>) attributes {dimension_semantics = [#tpu.dimension_semantics<parallel>], iteration_bounds = array<i64: 1>, scalar_prefetch = 0 : i64, scratch_operands = 0 : i64, tpu.core_type = #tpu.core_type<tc>, window_params = [{transform_indices = @transform_0, window_bounds = array<i64: 8, 196>}, {transform_indices = @transform_1, window_bounds = array<i64: 16, 4>}, {transform_indices = @transform_2, window_bounds = array<i64: 16>}, {pipeline_mode = #tpu.pipeline_mode<synchronous>, transform_indices = @transform_3, window_bounds = array<i64: 16, 181, 64>}, {pipeline_mode = #tpu.pipeline_mode<synchronous>, transform_indices = @transform_4, window_bounds = array<i64: 1, 64>}, {pipeline_mode = #tpu.pipeline_mode<synchronous>, transform_indices = @transform_5, window_bounds = array<i64: 64, 128>}, {pipeline_mode = #tpu.pipeline_mode<synchronous>, transform_indices = @transform_6, window_bounds = array<i64: 1, 128>}, {transform_indices = @transform_7, window_bounds = array<i64: 8, 128>}]} {
    %c0 = arith.constant 0 : index
    %c0_0 = arith.constant 0 : index
    %0 = vector.load %arg1[%c0, %c0_0] : memref<8x196xf32, #tpu.memory_space<vmem>>, vector<8x196xf32>
    %1 = vector.extract_strided_slice %0 {offsets = [0, 0], sizes = [8, 181], strides = [1, 1]} : vector<8x196xf32> to vector<8x181xf32>
    %2 = vector.extract_strided_slice %0 {offsets = [0, 1], sizes = [8, 181], strides = [1, 1]} : vector<8x196xf32> to vector<8x181xf32>
    %3 = vector.extract_strided_slice %0 {offsets = [0, 14], sizes = [8, 181], strides = [1, 1]} : vector<8x196xf32> to vector<8x181xf32>
    %4 = vector.extract_strided_slice %0 {offsets = [0, 15], sizes = [8, 181], strides = [1, 1]} : vector<8x196xf32> to vector<8x181xf32>
    %c0_1 = arith.constant 0 : index
    %c0_2 = arith.constant 0 : index
    %5 = vector.load %arg5[%c0_1, %c0_2] : memref<1x64xf32, #tpu.memory_space<vmem>>, vector<1x64xf32>
    %c0_3 = arith.constant 0 : index
    %c0_4 = arith.constant 0 : index
    %6 = memref.load %arg2[%c0_3, %c0_4] : memref<16x4xf32, #tpu.memory_space<smem>>
    %7 = vector.broadcast %6 : f32 to vector<8x181xf32>
    %8 = arith.mulf %7, %1 : vector<8x181xf32>
    %c0_5 = arith.constant 0 : index
    %c1 = arith.constant 1 : index
    %9 = memref.load %arg2[%c0_5, %c1] : memref<16x4xf32, #tpu.memory_space<smem>>
    %10 = vector.broadcast %9 : f32 to vector<8x181xf32>
    %11 = arith.mulf %10, %2 : vector<8x181xf32>
    %12 = arith.addf %8, %11 : vector<8x181xf32>
    %c0_6 = arith.constant 0 : index
    %c2 = arith.constant 2 : index
    %13 = memref.load %arg2[%c0_6, %c2] : memref<16x4xf32, #tpu.memory_space<smem>>
    %14 = vector.broadcast %13 : f32 to vector<8x181xf32>
    %15 = arith.mulf %14, %3 : vector<8x181xf32>
    %16 = arith.addf %12, %15 : vector<8x181xf32>
    %c0_7 = arith.constant 0 : index
    %c3 = arith.constant 3 : index
    %17 = memref.load %arg2[%c0_7, %c3] : memref<16x4xf32, #tpu.memory_space<smem>>
    %18 = vector.broadcast %17 : f32 to vector<8x181xf32>
    %19 = arith.mulf %18, %4 : vector<8x181xf32>
    %20 = arith.addf %16, %19 : vector<8x181xf32>
    %c0_8 = arith.constant 0 : index
    %21 = memref.load %arg3[%c0_8] : memref<16xf32, #tpu.memory_space<smem>>
    %22 = vector.broadcast %21 : f32 to vector<8x181xf32>
    %23 = arith.addf %20, %22 : vector<8x181xf32>
    %cst = arith.constant 0.000000e+00 : f32
    %24 = vector.broadcast %cst : f32 to vector<8x181xf32>
    %25 = arith.maximumf %23, %24 : vector<8x181xf32>
    %c0_9 = arith.constant 0 : index
    %c0_10 = arith.constant 0 : index
    %c0_11 = arith.constant 0 : index
    %26 = vector.load %arg4[%c0_9, %c0_10, %c0_11] : memref<16x181x64xf32, #tpu.memory_space<vmem>>, vector<1x181x64xf32>
    %27 = vector.shape_cast %26 : vector<1x181x64xf32> to vector<181x64xf32>
    %cst_12 = arith.constant dense<0.000000e+00> : vector<8x64xf32>
    %28 = tpu.matmul %25, %27, %cst_12 {dimension_numbers = #tpu.dot_dimension_numbers<[1], [0], [0], [1], [0, 0, 1, 1], [], []>} : vector<8x181xf32>, vector<181x64xf32>, vector<8x64xf32> -> vector<8x64xf32>
    %29 = vector.broadcast %5 : vector<1x64xf32> to vector<8x64xf32>
    %30 = arith.addf %29, %28 : vector<8x64xf32>
    %c1_13 = arith.constant 1 : index
    %c0_14 = arith.constant 0 : index
    %31 = memref.load %arg2[%c1_13, %c0_14] : memref<16x4xf32, #tpu.memory_space<smem>>
    %32 = vector.broadcast %31 : f32 to vector<8x181xf32>
    %33 = arith.mulf %32, %1 : vector<8x181xf32>
    %c1_15 = arith.constant 1 : index
    %c1_16 = arith.constant 1 : index
    %34 = memref.load %arg2[%c1_15, %c1_16] : memref<16x4xf32, #tpu.memory_space<smem>>
    %35 = vector.broadcast %34 : f32 to vector<8x181xf32>
    %36 = arith.mulf %35, %2 : vector<8x181xf32>
    %37 = arith.addf %33, %36 : vector<8x181xf32>
    %c1_17 = arith.constant 1 : index
    %c2_18 = arith.constant 2 : index
    %38 = memref.load %arg2[%c1_17, %c2_18] : memref<16x4xf32, #tpu.memory_space<smem>>
    %39 = vector.broadcast %38 : f32 to vector<8x181xf32>
    %40 = arith.mulf %39, %3 : vector<8x181xf32>
    %41 = arith.addf %37, %40 : vector<8x181xf32>
    %c1_19 = arith.constant 1 : index
    %c3_20 = arith.constant 3 : index
    %42 = memref.load %arg2[%c1_19, %c3_20] : memref<16x4xf32, #tpu.memory_space<smem>>
    %43 = vector.broadcast %42 : f32 to vector<8x181xf32>
    %44 = arith.mulf %43, %4 : vector<8x181xf32>
    %45 = arith.addf %41, %44 : vector<8x181xf32>
    %c1_21 = arith.constant 1 : index
    %46 = memref.load %arg3[%c1_21] : memref<16xf32, #tpu.memory_space<smem>>
    %47 = vector.broadcast %46 : f32 to vector<8x181xf32>
    %48 = arith.addf %45, %47 : vector<8x181xf32>
    %cst_22 = arith.constant 0.000000e+00 : f32
    %49 = vector.broadcast %cst_22 : f32 to vector<8x181xf32>
    %50 = arith.maximumf %48, %49 : vector<8x181xf32>
    %c1_23 = arith.constant 1 : index
    %c0_24 = arith.constant 0 : index
    %c0_25 = arith.constant 0 : index
    %51 = vector.load %arg4[%c1_23, %c0_24, %c0_25] : memref<16x181x64xf32, #tpu.memory_space<vmem>>, vector<1x181x64xf32>
    %52 = vector.shape_cast %51 : vector<1x181x64xf32> to vector<181x64xf32>
    %cst_26 = arith.constant dense<0.000000e+00> : vector<8x64xf32>
    %53 = tpu.matmul %50, %52, %cst_26 {dimension_numbers = #tpu.dot_dimension_numbers<[1], [0], [0], [1], [0, 0, 1, 1], [], []>} : vector<8x181xf32>, vector<181x64xf32>, vector<8x64xf32> -> vector<8x64xf32>
    %54 = arith.addf %30, %53 : vector<8x64xf32>
    %c2_27 = arith.constant 2 : index
    %c0_28 = arith.constant 0 : index
    %55 = memref.load %arg2[%c2_27, %c0_28] : memref<16x4xf32, #tpu.memory_space<smem>>
    %56 = vector.broadcast %55 : f32 to vector<8x181xf32>
    %57 = arith.mulf %56, %1 : vector<8x181xf32>
    %c2_29 = arith.constant 2 : index
    %c1_30 = arith.constant 1 : index
    %58 = memref.load %arg2[%c2_29, %c1_30] : memref<16x4xf32, #tpu.memory_space<smem>>
    %59 = vector.broadcast %58 : f32 to vector<8x181xf32>
    %60 = arith.mulf %59, %2 : vector<8x181xf32>
    %61 = arith.addf %57, %60 : vector<8x181xf32>
    %c2_31 = arith.constant 2 : index
    %c2_32 = arith.constant 2 : index
    %62 = memref.load %arg2[%c2_31, %c2_32] : memref<16x4xf32, #tpu.memory_space<smem>>
    %63 = vector.broadcast %62 : f32 to vector<8x181xf32>
    %64 = arith.mulf %63, %3 : vector<8x181xf32>
    %65 = arith.addf %61, %64 : vector<8x181xf32>
    %c2_33 = arith.constant 2 : index
    %c3_34 = arith.constant 3 : index
    %66 = memref.load %arg2[%c2_33, %c3_34] : memref<16x4xf32, #tpu.memory_space<smem>>
    %67 = vector.broadcast %66 : f32 to vector<8x181xf32>
    %68 = arith.mulf %67, %4 : vector<8x181xf32>
    %69 = arith.addf %65, %68 : vector<8x181xf32>
    %c2_35 = arith.constant 2 : index
    %70 = memref.load %arg3[%c2_35] : memref<16xf32, #tpu.memory_space<smem>>
    %71 = vector.broadcast %70 : f32 to vector<8x181xf32>
    %72 = arith.addf %69, %71 : vector<8x181xf32>
    %cst_36 = arith.constant 0.000000e+00 : f32
    %73 = vector.broadcast %cst_36 : f32 to vector<8x181xf32>
    %74 = arith.maximumf %72, %73 : vector<8x181xf32>
    %c2_37 = arith.constant 2 : index
    %c0_38 = arith.constant 0 : index
    %c0_39 = arith.constant 0 : index
    %75 = vector.load %arg4[%c2_37, %c0_38, %c0_39] : memref<16x181x64xf32, #tpu.memory_space<vmem>>, vector<1x181x64xf32>
    %76 = vector.shape_cast %75 : vector<1x181x64xf32> to vector<181x64xf32>
    %cst_40 = arith.constant dense<0.000000e+00> : vector<8x64xf32>
    %77 = tpu.matmul %74, %76, %cst_40 {dimension_numbers = #tpu.dot_dimension_numbers<[1], [0], [0], [1], [0, 0, 1, 1], [], []>} : vector<8x181xf32>, vector<181x64xf32>, vector<8x64xf32> -> vector<8x64xf32>
    %78 = arith.addf %54, %77 : vector<8x64xf32>
    %c3_41 = arith.constant 3 : index
    %c0_42 = arith.constant 0 : index
    %79 = memref.load %arg2[%c3_41, %c0_42] : memref<16x4xf32, #tpu.memory_space<smem>>
    %80 = vector.broadcast %79 : f32 to vector<8x181xf32>
    %81 = arith.mulf %80, %1 : vector<8x181xf32>
    %c3_43 = arith.constant 3 : index
    %c1_44 = arith.constant 1 : index
    %82 = memref.load %arg2[%c3_43, %c1_44] : memref<16x4xf32, #tpu.memory_space<smem>>
    %83 = vector.broadcast %82 : f32 to vector<8x181xf32>
    %84 = arith.mulf %83, %2 : vector<8x181xf32>
    %85 = arith.addf %81, %84 : vector<8x181xf32>
    %c3_45 = arith.constant 3 : index
    %c2_46 = arith.constant 2 : index
    %86 = memref.load %arg2[%c3_45, %c2_46] : memref<16x4xf32, #tpu.memory_space<smem>>
    %87 = vector.broadcast %86 : f32 to vector<8x181xf32>
    %88 = arith.mulf %87, %3 : vector<8x181xf32>
    %89 = arith.addf %85, %88 : vector<8x181xf32>
    %c3_47 = arith.constant 3 : index
    %c3_48 = arith.constant 3 : index
    %90 = memref.load %arg2[%c3_47, %c3_48] : memref<16x4xf32, #tpu.memory_space<smem>>
    %91 = vector.broadcast %90 : f32 to vector<8x181xf32>
    %92 = arith.mulf %91, %4 : vector<8x181xf32>
    %93 = arith.addf %89, %92 : vector<8x181xf32>
    %c3_49 = arith.constant 3 : index
    %94 = memref.load %arg3[%c3_49] : memref<16xf32, #tpu.memory_space<smem>>
    %95 = vector.broadcast %94 : f32 to vector<8x181xf32>
    %96 = arith.addf %93, %95 : vector<8x181xf32>
    %cst_50 = arith.constant 0.000000e+00 : f32
    %97 = vector.broadcast %cst_50 : f32 to vector<8x181xf32>
    %98 = arith.maximumf %96, %97 : vector<8x181xf32>
    %c3_51 = arith.constant 3 : index
    %c0_52 = arith.constant 0 : index
    %c0_53 = arith.constant 0 : index
    %99 = vector.load %arg4[%c3_51, %c0_52, %c0_53] : memref<16x181x64xf32, #tpu.memory_space<vmem>>, vector<1x181x64xf32>
    %100 = vector.shape_cast %99 : vector<1x181x64xf32> to vector<181x64xf32>
    %cst_54 = arith.constant dense<0.000000e+00> : vector<8x64xf32>
    %101 = tpu.matmul %98, %100, %cst_54 {dimension_numbers = #tpu.dot_dimension_numbers<[1], [0], [0], [1], [0, 0, 1, 1], [], []>} : vector<8x181xf32>, vector<181x64xf32>, vector<8x64xf32> -> vector<8x64xf32>
    %102 = arith.addf %78, %101 : vector<8x64xf32>
    %c4 = arith.constant 4 : index
    %c0_55 = arith.constant 0 : index
    %103 = memref.load %arg2[%c4, %c0_55] : memref<16x4xf32, #tpu.memory_space<smem>>
    %104 = vector.broadcast %103 : f32 to vector<8x181xf32>
    %105 = arith.mulf %104, %1 : vector<8x181xf32>
    %c4_56 = arith.constant 4 : index
    %c1_57 = arith.constant 1 : index
    %106 = memref.load %arg2[%c4_56, %c1_57] : memref<16x4xf32, #tpu.memory_space<smem>>
    %107 = vector.broadcast %106 : f32 to vector<8x181xf32>
    %108 = arith.mulf %107, %2 : vector<8x181xf32>
    %109 = arith.addf %105, %108 : vector<8x181xf32>
    %c4_58 = arith.constant 4 : index
    %c2_59 = arith.constant 2 : index
    %110 = memref.load %arg2[%c4_58, %c2_59] : memref<16x4xf32, #tpu.memory_space<smem>>
    %111 = vector.broadcast %110 : f32 to vector<8x181xf32>
    %112 = arith.mulf %111, %3 : vector<8x181xf32>
    %113 = arith.addf %109, %112 : vector<8x181xf32>
    %c4_60 = arith.constant 4 : index
    %c3_61 = arith.constant 3 : index
    %114 = memref.load %arg2[%c4_60, %c3_61] : memref<16x4xf32, #tpu.memory_space<smem>>
    %115 = vector.broadcast %114 : f32 to vector<8x181xf32>
    %116 = arith.mulf %115, %4 : vector<8x181xf32>
    %117 = arith.addf %113, %116 : vector<8x181xf32>
    %c4_62 = arith.constant 4 : index
    %118 = memref.load %arg3[%c4_62] : memref<16xf32, #tpu.memory_space<smem>>
    %119 = vector.broadcast %118 : f32 to vector<8x181xf32>
    %120 = arith.addf %117, %119 : vector<8x181xf32>
    %cst_63 = arith.constant 0.000000e+00 : f32
    %121 = vector.broadcast %cst_63 : f32 to vector<8x181xf32>
    %122 = arith.maximumf %120, %121 : vector<8x181xf32>
    %c4_64 = arith.constant 4 : index
    %c0_65 = arith.constant 0 : index
    %c0_66 = arith.constant 0 : index
    %123 = vector.load %arg4[%c4_64, %c0_65, %c0_66] : memref<16x181x64xf32, #tpu.memory_space<vmem>>, vector<1x181x64xf32>
    %124 = vector.shape_cast %123 : vector<1x181x64xf32> to vector<181x64xf32>
    %cst_67 = arith.constant dense<0.000000e+00> : vector<8x64xf32>
    %125 = tpu.matmul %122, %124, %cst_67 {dimension_numbers = #tpu.dot_dimension_numbers<[1], [0], [0], [1], [0, 0, 1, 1], [], []>} : vector<8x181xf32>, vector<181x64xf32>, vector<8x64xf32> -> vector<8x64xf32>
    %126 = arith.addf %102, %125 : vector<8x64xf32>
    %c5 = arith.constant 5 : index
    %c0_68 = arith.constant 0 : index
    %127 = memref.load %arg2[%c5, %c0_68] : memref<16x4xf32, #tpu.memory_space<smem>>
    %128 = vector.broadcast %127 : f32 to vector<8x181xf32>
    %129 = arith.mulf %128, %1 : vector<8x181xf32>
    %c5_69 = arith.constant 5 : index
    %c1_70 = arith.constant 1 : index
    %130 = memref.load %arg2[%c5_69, %c1_70] : memref<16x4xf32, #tpu.memory_space<smem>>
    %131 = vector.broadcast %130 : f32 to vector<8x181xf32>
    %132 = arith.mulf %131, %2 : vector<8x181xf32>
    %133 = arith.addf %129, %132 : vector<8x181xf32>
    %c5_71 = arith.constant 5 : index
    %c2_72 = arith.constant 2 : index
    %134 = memref.load %arg2[%c5_71, %c2_72] : memref<16x4xf32, #tpu.memory_space<smem>>
    %135 = vector.broadcast %134 : f32 to vector<8x181xf32>
    %136 = arith.mulf %135, %3 : vector<8x181xf32>
    %137 = arith.addf %133, %136 : vector<8x181xf32>
    %c5_73 = arith.constant 5 : index
    %c3_74 = arith.constant 3 : index
    %138 = memref.load %arg2[%c5_73, %c3_74] : memref<16x4xf32, #tpu.memory_space<smem>>
    %139 = vector.broadcast %138 : f32 to vector<8x181xf32>
    %140 = arith.mulf %139, %4 : vector<8x181xf32>
    %141 = arith.addf %137, %140 : vector<8x181xf32>
    %c5_75 = arith.constant 5 : index
    %142 = memref.load %arg3[%c5_75] : memref<16xf32, #tpu.memory_space<smem>>
    %143 = vector.broadcast %142 : f32 to vector<8x181xf32>
    %144 = arith.addf %141, %143 : vector<8x181xf32>
    %cst_76 = arith.constant 0.000000e+00 : f32
    %145 = vector.broadcast %cst_76 : f32 to vector<8x181xf32>
    %146 = arith.maximumf %144, %145 : vector<8x181xf32>
    %c5_77 = arith.constant 5 : index
    %c0_78 = arith.constant 0 : index
    %c0_79 = arith.constant 0 : index
    %147 = vector.load %arg4[%c5_77, %c0_78, %c0_79] : memref<16x181x64xf32, #tpu.memory_space<vmem>>, vector<1x181x64xf32>
    %148 = vector.shape_cast %147 : vector<1x181x64xf32> to vector<181x64xf32>
    %cst_80 = arith.constant dense<0.000000e+00> : vector<8x64xf32>
    %149 = tpu.matmul %146, %148, %cst_80 {dimension_numbers = #tpu.dot_dimension_numbers<[1], [0], [0], [1], [0, 0, 1, 1], [], []>} : vector<8x181xf32>, vector<181x64xf32>, vector<8x64xf32> -> vector<8x64xf32>
    %150 = arith.addf %126, %149 : vector<8x64xf32>
    %c6 = arith.constant 6 : index
    %c0_81 = arith.constant 0 : index
    %151 = memref.load %arg2[%c6, %c0_81] : memref<16x4xf32, #tpu.memory_space<smem>>
    %152 = vector.broadcast %151 : f32 to vector<8x181xf32>
    %153 = arith.mulf %152, %1 : vector<8x181xf32>
    %c6_82 = arith.constant 6 : index
    %c1_83 = arith.constant 1 : index
    %154 = memref.load %arg2[%c6_82, %c1_83] : memref<16x4xf32, #tpu.memory_space<smem>>
    %155 = vector.broadcast %154 : f32 to vector<8x181xf32>
    %156 = arith.mulf %155, %2 : vector<8x181xf32>
    %157 = arith.addf %153, %156 : vector<8x181xf32>
    %c6_84 = arith.constant 6 : index
    %c2_85 = arith.constant 2 : index
    %158 = memref.load %arg2[%c6_84, %c2_85] : memref<16x4xf32, #tpu.memory_space<smem>>
    %159 = vector.broadcast %158 : f32 to vector<8x181xf32>
    %160 = arith.mulf %159, %3 : vector<8x181xf32>
    %161 = arith.addf %157, %160 : vector<8x181xf32>
    %c6_86 = arith.constant 6 : index
    %c3_87 = arith.constant 3 : index
    %162 = memref.load %arg2[%c6_86, %c3_87] : memref<16x4xf32, #tpu.memory_space<smem>>
    %163 = vector.broadcast %162 : f32 to vector<8x181xf32>
    %164 = arith.mulf %163, %4 : vector<8x181xf32>
    %165 = arith.addf %161, %164 : vector<8x181xf32>
    %c6_88 = arith.constant 6 : index
    %166 = memref.load %arg3[%c6_88] : memref<16xf32, #tpu.memory_space<smem>>
    %167 = vector.broadcast %166 : f32 to vector<8x181xf32>
    %168 = arith.addf %165, %167 : vector<8x181xf32>
    %cst_89 = arith.constant 0.000000e+00 : f32
    %169 = vector.broadcast %cst_89 : f32 to vector<8x181xf32>
    %170 = arith.maximumf %168, %169 : vector<8x181xf32>
    %c6_90 = arith.constant 6 : index
    %c0_91 = arith.constant 0 : index
    %c0_92 = arith.constant 0 : index
    %171 = vector.load %arg4[%c6_90, %c0_91, %c0_92] : memref<16x181x64xf32, #tpu.memory_space<vmem>>, vector<1x181x64xf32>
    %172 = vector.shape_cast %171 : vector<1x181x64xf32> to vector<181x64xf32>
    %cst_93 = arith.constant dense<0.000000e+00> : vector<8x64xf32>
    %173 = tpu.matmul %170, %172, %cst_93 {dimension_numbers = #tpu.dot_dimension_numbers<[1], [0], [0], [1], [0, 0, 1, 1], [], []>} : vector<8x181xf32>, vector<181x64xf32>, vector<8x64xf32> -> vector<8x64xf32>
    %174 = arith.addf %150, %173 : vector<8x64xf32>
    %c7 = arith.constant 7 : index
    %c0_94 = arith.constant 0 : index
    %175 = memref.load %arg2[%c7, %c0_94] : memref<16x4xf32, #tpu.memory_space<smem>>
    %176 = vector.broadcast %175 : f32 to vector<8x181xf32>
    %177 = arith.mulf %176, %1 : vector<8x181xf32>
    %c7_95 = arith.constant 7 : index
    %c1_96 = arith.constant 1 : index
    %178 = memref.load %arg2[%c7_95, %c1_96] : memref<16x4xf32, #tpu.memory_space<smem>>
    %179 = vector.broadcast %178 : f32 to vector<8x181xf32>
    %180 = arith.mulf %179, %2 : vector<8x181xf32>
    %181 = arith.addf %177, %180 : vector<8x181xf32>
    %c7_97 = arith.constant 7 : index
    %c2_98 = arith.constant 2 : index
    %182 = memref.load %arg2[%c7_97, %c2_98] : memref<16x4xf32, #tpu.memory_space<smem>>
    %183 = vector.broadcast %182 : f32 to vector<8x181xf32>
    %184 = arith.mulf %183, %3 : vector<8x181xf32>
    %185 = arith.addf %181, %184 : vector<8x181xf32>
    %c7_99 = arith.constant 7 : index
    %c3_100 = arith.constant 3 : index
    %186 = memref.load %arg2[%c7_99, %c3_100] : memref<16x4xf32, #tpu.memory_space<smem>>
    %187 = vector.broadcast %186 : f32 to vector<8x181xf32>
    %188 = arith.mulf %187, %4 : vector<8x181xf32>
    %189 = arith.addf %185, %188 : vector<8x181xf32>
    %c7_101 = arith.constant 7 : index
    %190 = memref.load %arg3[%c7_101] : memref<16xf32, #tpu.memory_space<smem>>
    %191 = vector.broadcast %190 : f32 to vector<8x181xf32>
    %192 = arith.addf %189, %191 : vector<8x181xf32>
    %cst_102 = arith.constant 0.000000e+00 : f32
    %193 = vector.broadcast %cst_102 : f32 to vector<8x181xf32>
    %194 = arith.maximumf %192, %193 : vector<8x181xf32>
    %c7_103 = arith.constant 7 : index
    %c0_104 = arith.constant 0 : index
    %c0_105 = arith.constant 0 : index
    %195 = vector.load %arg4[%c7_103, %c0_104, %c0_105] : memref<16x181x64xf32, #tpu.memory_space<vmem>>, vector<1x181x64xf32>
    %196 = vector.shape_cast %195 : vector<1x181x64xf32> to vector<181x64xf32>
    %cst_106 = arith.constant dense<0.000000e+00> : vector<8x64xf32>
    %197 = tpu.matmul %194, %196, %cst_106 {dimension_numbers = #tpu.dot_dimension_numbers<[1], [0], [0], [1], [0, 0, 1, 1], [], []>} : vector<8x181xf32>, vector<181x64xf32>, vector<8x64xf32> -> vector<8x64xf32>
    %198 = arith.addf %174, %197 : vector<8x64xf32>
    %c8 = arith.constant 8 : index
    %c0_107 = arith.constant 0 : index
    %199 = memref.load %arg2[%c8, %c0_107] : memref<16x4xf32, #tpu.memory_space<smem>>
    %200 = vector.broadcast %199 : f32 to vector<8x181xf32>
    %201 = arith.mulf %200, %1 : vector<8x181xf32>
    %c8_108 = arith.constant 8 : index
    %c1_109 = arith.constant 1 : index
    %202 = memref.load %arg2[%c8_108, %c1_109] : memref<16x4xf32, #tpu.memory_space<smem>>
    %203 = vector.broadcast %202 : f32 to vector<8x181xf32>
    %204 = arith.mulf %203, %2 : vector<8x181xf32>
    %205 = arith.addf %201, %204 : vector<8x181xf32>
    %c8_110 = arith.constant 8 : index
    %c2_111 = arith.constant 2 : index
    %206 = memref.load %arg2[%c8_110, %c2_111] : memref<16x4xf32, #tpu.memory_space<smem>>
    %207 = vector.broadcast %206 : f32 to vector<8x181xf32>
    %208 = arith.mulf %207, %3 : vector<8x181xf32>
    %209 = arith.addf %205, %208 : vector<8x181xf32>
    %c8_112 = arith.constant 8 : index
    %c3_113 = arith.constant 3 : index
    %210 = memref.load %arg2[%c8_112, %c3_113] : memref<16x4xf32, #tpu.memory_space<smem>>
    %211 = vector.broadcast %210 : f32 to vector<8x181xf32>
    %212 = arith.mulf %211, %4 : vector<8x181xf32>
    %213 = arith.addf %209, %212 : vector<8x181xf32>
    %c8_114 = arith.constant 8 : index
    %214 = memref.load %arg3[%c8_114] : memref<16xf32, #tpu.memory_space<smem>>
    %215 = vector.broadcast %214 : f32 to vector<8x181xf32>
    %216 = arith.addf %213, %215 : vector<8x181xf32>
    %cst_115 = arith.constant 0.000000e+00 : f32
    %217 = vector.broadcast %cst_115 : f32 to vector<8x181xf32>
    %218 = arith.maximumf %216, %217 : vector<8x181xf32>
    %c8_116 = arith.constant 8 : index
    %c0_117 = arith.constant 0 : index
    %c0_118 = arith.constant 0 : index
    %219 = vector.load %arg4[%c8_116, %c0_117, %c0_118] : memref<16x181x64xf32, #tpu.memory_space<vmem>>, vector<1x181x64xf32>
    %220 = vector.shape_cast %219 : vector<1x181x64xf32> to vector<181x64xf32>
    %cst_119 = arith.constant dense<0.000000e+00> : vector<8x64xf32>
    %221 = tpu.matmul %218, %220, %cst_119 {dimension_numbers = #tpu.dot_dimension_numbers<[1], [0], [0], [1], [0, 0, 1, 1], [], []>} : vector<8x181xf32>, vector<181x64xf32>, vector<8x64xf32> -> vector<8x64xf32>
    %222 = arith.addf %198, %221 : vector<8x64xf32>
    %c9 = arith.constant 9 : index
    %c0_120 = arith.constant 0 : index
    %223 = memref.load %arg2[%c9, %c0_120] : memref<16x4xf32, #tpu.memory_space<smem>>
    %224 = vector.broadcast %223 : f32 to vector<8x181xf32>
    %225 = arith.mulf %224, %1 : vector<8x181xf32>
    %c9_121 = arith.constant 9 : index
    %c1_122 = arith.constant 1 : index
    %226 = memref.load %arg2[%c9_121, %c1_122] : memref<16x4xf32, #tpu.memory_space<smem>>
    %227 = vector.broadcast %226 : f32 to vector<8x181xf32>
    %228 = arith.mulf %227, %2 : vector<8x181xf32>
    %229 = arith.addf %225, %228 : vector<8x181xf32>
    %c9_123 = arith.constant 9 : index
    %c2_124 = arith.constant 2 : index
    %230 = memref.load %arg2[%c9_123, %c2_124] : memref<16x4xf32, #tpu.memory_space<smem>>
    %231 = vector.broadcast %230 : f32 to vector<8x181xf32>
    %232 = arith.mulf %231, %3 : vector<8x181xf32>
    %233 = arith.addf %229, %232 : vector<8x181xf32>
    %c9_125 = arith.constant 9 : index
    %c3_126 = arith.constant 3 : index
    %234 = memref.load %arg2[%c9_125, %c3_126] : memref<16x4xf32, #tpu.memory_space<smem>>
    %235 = vector.broadcast %234 : f32 to vector<8x181xf32>
    %236 = arith.mulf %235, %4 : vector<8x181xf32>
    %237 = arith.addf %233, %236 : vector<8x181xf32>
    %c9_127 = arith.constant 9 : index
    %238 = memref.load %arg3[%c9_127] : memref<16xf32, #tpu.memory_space<smem>>
    %239 = vector.broadcast %238 : f32 to vector<8x181xf32>
    %240 = arith.addf %237, %239 : vector<8x181xf32>
    %cst_128 = arith.constant 0.000000e+00 : f32
    %241 = vector.broadcast %cst_128 : f32 to vector<8x181xf32>
    %242 = arith.maximumf %240, %241 : vector<8x181xf32>
    %c9_129 = arith.constant 9 : index
    %c0_130 = arith.constant 0 : index
    %c0_131 = arith.constant 0 : index
    %243 = vector.load %arg4[%c9_129, %c0_130, %c0_131] : memref<16x181x64xf32, #tpu.memory_space<vmem>>, vector<1x181x64xf32>
    %244 = vector.shape_cast %243 : vector<1x181x64xf32> to vector<181x64xf32>
    %cst_132 = arith.constant dense<0.000000e+00> : vector<8x64xf32>
    %245 = tpu.matmul %242, %244, %cst_132 {dimension_numbers = #tpu.dot_dimension_numbers<[1], [0], [0], [1], [0, 0, 1, 1], [], []>} : vector<8x181xf32>, vector<181x64xf32>, vector<8x64xf32> -> vector<8x64xf32>
    %246 = arith.addf %222, %245 : vector<8x64xf32>
    %c10 = arith.constant 10 : index
    %c0_133 = arith.constant 0 : index
    %247 = memref.load %arg2[%c10, %c0_133] : memref<16x4xf32, #tpu.memory_space<smem>>
    %248 = vector.broadcast %247 : f32 to vector<8x181xf32>
    %249 = arith.mulf %248, %1 : vector<8x181xf32>
    %c10_134 = arith.constant 10 : index
    %c1_135 = arith.constant 1 : index
    %250 = memref.load %arg2[%c10_134, %c1_135] : memref<16x4xf32, #tpu.memory_space<smem>>
    %251 = vector.broadcast %250 : f32 to vector<8x181xf32>
    %252 = arith.mulf %251, %2 : vector<8x181xf32>
    %253 = arith.addf %249, %252 : vector<8x181xf32>
    %c10_136 = arith.constant 10 : index
    %c2_137 = arith.constant 2 : index
    %254 = memref.load %arg2[%c10_136, %c2_137] : memref<16x4xf32, #tpu.memory_space<smem>>
    %255 = vector.broadcast %254 : f32 to vector<8x181xf32>
    %256 = arith.mulf %255, %3 : vector<8x181xf32>
    %257 = arith.addf %253, %256 : vector<8x181xf32>
    %c10_138 = arith.constant 10 : index
    %c3_139 = arith.constant 3 : index
    %258 = memref.load %arg2[%c10_138, %c3_139] : memref<16x4xf32, #tpu.memory_space<smem>>
    %259 = vector.broadcast %258 : f32 to vector<8x181xf32>
    %260 = arith.mulf %259, %4 : vector<8x181xf32>
    %261 = arith.addf %257, %260 : vector<8x181xf32>
    %c10_140 = arith.constant 10 : index
    %262 = memref.load %arg3[%c10_140] : memref<16xf32, #tpu.memory_space<smem>>
    %263 = vector.broadcast %262 : f32 to vector<8x181xf32>
    %264 = arith.addf %261, %263 : vector<8x181xf32>
    %cst_141 = arith.constant 0.000000e+00 : f32
    %265 = vector.broadcast %cst_141 : f32 to vector<8x181xf32>
    %266 = arith.maximumf %264, %265 : vector<8x181xf32>
    %c10_142 = arith.constant 10 : index
    %c0_143 = arith.constant 0 : index
    %c0_144 = arith.constant 0 : index
    %267 = vector.load %arg4[%c10_142, %c0_143, %c0_144] : memref<16x181x64xf32, #tpu.memory_space<vmem>>, vector<1x181x64xf32>
    %268 = vector.shape_cast %267 : vector<1x181x64xf32> to vector<181x64xf32>
    %cst_145 = arith.constant dense<0.000000e+00> : vector<8x64xf32>
    %269 = tpu.matmul %266, %268, %cst_145 {dimension_numbers = #tpu.dot_dimension_numbers<[1], [0], [0], [1], [0, 0, 1, 1], [], []>} : vector<8x181xf32>, vector<181x64xf32>, vector<8x64xf32> -> vector<8x64xf32>
    %270 = arith.addf %246, %269 : vector<8x64xf32>
    %c11 = arith.constant 11 : index
    %c0_146 = arith.constant 0 : index
    %271 = memref.load %arg2[%c11, %c0_146] : memref<16x4xf32, #tpu.memory_space<smem>>
    %272 = vector.broadcast %271 : f32 to vector<8x181xf32>
    %273 = arith.mulf %272, %1 : vector<8x181xf32>
    %c11_147 = arith.constant 11 : index
    %c1_148 = arith.constant 1 : index
    %274 = memref.load %arg2[%c11_147, %c1_148] : memref<16x4xf32, #tpu.memory_space<smem>>
    %275 = vector.broadcast %274 : f32 to vector<8x181xf32>
    %276 = arith.mulf %275, %2 : vector<8x181xf32>
    %277 = arith.addf %273, %276 : vector<8x181xf32>
    %c11_149 = arith.constant 11 : index
    %c2_150 = arith.constant 2 : index
    %278 = memref.load %arg2[%c11_149, %c2_150] : memref<16x4xf32, #tpu.memory_space<smem>>
    %279 = vector.broadcast %278 : f32 to vector<8x181xf32>
    %280 = arith.mulf %279, %3 : vector<8x181xf32>
    %281 = arith.addf %277, %280 : vector<8x181xf32>
    %c11_151 = arith.constant 11 : index
    %c3_152 = arith.constant 3 : index
    %282 = memref.load %arg2[%c11_151, %c3_152] : memref<16x4xf32, #tpu.memory_space<smem>>
    %283 = vector.broadcast %282 : f32 to vector<8x181xf32>
    %284 = arith.mulf %283, %4 : vector<8x181xf32>
    %285 = arith.addf %281, %284 : vector<8x181xf32>
    %c11_153 = arith.constant 11 : index
    %286 = memref.load %arg3[%c11_153] : memref<16xf32, #tpu.memory_space<smem>>
    %287 = vector.broadcast %286 : f32 to vector<8x181xf32>
    %288 = arith.addf %285, %287 : vector<8x181xf32>
    %cst_154 = arith.constant 0.000000e+00 : f32
    %289 = vector.broadcast %cst_154 : f32 to vector<8x181xf32>
    %290 = arith.maximumf %288, %289 : vector<8x181xf32>
    %c11_155 = arith.constant 11 : index
    %c0_156 = arith.constant 0 : index
    %c0_157 = arith.constant 0 : index
    %291 = vector.load %arg4[%c11_155, %c0_156, %c0_157] : memref<16x181x64xf32, #tpu.memory_space<vmem>>, vector<1x181x64xf32>
    %292 = vector.shape_cast %291 : vector<1x181x64xf32> to vector<181x64xf32>
    %cst_158 = arith.constant dense<0.000000e+00> : vector<8x64xf32>
    %293 = tpu.matmul %290, %292, %cst_158 {dimension_numbers = #tpu.dot_dimension_numbers<[1], [0], [0], [1], [0, 0, 1, 1], [], []>} : vector<8x181xf32>, vector<181x64xf32>, vector<8x64xf32> -> vector<8x64xf32>
    %294 = arith.addf %270, %293 : vector<8x64xf32>
    %c12 = arith.constant 12 : index
    %c0_159 = arith.constant 0 : index
    %295 = memref.load %arg2[%c12, %c0_159] : memref<16x4xf32, #tpu.memory_space<smem>>
    %296 = vector.broadcast %295 : f32 to vector<8x181xf32>
    %297 = arith.mulf %296, %1 : vector<8x181xf32>
    %c12_160 = arith.constant 12 : index
    %c1_161 = arith.constant 1 : index
    %298 = memref.load %arg2[%c12_160, %c1_161] : memref<16x4xf32, #tpu.memory_space<smem>>
    %299 = vector.broadcast %298 : f32 to vector<8x181xf32>
    %300 = arith.mulf %299, %2 : vector<8x181xf32>
    %301 = arith.addf %297, %300 : vector<8x181xf32>
    %c12_162 = arith.constant 12 : index
    %c2_163 = arith.constant 2 : index
    %302 = memref.load %arg2[%c12_162, %c2_163] : memref<16x4xf32, #tpu.memory_space<smem>>
    %303 = vector.broadcast %302 : f32 to vector<8x181xf32>
    %304 = arith.mulf %303, %3 : vector<8x181xf32>
    %305 = arith.addf %301, %304 : vector<8x181xf32>
    %c12_164 = arith.constant 12 : index
    %c3_165 = arith.constant 3 : index
    %306 = memref.load %arg2[%c12_164, %c3_165] : memref<16x4xf32, #tpu.memory_space<smem>>
    %307 = vector.broadcast %306 : f32 to vector<8x181xf32>
    %308 = arith.mulf %307, %4 : vector<8x181xf32>
    %309 = arith.addf %305, %308 : vector<8x181xf32>
    %c12_166 = arith.constant 12 : index
    %310 = memref.load %arg3[%c12_166] : memref<16xf32, #tpu.memory_space<smem>>
    %311 = vector.broadcast %310 : f32 to vector<8x181xf32>
    %312 = arith.addf %309, %311 : vector<8x181xf32>
    %cst_167 = arith.constant 0.000000e+00 : f32
    %313 = vector.broadcast %cst_167 : f32 to vector<8x181xf32>
    %314 = arith.maximumf %312, %313 : vector<8x181xf32>
    %c12_168 = arith.constant 12 : index
    %c0_169 = arith.constant 0 : index
    %c0_170 = arith.constant 0 : index
    %315 = vector.load %arg4[%c12_168, %c0_169, %c0_170] : memref<16x181x64xf32, #tpu.memory_space<vmem>>, vector<1x181x64xf32>
    %316 = vector.shape_cast %315 : vector<1x181x64xf32> to vector<181x64xf32>
    %cst_171 = arith.constant dense<0.000000e+00> : vector<8x64xf32>
    %317 = tpu.matmul %314, %316, %cst_171 {dimension_numbers = #tpu.dot_dimension_numbers<[1], [0], [0], [1], [0, 0, 1, 1], [], []>} : vector<8x181xf32>, vector<181x64xf32>, vector<8x64xf32> -> vector<8x64xf32>
    %318 = arith.addf %294, %317 : vector<8x64xf32>
    %c13 = arith.constant 13 : index
    %c0_172 = arith.constant 0 : index
    %319 = memref.load %arg2[%c13, %c0_172] : memref<16x4xf32, #tpu.memory_space<smem>>
    %320 = vector.broadcast %319 : f32 to vector<8x181xf32>
    %321 = arith.mulf %320, %1 : vector<8x181xf32>
    %c13_173 = arith.constant 13 : index
    %c1_174 = arith.constant 1 : index
    %322 = memref.load %arg2[%c13_173, %c1_174] : memref<16x4xf32, #tpu.memory_space<smem>>
    %323 = vector.broadcast %322 : f32 to vector<8x181xf32>
    %324 = arith.mulf %323, %2 : vector<8x181xf32>
    %325 = arith.addf %321, %324 : vector<8x181xf32>
    %c13_175 = arith.constant 13 : index
    %c2_176 = arith.constant 2 : index
    %326 = memref.load %arg2[%c13_175, %c2_176] : memref<16x4xf32, #tpu.memory_space<smem>>
    %327 = vector.broadcast %326 : f32 to vector<8x181xf32>
    %328 = arith.mulf %327, %3 : vector<8x181xf32>
    %329 = arith.addf %325, %328 : vector<8x181xf32>
    %c13_177 = arith.constant 13 : index
    %c3_178 = arith.constant 3 : index
    %330 = memref.load %arg2[%c13_177, %c3_178] : memref<16x4xf32, #tpu.memory_space<smem>>
    %331 = vector.broadcast %330 : f32 to vector<8x181xf32>
    %332 = arith.mulf %331, %4 : vector<8x181xf32>
    %333 = arith.addf %329, %332 : vector<8x181xf32>
    %c13_179 = arith.constant 13 : index
    %334 = memref.load %arg3[%c13_179] : memref<16xf32, #tpu.memory_space<smem>>
    %335 = vector.broadcast %334 : f32 to vector<8x181xf32>
    %336 = arith.addf %333, %335 : vector<8x181xf32>
    %cst_180 = arith.constant 0.000000e+00 : f32
    %337 = vector.broadcast %cst_180 : f32 to vector<8x181xf32>
    %338 = arith.maximumf %336, %337 : vector<8x181xf32>
    %c13_181 = arith.constant 13 : index
    %c0_182 = arith.constant 0 : index
    %c0_183 = arith.constant 0 : index
    %339 = vector.load %arg4[%c13_181, %c0_182, %c0_183] : memref<16x181x64xf32, #tpu.memory_space<vmem>>, vector<1x181x64xf32>
    %340 = vector.shape_cast %339 : vector<1x181x64xf32> to vector<181x64xf32>
    %cst_184 = arith.constant dense<0.000000e+00> : vector<8x64xf32>
    %341 = tpu.matmul %338, %340, %cst_184 {dimension_numbers = #tpu.dot_dimension_numbers<[1], [0], [0], [1], [0, 0, 1, 1], [], []>} : vector<8x181xf32>, vector<181x64xf32>, vector<8x64xf32> -> vector<8x64xf32>
    %342 = arith.addf %318, %341 : vector<8x64xf32>
    %c14 = arith.constant 14 : index
    %c0_185 = arith.constant 0 : index
    %343 = memref.load %arg2[%c14, %c0_185] : memref<16x4xf32, #tpu.memory_space<smem>>
    %344 = vector.broadcast %343 : f32 to vector<8x181xf32>
    %345 = arith.mulf %344, %1 : vector<8x181xf32>
    %c14_186 = arith.constant 14 : index
    %c1_187 = arith.constant 1 : index
    %346 = memref.load %arg2[%c14_186, %c1_187] : memref<16x4xf32, #tpu.memory_space<smem>>
    %347 = vector.broadcast %346 : f32 to vector<8x181xf32>
    %348 = arith.mulf %347, %2 : vector<8x181xf32>
    %349 = arith.addf %345, %348 : vector<8x181xf32>
    %c14_188 = arith.constant 14 : index
    %c2_189 = arith.constant 2 : index
    %350 = memref.load %arg2[%c14_188, %c2_189] : memref<16x4xf32, #tpu.memory_space<smem>>
    %351 = vector.broadcast %350 : f32 to vector<8x181xf32>
    %352 = arith.mulf %351, %3 : vector<8x181xf32>
    %353 = arith.addf %349, %352 : vector<8x181xf32>
    %c14_190 = arith.constant 14 : index
    %c3_191 = arith.constant 3 : index
    %354 = memref.load %arg2[%c14_190, %c3_191] : memref<16x4xf32, #tpu.memory_space<smem>>
    %355 = vector.broadcast %354 : f32 to vector<8x181xf32>
    %356 = arith.mulf %355, %4 : vector<8x181xf32>
    %357 = arith.addf %353, %356 : vector<8x181xf32>
    %c14_192 = arith.constant 14 : index
    %358 = memref.load %arg3[%c14_192] : memref<16xf32, #tpu.memory_space<smem>>
    %359 = vector.broadcast %358 : f32 to vector<8x181xf32>
    %360 = arith.addf %357, %359 : vector<8x181xf32>
    %cst_193 = arith.constant 0.000000e+00 : f32
    %361 = vector.broadcast %cst_193 : f32 to vector<8x181xf32>
    %362 = arith.maximumf %360, %361 : vector<8x181xf32>
    %c14_194 = arith.constant 14 : index
    %c0_195 = arith.constant 0 : index
    %c0_196 = arith.constant 0 : index
    %363 = vector.load %arg4[%c14_194, %c0_195, %c0_196] : memref<16x181x64xf32, #tpu.memory_space<vmem>>, vector<1x181x64xf32>
    %364 = vector.shape_cast %363 : vector<1x181x64xf32> to vector<181x64xf32>
    %cst_197 = arith.constant dense<0.000000e+00> : vector<8x64xf32>
    %365 = tpu.matmul %362, %364, %cst_197 {dimension_numbers = #tpu.dot_dimension_numbers<[1], [0], [0], [1], [0, 0, 1, 1], [], []>} : vector<8x181xf32>, vector<181x64xf32>, vector<8x64xf32> -> vector<8x64xf32>
    %366 = arith.addf %342, %365 : vector<8x64xf32>
    %c15 = arith.constant 15 : index
    %c0_198 = arith.constant 0 : index
    %367 = memref.load %arg2[%c15, %c0_198] : memref<16x4xf32, #tpu.memory_space<smem>>
    %368 = vector.broadcast %367 : f32 to vector<8x181xf32>
    %369 = arith.mulf %368, %1 : vector<8x181xf32>
    %c15_199 = arith.constant 15 : index
    %c1_200 = arith.constant 1 : index
    %370 = memref.load %arg2[%c15_199, %c1_200] : memref<16x4xf32, #tpu.memory_space<smem>>
    %371 = vector.broadcast %370 : f32 to vector<8x181xf32>
    %372 = arith.mulf %371, %2 : vector<8x181xf32>
    %373 = arith.addf %369, %372 : vector<8x181xf32>
    %c15_201 = arith.constant 15 : index
    %c2_202 = arith.constant 2 : index
    %374 = memref.load %arg2[%c15_201, %c2_202] : memref<16x4xf32, #tpu.memory_space<smem>>
    %375 = vector.broadcast %374 : f32 to vector<8x181xf32>
    %376 = arith.mulf %375, %3 : vector<8x181xf32>
    %377 = arith.addf %373, %376 : vector<8x181xf32>
    %c15_203 = arith.constant 15 : index
    %c3_204 = arith.constant 3 : index
    %378 = memref.load %arg2[%c15_203, %c3_204] : memref<16x4xf32, #tpu.memory_space<smem>>
    %379 = vector.broadcast %378 : f32 to vector<8x181xf32>
    %380 = arith.mulf %379, %4 : vector<8x181xf32>
    %381 = arith.addf %377, %380 : vector<8x181xf32>
    %c15_205 = arith.constant 15 : index
    %382 = memref.load %arg3[%c15_205] : memref<16xf32, #tpu.memory_space<smem>>
    %383 = vector.broadcast %382 : f32 to vector<8x181xf32>
    %384 = arith.addf %381, %383 : vector<8x181xf32>
    %cst_206 = arith.constant 0.000000e+00 : f32
    %385 = vector.broadcast %cst_206 : f32 to vector<8x181xf32>
    %386 = arith.maximumf %384, %385 : vector<8x181xf32>
    %c15_207 = arith.constant 15 : index
    %c0_208 = arith.constant 0 : index
    %c0_209 = arith.constant 0 : index
    %387 = vector.load %arg4[%c15_207, %c0_208, %c0_209] : memref<16x181x64xf32, #tpu.memory_space<vmem>>, vector<1x181x64xf32>
    %388 = vector.shape_cast %387 : vector<1x181x64xf32> to vector<181x64xf32>
    %cst_210 = arith.constant dense<0.000000e+00> : vector<8x64xf32>
    %389 = tpu.matmul %386, %388, %cst_210 {dimension_numbers = #tpu.dot_dimension_numbers<[1], [0], [0], [1], [0, 0, 1, 1], [], []>} : vector<8x181xf32>, vector<181x64xf32>, vector<8x64xf32> -> vector<8x64xf32>
    %390 = arith.addf %366, %389 : vector<8x64xf32>
    %cst_211 = arith.constant 0.000000e+00 : f32
    %391 = vector.broadcast %cst_211 : f32 to vector<8x64xf32>
    %392 = arith.maximumf %390, %391 : vector<8x64xf32>
    %c0_212 = arith.constant 0 : index
    %c0_213 = arith.constant 0 : index
    %393 = vector.load %arg6[%c0_212, %c0_213] : memref<64x128xf32, #tpu.memory_space<vmem>>, vector<64x128xf32>
    %cst_214 = arith.constant dense<0.000000e+00> : vector<8x128xf32>
    %394 = tpu.matmul %392, %393, %cst_214 {dimension_numbers = #tpu.dot_dimension_numbers<[1], [0], [0], [1], [0, 0, 1, 1], [], []>} : vector<8x64xf32>, vector<64x128xf32>, vector<8x128xf32> -> vector<8x128xf32>
    %c0_215 = arith.constant 0 : index
    %c0_216 = arith.constant 0 : index
    %395 = vector.load %arg7[%c0_215, %c0_216] : memref<1x128xf32, #tpu.memory_space<vmem>>, vector<1x128xf32>
    %396 = vector.broadcast %395 : vector<1x128xf32> to vector<8x128xf32>
    %397 = arith.addf %394, %396 : vector<8x128xf32>
    %c0_217 = arith.constant 0 : index
    %c0_218 = arith.constant 0 : index
    %398 = vector.load %arg8[%c0_217, %c0_218] : memref<8x128xf32, #tpu.memory_space<vmem>>, vector<8x128xf32>
    tpu.vector_store %arg8[%c0_217, %c0_218], %397 {strides = array<i32>} : memref<8x128xf32, #tpu.memory_space<vmem>>, vector<8x128xf32>,
    return
  }
  func.func @transform_0(%arg0: i32) -> (i32, i32) {
    %c0_i32 = arith.constant 0 : i32
    %c0_i32_0 = arith.constant 0 : i32
    return %arg0, %c0_i32 : i32, i32
  }
  func.func @transform_1(%arg0: i32) -> (i32, i32) {
    %c0_i32 = arith.constant 0 : i32
    %c0_i32_0 = arith.constant 0 : i32
    %c0_i32_1 = arith.constant 0 : i32
    return %c0_i32, %c0_i32_0 : i32, i32
  }
  func.func @transform_2(%arg0: i32) -> i32 {
    %c0_i32 = arith.constant 0 : i32
    %c0_i32_0 = arith.constant 0 : i32
    return %c0_i32 : i32
  }
  func.func @transform_3(%arg0: i32) -> (i32, i32, i32) {
    %c0_i32 = arith.constant 0 : i32
    %c0_i32_0 = arith.constant 0 : i32
    %c0_i32_1 = arith.constant 0 : i32
    %c0_i32_2 = arith.constant 0 : i32
    return %c0_i32, %c0_i32_0, %c0_i32_1 : i32, i32, i32
  }
  func.func @transform_4(%arg0: i32) -> (i32, i32) {
    %c0_i32 = arith.constant 0 : i32
    %c0_i32_0 = arith.constant 0 : i32
    %c0_i32_1 = arith.constant 0 : i32
    return %c0_i32, %c0_i32_0 : i32, i32
  }
  func.func @transform_5(%arg0: i32) -> (i32, i32) {
    %c0_i32 = arith.constant 0 : i32
    %c0_i32_0 = arith.constant 0 : i32
    %c0_i32_1 = arith.constant 0 : i32
    return %c0_i32, %c0_i32_0 : i32, i32
  }
  func.func @transform_6(%arg0: i32) -> (i32, i32) {
    %c0_i32 = arith.constant 0 : i32
    %c0_i32_0 = arith.constant 0 : i32
    %c0_i32_1 = arith.constant 0 : i32
    return %c0_i32, %c0_i32_0 : i32, i32
  }
  func.func @transform_7(%arg0: i32) -> (i32, i32) {
    %c0_i32 = arith.constant 0 : i32
    %c0_i32_0 = arith.constant 0 : i32
    return %arg0, %c0_i32 : i32, i32
  }
}

</mosaic_0001>

<llo_original>
// kernel: digitnet_forward.1
$region0: #{digitnet_forward.1}
  #allocation0 [shape = 'u32[]', space=smem, size = 0x4, offset = 0x4, fixed_abs, tag = 'smem constant byte address 0x4 - core index']
  #allocation1 [shape = 'u32[144,128]{1,0:T(1,128)}', space=vmem, size = 0x12000, scoped, tag = 'internal scratch']
  %s0 = inlined_call_operand.vmem [shape: f32[8,196], index: 0, kind: input, shape index: {}]
  %s1 = inlined_call_operand.vmem [shape: f32[16,4], index: 1, kind: input, shape index: {}]
  %s2 = inlined_call_operand.vmem [shape: f32[16], index: 2, kind: input, shape index: {}]
  %s3 = inlined_call_operand.vmem [shape: f32[16,181,64], index: 3, kind: input, shape index: {}]
  %s4 = inlined_call_operand.vmem [shape: f32[1,64], index: 4, kind: input, shape index: {}]
  %s5 = inlined_call_operand.vmem [shape: f32[64,128], index: 5, kind: input, shape index: {}]
  %s6 = inlined_call_operand.vmem [shape: f32[1,128], index: 6, kind: input, shape index: {}]
  %s7 = inlined_call_operand.vmem [shape: f32[8,128], index: 7, kind: output, shape index: {}]
  %s8 = sld [smem:[#allocation0]]
  $region46: #{digitnet_forward.1} parent=0
    _
  %s10 = ssub.s32 1, %s8
  %s11 = scalar_select 0, %s10, %s8
  $region1: #{digitnet_forward.1} parent=0
    #allocation2 [shape = 'u8[8192]{0}', space=smem, size = 0x2000, scoped, tag = 'input window, operand 1, single buffered']
    #allocation3 [shape = 's32[1]{0}', space=sflag, size = 0x4, scoped, tag = 'scoped memory for digitnet_forward.1']
    #allocation4 [shape = 'u8[512]{0}', space=smem, size = 0x200, scoped, tag = 'input window, operand 2, single buffered']
    #allocation5 [shape = 's32[1]{0}', space=sflag, size = 0x4, scoped, tag = 'scoped memory for digitnet_forward.1']
    %12 = vsyncpa [#allocation3], 0
    %13 = vsyncpa [#allocation5], 0
    // Predicated region
    $region2: #{digitnet_forward.1} parent=1 // pred_check
      _
    $region3: #{digitnet_forward.1} parent=1 // pred_check_branch
      %15 = sbr.rel (0) target = $region5
    $region4: #{digitnet_forward.1} parent=1 // pred_region
      _
    $region5: #{digitnet_forward.1} parent=1 // pred_fallthru
      _
    // Predicated region
    $region6: #{digitnet_forward.1} parent=1 // pred_check
      _
    $region7: #{digitnet_forward.1} parent=1 // pred_check_branch
      %17 = sbr.rel (0) target = $region9
    $region8: #{digitnet_forward.1} parent=1 // pred_region
      %s19 = ssub.s32 256, 256
      %20 = vsyncadd [#allocation3], %s19
      %s21 = sshll.u32 %s1, 4
      %s22 = int_to_ptr.vmem [resolvable:$true] %s21
      %27 = dma.vmem_to_smem %s22, 256, [#allocation2], [#allocation3], 128, 128, 8
    $region9: #{digitnet_forward.1} parent=1 // pred_fallthru
      _
    // Predicated region
    $region10: #{digitnet_forward.1} parent=1 // pred_check
      _
    $region11: #{digitnet_forward.1} parent=1 // pred_check_branch
      %29 = sbr.rel (0) target = $region13
    $region12: #{digitnet_forward.1} parent=1 // pred_region
      %s31 = ssub.s32 16, 16
      %32 = vsyncadd [#allocation5], %s31
      %s34 = sshll.u32 %s2, 4
      %s35 = int_to_ptr.vmem [resolvable:$true] %s34
      %37 = dma.vmem_to_smem %s35, 16, [#allocation4], [#allocation5]
    $region13: #{digitnet_forward.1} parent=1 // pred_fallthru
      _
    // Predicated region
    $region14: #{digitnet_forward.1} parent=1 // pred_check
      _
    $region15: #{digitnet_forward.1} parent=1 // pred_check_branch
      %39 = sbr.rel (0) target = $region17
    $region16: #{digitnet_forward.1} parent=1 // pred_region
      _
    $region17: #{digitnet_forward.1} parent=1 // pred_fallthru
      _
    // Predicated region
    $region18: #{digitnet_forward.1} parent=1 // pred_check
      _
    $region19: #{digitnet_forward.1} parent=1 // pred_check_branch
      %41 = sbr.rel (0) target = $region21
    $region20: #{digitnet_forward.1} parent=1 // pred_region
      _
    $region21: #{digitnet_forward.1} parent=1 // pred_fallthru
      _
    // Predicated region
    $region22: #{digitnet_forward.1} parent=1 // pred_check
      _
    $region23: #{digitnet_forward.1} parent=1 // pred_check_branch
      %43 = sbr.rel (0) target = $region25
    $region24: #{digitnet_forward.1} parent=1 // pred_region
      _
    $region25: #{digitnet_forward.1} parent=1 // pred_fallthru
      _
    // Predicated region
    $region26: #{digitnet_forward.1} parent=1 // pred_check
      _
    $region27: #{digitnet_forward.1} parent=1 // pred_check_branch
      %45 = sbr.rel (0) target = $region29
    $region28: #{digitnet_forward.1} parent=1 // pred_region
      _
    $region29: #{digitnet_forward.1} parent=1 // pred_fallthru
      _
    // Predicated region
    $region30: #{digitnet_forward.1} parent=1 // pred_check
      _
    $region31: #{digitnet_forward.1} parent=1 // pred_check_branch
      %47 = sbr.rel (0) target = $region33
    $region32: #{digitnet_forward.1} parent=1 // pred_region
      %48 = dma.done [#allocation3], 256
    $region33: #{digitnet_forward.1} parent=1 // pred_fallthru
      _
    // Predicated region
    $region34: #{digitnet_forward.1} parent=1 // pred_check
      _
    $region35: #{digitnet_forward.1} parent=1 // pred_check_branch
      %50 = sbr.rel (0) target = $region37
    $region36: #{digitnet_forward.1} parent=1 // pred_region
      %51 = dma.done [#allocation5], 16
    $region37: #{digitnet_forward.1} parent=1 // pred_fallthru
      _
    %52 = sfence
    %v53 = vld [vmem:[%s0] sm:$0xff]
    %v54 = vld [vmem:[%s0 + $0x8] sm:$0xff]
    %v55 = vld [vmem:[%s4] sm:$0x1]
    %s56 = sld [smem:[#allocation2]]
    %v57 = vstv %s56
    %v58 = vmul.f32 %v57, %v53
    %v59 = vmul.f32 %v57, %v54
    %s60 = sld [smem:[#allocation2 + $0x1]]
    %v61 = vstv %s60
    %v62 = vmul.f32 %v61, %v53
    %v63 = vmul.f32 %v61, %v54
    %66 = vrot.lane.b32.xlu0 %v62, 127
    %v67 = vpop.permute.xlu0 %66
    %68 = vrot.lane.b32.xlu0 %v63, 127
    %v69 = vpop.permute.xlu0 %68
    %vm70 = vcmask 1039360
    %v71 = vsel %vm70, %v67, %v69
    %v74 = vadd.f32 %v58, %v71
    %v75 = vadd.f32 %v59, %v69
    %s76 = sld [smem:[#allocation2 + $0x2]]
    %v77 = vstv %s76
    %v78 = vmul.f32 %v77, %v53
    %v79 = vmul.f32 %v77, %v54
    %82 = vrot.lane.b32.xlu0 %v78, 114
    %v83 = vpop.permute.xlu0 %82
    %84 = vrot.lane.b32.xlu0 %v79, 114
    %v85 = vpop.permute.xlu0 %84
    %vm86 = vcmask 932864
    %v87 = vsel %vm86, %v83, %v85
    %v90 = vadd.f32 %v74, %v87
    %v91 = vadd.f32 %v75, %v85
    %s92 = sld [smem:[#allocation2 + $0x3]]
    %v93 = vstv %s92
    %v94 = vmul.f32 %v93, %v53
    %v95 = vmul.f32 %v93, %v54
    %98 = vrot.lane.b32.xlu0 %v94, 113
    %v99 = vpop.permute.xlu0 %98
    %100 = vrot.lane.b32.xlu0 %v95, 113
    %v101 = vpop.permute.xlu0 %100
    %vm102 = vcmask 924672
    %v103 = vsel %vm102, %v99, %v101
    %v106 = vadd.f32 %v90, %v103
    %v107 = vadd.f32 %v91, %v101
    %s108 = sld [smem:[#allocation4]]
    %v109 = vstv %s108
    %v110 = vadd.f32 %v106, %v109
    %v111 = vadd.f32 %v107, %v109
    %v112 = vmax.f32 %v110, 0.0
    %v113 = vmax.f32 %v111, 0.0
    %v114 = vld [vmem:[%s3] sm:$0xff]
    %v115 = vld [vmem:[%s3 + $0x8] sm:$0xff]
    %v116 = vld [vmem:[%s3 + $0x10] sm:$0xff]
    %v117 = vld [vmem:[%s3 + $0x18] sm:$0xff]
    %v118 = vld [vmem:[%s3 + $0x20] sm:$0xff]
    %v119 = vld [vmem:[%s3 + $0x28] sm:$0xff]
    %v120 = vld [vmem:[%s3 + $0x30] sm:$0xff]
    %v121 = vld [vmem:[%s3 + $0x38] sm:$0xff]
    %v122 = vld [vmem:[%s3 + $0x40] sm:$0xff]
    %v123 = vld [vmem:[%s3 + $0x48] sm:$0xff]
    %v124 = vld [vmem:[%s3 + $0x50] sm:$0xff]
    %v125 = vld [vmem:[%s3 + $0x58] sm:$0xff]
    %v126 = vld [vmem:[%s3 + $0x60] sm:$0xff]
    %v127 = vld [vmem:[%s3 + $0x68] sm:$0xff]
    %v128 = vld [vmem:[%s3 + $0x70] sm:$0xff]
    %v129 = vld [vmem:[%s3 + $0x78] sm:$0xff]
    %v130 = vld [vmem:[%s3 + $0x80] sm:$0xff]
    %v131 = vld [vmem:[%s3 + $0x88] sm:$0xff]
    %v132 = vld [vmem:[%s3 + $0x90] sm:$0xff]
    %v133 = vld [vmem:[%s3 + $0x98] sm:$0xff]
    %v134 = vld [vmem:[%s3 + $0xa0] sm:$0xff]
    %v135 = vld [vmem:[%s3 + $0xa8] sm:$0xff]
    %v136 = vld [vmem:[%s3 + $0xb0] sm:$0x1f]
    %vm137 = vcmask 433152
    %v139 = vsel %vm137, %v113, 0
    %vm141 = vcmask 1044480
    %v143 = vsel %vm141, %v136, 0
    %145 = vmatprep.subr.mxu0 0.0
    %146 = vmatpush1.msra.mxu0 %v129
    %147 = vmatprep.subr.mxu0 0.0
    %148 = vmatpush1.msra.mxu0 %v128
    %149 = vmatprep.subr.mxu0 0.0
    %150 = vmatpush1.msra.mxu0 %v127
    %151 = vmatprep.subr.mxu0 0.0
    %152 = vmatpush1.msra.mxu0 %v126
    %153 = vmatprep.subr.mxu0 0.0
    %154 = vmatpush1.msra.mxu0 %v125
    %155 = vmatprep.subr.mxu0 0.0
    %156 = vmatpush1.msra.mxu0 %v124
    %157 = vmatprep.subr.mxu0 0.0
    %158 = vmatpush1.msra.mxu0 %v123
    %159 = vmatprep.subr.mxu0 0.0
    %160 = vmatpush1.msra.mxu0 %v122
    %161 = vmatprep.subr.mxu0 0.0
    %162 = vmatpush1.msra.mxu0 %v121
    %163 = vmatprep.subr.mxu0 0.0
    %164 = vmatpush1.msra.mxu0 %v120
    %165 = vmatprep.subr.mxu0 0.0
    %166 = vmatpush1.msra.mxu0 %v119
    %167 = vmatprep.subr.mxu0 0.0
    %168 = vmatpush1.msra.mxu0 %v118
    %169 = vmatprep.subr.mxu0 0.0
    %170 = vmatpush1.msra.mxu0 %v117
    %171 = vmatprep.subr.mxu0 0.0
    %172 = vmatpush1.msra.mxu0 %v116
    %173 = vmatprep.subr.mxu0 0.0
    %174 = vmatpush1.msra.mxu0 %v115
    %175 = vmatprep.subr.mxu0 0.0
    %176 = vmatpush1.msra.mxu0 %v114
    %177 = vmatprep.subr.mxu0 0.0
    %178 = vmatpush2.msra.mxu0 0.0
    %179 = vmatprep.subr.mxu0 0.0
    %180 = vmatpush2.msra.mxu0 0.0
    %181 = vmatprep.subr.mxu0 0.0
    %182 = vmatpush2.msra.mxu0 0.0
    %183 = vmatprep.subr.mxu0 0.0
    %184 = vmatpush2.msra.mxu0 0.0
    %185 = vmatprep.subr.mxu0 0.0
    %186 = vmatpush2.msra.mxu0 0.0
    %187 = vmatprep.subr.mxu0 0.0
    %188 = vmatpush2.msra.mxu0 0.0
    %189 = vmatprep.subr.mxu0 0.0
    %190 = vmatpush2.msra.mxu0 0.0
    %191 = vmatprep.subr.mxu0 0.0
    %192 = vmatpush2.msra.mxu0 0.0
    %193 = vmatprep.subr.mxu0 0.0
    %194 = vmatpush2.msra.mxu0 0.0
    %195 = vmatprep.subr.mxu0 0.0
    %196 = vmatpush2.msra.mxu0 %v143
    %197 = vmatprep.subr.mxu0 0.0
    %198 = vmatpush2.msra.mxu0 %v135
    %199 = vmatprep.subr.mxu0 0.0
    %200 = vmatpush2.msra.mxu0 %v134
    %201 = vmatprep.subr.mxu0 0.0
    %202 = vmatpush2.msra.mxu0 %v133
    %203 = vmatprep.subr.mxu0 0.0
    %204 = vmatpush2.msra.mxu0 %v132
    %205 = vmatprep.subr.mxu0 0.0
    %206 = vmatpush2.msra.mxu0 %v131
    %207 = vmatprep.subr.mxu0 0.0
    %208 = vmatpush2.msra.mxu0 %v130
    %209 = vmatprep.mubr.f32.mxu0 %v139
    %210 = vmatmul.mubr.f32.gmra.mxu0 %v112
    %v211 = vpop.f32.mrf.mxu0
    %v212 = vadd.f32 0.0, %v211
    %v213 = vpop.f32.mrf.mxu0
    %214 = vdwg.mxu0
    %v216 = vlaneseq
    %v217 = vshrl.u32 %v216, 7
    %v218 = vsub.s32 0, %v217
    %v219 = vrot.slane %v55, %v218
    %v221 = vadd.f32 %v219, %v212
    %s222 = sld [smem:[#allocation2 + $0x80]]
    %v223 = vstv %s222
    %v224 = vmul.f32 %v223, %v53
    %v225 = vmul.f32 %v223, %v54
    %s226 = sld [smem:[#allocation2 + $0x81]]
    %v227 = vstv %s226
    %v228 = vmul.f32 %v227, %v53
    %v229 = vmul.f32 %v227, %v54
    %232 = vrot.lane.b32.xlu0 %v228, 127
    %v233 = vpop.permute.xlu0 %232
    %234 = vrot.lane.b32.xlu0 %v229, 127
    %v235 = vpop.permute.xlu0 %234
    %v236 = vsel %vm70, %v233, %v235
    %v239 = vadd.f32 %v224, %v236
    %v240 = vadd.f32 %v225, %v235
    %s241 = sld [smem:[#allocation2 + $0x82]]
    %v242 = vstv %s241
    %v243 = vmul.f32 %v242, %v53
    %v244 = vmul.f32 %v242, %v54
    %247 = vrot.lane.b32.xlu0 %v243, 114
    %v248 = vpop.permute.xlu0 %247
    %249 = vrot.lane.b32.xlu0 %v244, 114
    %v250 = vpop.permute.xlu0 %249
    %v251 = vsel %vm86, %v248, %v250
    %v254 = vadd.f32 %v239, %v251
    %v255 = vadd.f32 %v240, %v250
    %s256 = sld [smem:[#allocation2 + $0x83]]
    %v257 = vstv %s256
    %v258 = vmul.f32 %v257, %v53
    %v259 = vmul.f32 %v257, %v54
    %262 = vrot.lane.b32.xlu0 %v258, 113
    %v263 = vpop.permute.xlu0 %262
    %264 = vrot.lane.b32.xlu0 %v259, 113
    %v265 = vpop.permute.xlu0 %264
    %v266 = vsel %vm102, %v263, %v265
    %v269 = vadd.f32 %v254, %v266
    %v270 = vadd.f32 %v255, %v265
    %s271 = sld [smem:[#allocation4 + $0x1]]
    %v272 = vstv %s271
    %v273 = vadd.f32 %v269, %v272
    %v274 = vadd.f32 %v270, %v272
    %v275 = vmax.f32 %v273, 0.0
    %v276 = vmax.f32 %v274, 0.0
    %s277 = scalar_lea.vmem %s3, 184
    %v278 = vld [vmem:[%s277] sm:$0xff]
    %v279 = vld [vmem:[%s277 + $0x8] sm:$0xff]
    %v280 = vld [vmem:[%s277 + $0x10] sm:$0xff]
    %v281 = vld [vmem:[%s277 + $0x18] sm:$0xff]
    %v282 = vld [vmem:[%s277 + $0x20] sm:$0xff]
    %v283 = vld [vmem:[%s277 + $0x28] sm:$0xff]
    %v284 = vld [vmem:[%s277 + $0x30] sm:$0xff]
    %v285 = vld [vmem:[%s277 + $0x38] sm:$0xff]
    %v286 = vld [vmem:[%s277 + $0x40] sm:$0xff]
    %v287 = vld [vmem:[%s277 + $0x48] sm:$0xff]
    %v288 = vld [vmem:[%s277 + $0x50] sm:$0xff]
    %v289 = vld [vmem:[%s277 + $0x58] sm:$0xff]
    %v290 = vld [vmem:[%s277 + $0x60] sm:$0xff]
    %v291 = vld [vmem:[%s277 + $0x68] sm:$0xff]
    %v292 = vld [vmem:[%s277 + $0x70] sm:$0xff]
    %v293 = vld [vmem:[%s277 + $0x78] sm:$0xff]
    %v294 = vld [vmem:[%s277 + $0x80] sm:$0xff]
    %v295 = vld [vmem:[%s277 + $0x88] sm:$0xff]
    %v296 = vld [vmem:[%s277 + $0x90] sm:$0xff]
    %v297 = vld [vmem:[%s277 + $0x98] sm:$0xff]
    %v298 = vld [vmem:[%s277 + $0xa0] sm:$0xff]
    %v299 = vld [vmem:[%s277 + $0xa8] sm:$0xff]
    %v300 = vld [vmem:[%s277 + $0xb0] sm:$0x1f]
    %v302 = vsel %vm137, %v276, 0
    %v305 = vsel %vm141, %v300, 0
    %307 = vmatprep.subr.mxu0 0.0
    %308 = vmatpush1.msra.mxu0 %v293
    %309 = vmatprep.subr.mxu0 0.0
    %310 = vmatpush1.msra.mxu0 %v292
    %311 = vmatprep.subr.mxu0 0.0
    %312 = vmatpush1.msra.mxu0 %v291
    %313 = vmatprep.subr.mxu0 0.0
    %314 = vmatpush1.msra.mxu0 %v290
    %315 = vmatprep.subr.mxu0 0.0
    %316 = vmatpush1.msra.mxu0 %v289
    %317 = vmatprep.subr.mxu0 0.0
    %318 = vmatpush1.msra.mxu0 %v288
    %319 = vmatprep.subr.mxu0 0.0
    %320 = vmatpush1.msra.mxu0 %v287
    %321 = vmatprep.subr.mxu0 0.0
    %322 = vmatpush1.msra.mxu0 %v286
    %323 = vmatprep.subr.mxu0 0.0
    %324 = vmatpush1.msra.mxu0 %v285
    %325 = vmatprep.subr.mxu0 0.0
    %326 = vmatpush1.msra.mxu0 %v284
    %327 = vmatprep.subr.mxu0 0.0
    %328 = vmatpush1.msra.mxu0 %v283
    %329 = vmatprep.subr.mxu0 0.0
    %330 = vmatpush1.msra.mxu0 %v282
    %331 = vmatprep.subr.mxu0 0.0
    %332 = vmatpush1.msra.mxu0 %v281
    %333 = vmatprep.subr.mxu0 0.0
    %334 = vmatpush1.msra.mxu0 %v280
    %335 = vmatprep.subr.mxu0 0.0
    %336 = vmatpush1.msra.mxu0 %v279
    %337 = vmatprep.subr.mxu0 0.0
    %338 = vmatpush1.msra.mxu0 %v278
    %339 = vmatprep.subr.mxu0 0.0
    %340 = vmatpush2.msra.mxu0 0.0
    %341 = vmatprep.subr.mxu0 0.0
    %342 = vmatpush2.msra.mxu0 0.0
    %343 = vmatprep.subr.mxu0 0.0
    %344 = vmatpush2.msra.mxu0 0.0
    %345 = vmatprep.subr.mxu0 0.0
    %346 = vmatpush2.msra.mxu0 0.0
    %347 = vmatprep.subr.mxu0 0.0
    %348 = vmatpush2.msra.mxu0 0.0
    %349 = vmatprep.subr.mxu0 0.0
    %350 = vmatpush2.msra.mxu0 0.0
    %351 = vmatprep.subr.mxu0 0.0
    %352 = vmatpush2.msra.mxu0 0.0
    %353 = vmatprep.subr.mxu0 0.0
    %354 = vmatpush2.msra.mxu0 0.0
    %355 = vmatprep.subr.mxu0 0.0
    %356 = vmatpush2.msra.mxu0 0.0
    %357 = vmatprep.subr.mxu0 0.0
    %358 = vmatpush2.msra.mxu0 %v305
    %359 = vmatprep.subr.mxu0 0.0
    %360 = vmatpush2.msra.mxu0 %v299
    %361 = vmatprep.subr.mxu0 0.0
    %362 = vmatpush2.msra.mxu0 %v298
    %363 = vmatprep.subr.mxu0 0.0
    %364 = vmatpush2.msra.mxu0 %v297
    %365 = vmatprep.subr.mxu0 0.0
    %366 = vmatpush2.msra.mxu0 %v296
    %367 = vmatprep.subr.mxu0 0.0
    %368 = vmatpush2.msra.mxu0 %v295
    %369 = vmatprep.subr.mxu0 0.0
    %370 = vmatpush2.msra.mxu0 %v294
    %371 = vmatprep.mubr.f32.mxu0 %v302
    %372 = vmatmul.mubr.f32.gmra.mxu0 %v275
    %v373 = vpop.f32.mrf.mxu0
    %v374 = vadd.f32 0.0, %v373
    %v375 = vpop.f32.mrf.mxu0
    %376 = vdwg.mxu0
    %v377 = vadd.f32 %v221, %v374
    %s378 = sld [smem:[#allocation2 + $0x100]]
    %v379 = vstv %s378
    %v380 = vmul.f32 %v379, %v53
    %v381 = vmul.f32 %v379, %v54
    %s382 = sld [smem:[#allocation2 + $0x101]]
    %v383 = vstv %s382
    %v384 = vmul.f32 %v383, %v53
    %v385 = vmul.f32 %v383, %v54
    %388 = vrot.lane.b32.xlu0 %v384, 127
    %v389 = vpop.permute.xlu0 %388
    %390 = vrot.lane.b32.xlu0 %v385, 127
    %v391 = vpop.permute.xlu0 %390
    %v392 = vsel %vm70, %v389, %v391
    %v395 = vadd.f32 %v380, %v392
    %v396 = vadd.f32 %v381, %v391
    %s397 = sld [smem:[#allocation2 + $0x102]]
    %v398 = vstv %s397
    %v399 = vmul.f32 %v398, %v53
    %v400 = vmul.f32 %v398, %v54
    %403 = vrot.lane.b32.xlu0 %v399, 114
    %v404 = vpop.permute.xlu0 %403
    %405 = vrot.lane.b32.xlu0 %v400, 114
    %v406 = vpop.permute.xlu0 %405
    %v407 = vsel %vm86, %v404, %v406
    %v410 = vadd.f32 %v395, %v407
    %v411 = vadd.f32 %v396, %v406
    %s412 = sld [smem:[#allocation2 + $0x103]]
    %v413 = vstv %s412
    %v414 = vmul.f32 %v413, %v53
    %v415 = vmul.f32 %v413, %v54
    %418 = vrot.lane.b32.xlu0 %v414, 113
    %v419 = vpop.permute.xlu0 %418
    %420 = vrot.lane.b32.xlu0 %v415, 113
    %v421 = vpop.permute.xlu0 %420
    %v422 = vsel %vm102, %v419, %v421
    %v425 = vadd.f32 %v410, %v422
    %v426 = vadd.f32 %v411, %v421
    %s427 = sld [smem:[#allocation4 + $0x2]]
    %v428 = vstv %s427
    %v429 = vadd.f32 %v425, %v428
    %v430 = vadd.f32 %v426, %v428
    %v431 = vmax.f32 %v429, 0.0
    %v432 = vmax.f32 %v430, 0.0
    %s433 = scalar_lea.vmem %s3, 368
    %v434 = vld [vmem:[%s433] sm:$0xff]
    %v435 = vld [vmem:[%s433 + $0x8] sm:$0xff]
    %v436 = vld [vmem:[%s433 + $0x10] sm:$0xff]
    %v437 = vld [vmem:[%s433 + $0x18] sm:$0xff]
    %v438 = vld [vmem:[%s433 + $0x20] sm:$0xff]
    %v439 = vld [vmem:[%s433 + $0x28] sm:$0xff]
    %v440 = vld [vmem:[%s433 + $0x30] sm:$0xff]
    %v441 = vld [vmem:[%s433 + $0x38] sm:$0xff]
    %v442 = vld [vmem:[%s433 + $0x40] sm:$0xff]
    %v443 = vld [vmem:[%s433 + $0x48] sm:$0xff]
    %v444 = vld [vmem:[%s433 + $0x50] sm:$0xff]
    %v445 = vld [vmem:[%s433 + $0x58] sm:$0xff]
    %v446 = vld [vmem:[%s433 + $0x60] sm:$0xff]
    %v447 = vld [vmem:[%s433 + $0x68] sm:$0xff]
    %v448 = vld [vmem:[%s433 + $0x70] sm:$0xff]
    %v449 = vld [vmem:[%s433 + $0x78] sm:$0xff]
    %v450 = vld [vmem:[%s433 + $0x80] sm:$0xff]
    %v451 = vld [vmem:[%s433 + $0x88] sm:$0xff]
    %v452 = vld [vmem:[%s433 + $0x90] sm:$0xff]
    %v453 = vld [vmem:[%s433 + $0x98] sm:$0xff]
    %v454 = vld [vmem:[%s433 + $0xa0] sm:$0xff]
    %v455 = vld [vmem:[%s433 + $0xa8] sm:$0xff]
    %v456 = vld [vmem:[%s433 + $0xb0] sm:$0x1f]
    %v458 = vsel %vm137, %v432, 0
    %v461 = vsel %vm141, %v456, 0
    %463 = vmatprep.subr.mxu0 0.0
    %464 = vmatpush1.msra.mxu0 %v449
    %465 = vmatprep.subr.mxu0 0.0
    %466 = vmatpush1.msra.mxu0 %v448
    %467 = vmatprep.subr.mxu0 0.0
    %468 = vmatpush1.msra.mxu0 %v447
    %469 = vmatprep.subr.mxu0 0.0
    %470 = vmatpush1.msra.mxu0 %v446
    %471 = vmatprep.subr.mxu0 0.0
    %472 = vmatpush1.msra.mxu0 %v445
    %473 = vmatprep.subr.mxu0 0.0
    %474 = vmatpush1.msra.mxu0 %v444
    %475 = vmatprep.subr.mxu0 0.0
    %476 = vmatpush1.msra.mxu0 %v443
    %477 = vmatprep.subr.mxu0 0.0
    %478 = vmatpush1.msra.mxu0 %v442
    %479 = vmatprep.subr.mxu0 0.0
    %480 = vmatpush1.msra.mxu0 %v441
    %481 = vmatprep.subr.mxu0 0.0
    %482 = vmatpush1.msra.mxu0 %v440
    %483 = vmatprep.subr.mxu0 0.0
    %484 = vmatpush1.msra.mxu0 %v439
    %485 = vmatprep.subr.mxu0 0.0
    %486 = vmatpush1.msra.mxu0 %v438
    %487 = vmatprep.subr.mxu0 0.0
    %488 = vmatpush1.msra.mxu0 %v437
    %489 = vmatprep.subr.mxu0 0.0
    %490 = vmatpush1.msra.mxu0 %v436
    %491 = vmatprep.subr.mxu0 0.0
    %492 = vmatpush1.msra.mxu0 %v435
    %493 = vmatprep.subr.mxu0 0.0
    %494 = vmatpush1.msra.mxu0 %v434
    %495 = vmatprep.subr.mxu0 0.0
    %496 = vmatpush2.msra.mxu0 0.0
    %497 = vmatprep.subr.mxu0 0.0
    %498 = vmatpush2.msra.mxu0 0.0
    %499 = vmatprep.subr.mxu0 0.0
    %500 = vmatpush2.msra.mxu0 0.0
    %501 = vmatprep.subr.mxu0 0.0
    %502 = vmatpush2.msra.mxu0 0.0
    %503 = vmatprep.subr.mxu0 0.0
    %504 = vmatpush2.msra.mxu0 0.0
    %505 = vmatprep.subr.mxu0 0.0
    %506 = vmatpush2.msra.mxu0 0.0
    %507 = vmatprep.subr.mxu0 0.0
    %508 = vmatpush2.msra.mxu0 0.0
    %509 = vmatprep.subr.mxu0 0.0
    %510 = vmatpush2.msra.mxu0 0.0
    %511 = vmatprep.subr.mxu0 0.0
    %512 = vmatpush2.msra.mxu0 0.0
    %513 = vmatprep.subr.mxu0 0.0
    %514 = vmatpush2.msra.mxu0 %v461
    %515 = vmatprep.subr.mxu0 0.0
    %516 = vmatpush2.msra.mxu0 %v455
    %517 = vmatprep.subr.mxu0 0.0
    %518 = vmatpush2.msra.mxu0 %v454
    %519 = vmatprep.subr.mxu0 0.0
    %520 = vmatpush2.msra.mxu0 %v453
    %521 = vmatprep.subr.mxu0 0.0
    %522 = vmatpush2.msra.mxu0 %v452
    %523 = vmatprep.subr.mxu0 0.0
    %524 = vmatpush2.msra.mxu0 %v451
    %525 = vmatprep.subr.mxu0 0.0
    %526 = vmatpush2.msra.mxu0 %v450
    %527 = vmatprep.mubr.f32.mxu0 %v458
    %528 = vmatmul.mubr.f32.gmra.mxu0 %v431
    %v529 = vpop.f32.mrf.mxu0
    %v530 = vadd.f32 0.0, %v529
    %v531 = vpop.f32.mrf.mxu0
    %532 = vdwg.mxu0
    %v533 = vadd.f32 %v377, %v530
    %s534 = sld [smem:[#allocation2 + $0x180]]
    %v535 = vstv %s534
    %v536 = vmul.f32 %v535, %v53
    %v537 = vmul.f32 %v535, %v54
    %s538 = sld [smem:[#allocation2 + $0x181]]
    %v539 = vstv %s538
    %v540 = vmul.f32 %v539, %v53
    %v541 = vmul.f32 %v539, %v54
    %544 = vrot.lane.b32.xlu0 %v540, 127
    %v545 = vpop.permute.xlu0 %544
    %546 = vrot.lane.b32.xlu0 %v541, 127
    %v547 = vpop.permute.xlu0 %546
    %v548 = vsel %vm70, %v545, %v547
    %v551 = vadd.f32 %v536, %v548
    %v552 = vadd.f32 %v537, %v547
    %s553 = sld [smem:[#allocation2 + $0x182]]
    %v554 = vstv %s553
    %v555 = vmul.f32 %v554, %v53
    %v556 = vmul.f32 %v554, %v54
    %559 = vrot.lane.b32.xlu0 %v555, 114
    %v560 = vpop.permute.xlu0 %559
    %561 = vrot.lane.b32.xlu0 %v556, 114
    %v562 = vpop.permute.xlu0 %561
    %v563 = vsel %vm86, %v560, %v562
    %v566 = vadd.f32 %v551, %v563
    %v567 = vadd.f32 %v552, %v562
    %s568 = sld [smem:[#allocation2 + $0x183]]
    %v569 = vstv %s568
    %v570 = vmul.f32 %v569, %v53
    %v571 = vmul.f32 %v569, %v54
    %574 = vrot.lane.b32.xlu0 %v570, 113
    %v575 = vpop.permute.xlu0 %574
    %576 = vrot.lane.b32.xlu0 %v571, 113
    %v577 = vpop.permute.xlu0 %576
    %v578 = vsel %vm102, %v575, %v577
    %v581 = vadd.f32 %v566, %v578
    %v582 = vadd.f32 %v567, %v577
    %s583 = sld [smem:[#allocation4 + $0x3]]
    %v584 = vstv %s583
    %v585 = vadd.f32 %v581, %v584
    %v586 = vadd.f32 %v582, %v584
    %v587 = vmax.f32 %v585, 0.0
    %v588 = vmax.f32 %v586, 0.0
    %s589 = scalar_lea.vmem %s3, 552
    %v590 = vld [vmem:[%s589] sm:$0xff]
    %v591 = vld [vmem:[%s589 + $0x8] sm:$0xff]
    %v592 = vld [vmem:[%s589 + $0x10] sm:$0xff]
    %v593 = vld [vmem:[%s589 + $0x18] sm:$0xff]
    %v594 = vld [vmem:[%s589 + $0x20] sm:$0xff]
    %v595 = vld [vmem:[%s589 + $0x28] sm:$0xff]
    %v596 = vld [vmem:[%s589 + $0x30] sm:$0xff]
    %v597 = vld [vmem:[%s589 + $0x38] sm:$0xff]
    %v598 = vld [vmem:[%s589 + $0x40] sm:$0xff]
    %v599 = vld [vmem:[%s589 + $0x48] sm:$0xff]
    %v600 = vld [vmem:[%s589 + $0x50] sm:$0xff]
    %v601 = vld [vmem:[%s589 + $0x58] sm:$0xff]
    %v602 = vld [vmem:[%s589 + $0x60] sm:$0xff]
    %v603 = vld [vmem:[%s589 + $0x68] sm:$0xff]
    %v604 = vld [vmem:[%s589 + $0x70] sm:$0xff]
    %v605 = vld [vmem:[%s589 + $0x78] sm:$0xff]
    %v606 = vld [vmem:[%s589 + $0x80] sm:$0xff]
    %v607 = vld [vmem:[%s589 + $0x88] sm:$0xff]
    %v608 = vld [vmem:[%s589 + $0x90] sm:$0xff]
    %v609 = vld [vmem:[%s589 + $0x98] sm:$0xff]
    %v610 = vld [vmem:[%s589 + $0xa0] sm:$0xff]
    %v611 = vld [vmem:[%s589 + $0xa8] sm:$0xff]
    %v612 = vld [vmem:[%s589 + $0xb0] sm:$0x1f]
    %v614 = vsel %vm137, %v588, 0
    %v617 = vsel %vm141, %v612, 0
    %619 = vmatprep.subr.mxu0 0.0
    %620 = vmatpush1.msra.mxu0 %v605
    %621 = vmatprep.subr.mxu0 0.0
    %622 = vmatpush1.msra.mxu0 %v604
    %623 = vmatprep.subr.mxu0 0.0
    %624 = vmatpush1.msra.mxu0 %v603
    %625 = vmatprep.subr.mxu0 0.0
    %626 = vmatpush1.msra.mxu0 %v602
    %627 = vmatprep.subr.mxu0 0.0
    %628 = vmatpush1.msra.mxu0 %v601
    %629 = vmatprep.subr.mxu0 0.0
    %630 = vmatpush1.msra.mxu0 %v600
    %631 = vmatprep.subr.mxu0 0.0
    %632 = vmatpush1.msra.mxu0 %v599
    %633 = vmatprep.subr.mxu0 0.0
    %634 = vmatpush1.msra.mxu0 %v598
    %635 = vmatprep.subr.mxu0 0.0
    %636 = vmatpush1.msra.mxu0 %v597
    %637 = vmatprep.subr.mxu0 0.0
    %638 = vmatpush1.msra.mxu0 %v596
    %639 = vmatprep.subr.mxu0 0.0
    %640 = vmatpush1.msra.mxu0 %v595
    %641 = vmatprep.subr.mxu0 0.0
    %642 = vmatpush1.msra.mxu0 %v594
    %643 = vmatprep.subr.mxu0 0.0
    %644 = vmatpush1.msra.mxu0 %v593
    %645 = vmatprep.subr.mxu0 0.0
    %646 = vmatpush1.msra.mxu0 %v592
    %647 = vmatprep.subr.mxu0 0.0
    %648 = vmatpush1.msra.mxu0 %v591
    %649 = vmatprep.subr.mxu0 0.0
    %650 = vmatpush1.msra.mxu0 %v590
    %651 = vmatprep.subr.mxu0 0.0
    %652 = vmatpush2.msra.mxu0 0.0
    %653 = vmatprep.subr.mxu0 0.0
    %654 = vmatpush2.msra.mxu0 0.0
    %655 = vmatprep.subr.mxu0 0.0
    %656 = vmatpush2.msra.mxu0 0.0
    %657 = vmatprep.subr.mxu0 0.0
    %658 = vmatpush2.msra.mxu0 0.0
    %659 = vmatprep.subr.mxu0 0.0
    %660 = vmatpush2.msra.mxu0 0.0
    %661 = vmatprep.subr.mxu0 0.0
    %662 = vmatpush2.msra.mxu0 0.0
    %663 = vmatprep.subr.mxu0 0.0
    %664 = vmatpush2.msra.mxu0 0.0
    %665 = vmatprep.subr.mxu0 0.0
    %666 = vmatpush2.msra.mxu0 0.0
    %667 = vmatprep.subr.mxu0 0.0
    %668 = vmatpush2.msra.mxu0 0.0
    %669 = vmatprep.subr.mxu0 0.0
    %670 = vmatpush2.msra.mxu0 %v617
    %671 = vmatprep.subr.mxu0 0.0
    %672 = vmatpush2.msra.mxu0 %v611
    %673 = vmatprep.subr.mxu0 0.0
    %674 = vmatpush2.msra.mxu0 %v610
    %675 = vmatprep.subr.mxu0 0.0
    %676 = vmatpush2.msra.mxu0 %v609
    %677 = vmatprep.subr.mxu0 0.0
    %678 = vmatpush2.msra.mxu0 %v608
    %679 = vmatprep.subr.mxu0 0.0
    %680 = vmatpush2.msra.mxu0 %v607
    %681 = vmatprep.subr.mxu0 0.0
    %682 = vmatpush2.msra.mxu0 %v606
    %683 = vmatprep.mubr.f32.mxu0 %v614
    %684 = vmatmul.mubr.f32.gmra.mxu0 %v587
    %v685 = vpop.f32.mrf.mxu0
    %v686 = vadd.f32 0.0, %v685
    %v687 = vpop.f32.mrf.mxu0
    %688 = vdwg.mxu0
    %v689 = vadd.f32 %v533, %v686
    %s690 = sld [smem:[#allocation2 + $0x200]]
    %v691 = vstv %s690
    %v692 = vmul.f32 %v691, %v53
    %v693 = vmul.f32 %v691, %v54
    %s694 = sld [smem:[#allocation2 + $0x201]]
    %v695 = vstv %s694
    %v696 = vmul.f32 %v695, %v53
    %v697 = vmul.f32 %v695, %v54
    %700 = vrot.lane.b32.xlu0 %v696, 127
    %v701 = vpop.permute.xlu0 %700
    %702 = vrot.lane.b32.xlu0 %v697, 127
    %v703 = vpop.permute.xlu0 %702
    %v704 = vsel %vm70, %v701, %v703
    %v707 = vadd.f32 %v692, %v704
    %v708 = vadd.f32 %v693, %v703
    %s709 = sld [smem:[#allocation2 + $0x202]]
    %v710 = vstv %s709
    %v711 = vmul.f32 %v710, %v53
    %v712 = vmul.f32 %v710, %v54
    %715 = vrot.lane.b32.xlu0 %v711, 114
    %v716 = vpop.permute.xlu0 %715
    %717 = vrot.lane.b32.xlu0 %v712, 114
    %v718 = vpop.permute.xlu0 %717
    %v719 = vsel %vm86, %v716, %v718
    %v722 = vadd.f32 %v707, %v719
    %v723 = vadd.f32 %v708, %v718
    %s724 = sld [smem:[#allocation2 + $0x203]]
    %v725 = vstv %s724
    %v726 = vmul.f32 %v725, %v53
    %v727 = vmul.f32 %v725, %v54
    %730 = vrot.lane.b32.xlu0 %v726, 113
    %v731 = vpop.permute.xlu0 %730
    %732 = vrot.lane.b32.xlu0 %v727, 113
    %v733 = vpop.permute.xlu0 %732
    %v734 = vsel %vm102, %v731, %v733
    %v737 = vadd.f32 %v722, %v734
    %v738 = vadd.f32 %v723, %v733
    %s739 = sld [smem:[#allocation4 + $0x4]]
    %v740 = vstv %s739
    %v741 = vadd.f32 %v737, %v740
    %v742 = vadd.f32 %v738, %v740
    %v743 = vmax.f32 %v741, 0.0
    %v744 = vmax.f32 %v742, 0.0
    %s745 = scalar_lea.vmem %s3, 736
    %v746 = vld [vmem:[%s745] sm:$0xff]
    %v747 = vld [vmem:[%s745 + $0x8] sm:$0xff]
    %v748 = vld [vmem:[%s745 + $0x10] sm:$0xff]
    %v749 = vld [vmem:[%s745 + $0x18] sm:$0xff]
    %v750 = vld [vmem:[%s745 + $0x20] sm:$0xff]
    %v751 = vld [vmem:[%s745 + $0x28] sm:$0xff]
    %v752 = vld [vmem:[%s745 + $0x30] sm:$0xff]
    %v753 = vld [vmem:[%s745 + $0x38] sm:$0xff]
    %v754 = vld [vmem:[%s745 + $0x40] sm:$0xff]
    %v755 = vld [vmem:[%s745 + $0x48] sm:$0xff]
    %v756 = vld [vmem:[%s745 + $0x50] sm:$0xff]
    %v757 = vld [vmem:[%s745 + $0x58] sm:$0xff]
    %v758 = vld [vmem:[%s745 + $0x60] sm:$0xff]
    %v759 = vld [vmem:[%s745 + $0x68] sm:$0xff]
    %v760 = vld [vmem:[%s745 + $0x70] sm:$0xff]
    %v761 = vld [vmem:[%s745 + $0x78] sm:$0xff]
    %v762 = vld [vmem:[%s745 + $0x80] sm:$0xff]
    %v763 = vld [vmem:[%s745 + $0x88] sm:$0xff]
    %v764 = vld [vmem:[%s745 + $0x90] sm:$0xff]
    %v765 = vld [vmem:[%s745 + $0x98] sm:$0xff]
    %v766 = vld [vmem:[%s745 + $0xa0] sm:$0xff]
    %v767 = vld [vmem:[%s745 + $0xa8] sm:$0xff]
    %v768 = vld [vmem:[%s745 + $0xb0] sm:$0x1f]
    %v770 = vsel %vm137, %v744, 0
    %v773 = vsel %vm141, %v768, 0
    %775 = vmatprep.subr.mxu0 0.0
    %776 = vmatpush1.msra.mxu0 %v761
    %777 = vmatprep.subr.mxu0 0.0
    %778 = vmatpush1.msra.mxu0 %v760
    %779 = vmatprep.subr.mxu0 0.0
    %780 = vmatpush1.msra.mxu0 %v759
    %781 = vmatprep.subr.mxu0 0.0
    %782 = vmatpush1.msra.mxu0 %v758
    %783 = vmatprep.subr.mxu0 0.0
    %784 = vmatpush1.msra.mxu0 %v757
    %785 = vmatprep.subr.mxu0 0.0
    %786 = vmatpush1.msra.mxu0 %v756
    %787 = vmatprep.subr.mxu0 0.0
    %788 = vmatpush1.msra.mxu0 %v755
    %789 = vmatprep.subr.mxu0 0.0
    %790 = vmatpush1.msra.mxu0 %v754
    %791 = vmatprep.subr.mxu0 0.0
    %792 = vmatpush1.msra.mxu0 %v753
    %793 = vmatprep.subr.mxu0 0.0
    %794 = vmatpush1.msra.mxu0 %v752
    %795 = vmatprep.subr.mxu0 0.0
    %796 = vmatpush1.msra.mxu0 %v751
    %797 = vmatprep.subr.mxu0 0.0
    %798 = vmatpush1.msra.mxu0 %v750
    %799 = vmatprep.subr.mxu0 0.0
    %800 = vmatpush1.msra.mxu0 %v749
    %801 = vmatprep.subr.mxu0 0.0
    %802 = vmatpush1.msra.mxu0 %v748
    %803 = vmatprep.subr.mxu0 0.0
    %804 = vmatpush1.msra.mxu0 %v747
    %805 = vmatprep.subr.mxu0 0.0
    %806 = vmatpush1.msra.mxu0 %v746
    %807 = vmatprep.subr.mxu0 0.0
    %808 = vmatpush2.msra.mxu0 0.0
    %809 = vmatprep.subr.mxu0 0.0
    %810 = vmatpush2.msra.mxu0 0.0
    %811 = vmatprep.subr.mxu0 0.0
    %812 = vmatpush2.msra.mxu0 0.0
    %813 = vmatprep.subr.mxu0 0.0
    %814 = vmatpush2.msra.mxu0 0.0
    %815 = vmatprep.subr.mxu0 0.0
    %816 = vmatpush2.msra.mxu0 0.0
    %817 = vmatprep.subr.mxu0 0.0
    %818 = vmatpush2.msra.mxu0 0.0
    %819 = vmatprep.subr.mxu0 0.0
    %820 = vmatpush2.msra.mxu0 0.0
    %821 = vmatprep.subr.mxu0 0.0
    %822 = vmatpush2.msra.mxu0 0.0
    %823 = vmatprep.subr.mxu0 0.0
    %824 = vmatpush2.msra.mxu0 0.0
    %825 = vmatprep.subr.mxu0 0.0
    %826 = vmatpush2.msra.mxu0 %v773
    %827 = vmatprep.subr.mxu0 0.0
    %828 = vmatpush2.msra.mxu0 %v767
    %829 = vmatprep.subr.mxu0 0.0
    %830 = vmatpush2.msra.mxu0 %v766
    %831 = vmatprep.subr.mxu0 0.0
    %832 = vmatpush2.msra.mxu0 %v765
    %833 = vmatprep.subr.mxu0 0.0
    %834 = vmatpush2.msra.mxu0 %v764
    %835 = vmatprep.subr.mxu0 0.0
    %836 = vmatpush2.msra.mxu0 %v763
    %837 = vmatprep.subr.mxu0 0.0
    %838 = vmatpush2.msra.mxu0 %v762
    %839 = vmatprep.mubr.f32.mxu0 %v770
    %840 = vmatmul.mubr.f32.gmra.mxu0 %v743
    %v841 = vpop.f32.mrf.mxu0
    %v842 = vadd.f32 0.0, %v841
    %v843 = vpop.f32.mrf.mxu0
    %844 = vdwg.mxu0
    %v845 = vadd.f32 %v689, %v842
    %s846 = sld [smem:[#allocation2 + $0x280]]
    %v847 = vstv %s846
    %v848 = vmul.f32 %v847, %v53
    %v849 = vmul.f32 %v847, %v54
    %s850 = sld [smem:[#allocation2 + $0x281]]
    %v851 = vstv %s850
    %v852 = vmul.f32 %v851, %v53
    %v853 = vmul.f32 %v851, %v54
    %856 = vrot.lane.b32.xlu0 %v852, 127
    %v857 = vpop.permute.xlu0 %856
    %858 = vrot.lane.b32.xlu0 %v853, 127
    %v859 = vpop.permute.xlu0 %858
    %v860 = vsel %vm70, %v857, %v859
    %v863 = vadd.f32 %v848, %v860
    %v864 = vadd.f32 %v849, %v859
    %s865 = sld [smem:[#allocation2 + $0x282]]
    %v866 = vstv %s865
    %v867 = vmul.f32 %v866, %v53
    %v868 = vmul.f32 %v866, %v54
    %871 = vrot.lane.b32.xlu0 %v867, 114
    %v872 = vpop.permute.xlu0 %871
    %873 = vrot.lane.b32.xlu0 %v868, 114
    %v874 = vpop.permute.xlu0 %873
    %v875 = vsel %vm86, %v872, %v874
    %v878 = vadd.f32 %v863, %v875
    %v879 = vadd.f32 %v864, %v874
    %s880 = sld [smem:[#allocation2 + $0x283]]
    %v881 = vstv %s880
    %v882 = vmul.f32 %v881, %v53
    %v883 = vmul.f32 %v881, %v54
    %886 = vrot.lane.b32.xlu0 %v882, 113
    %v887 = vpop.permute.xlu0 %886
    %888 = vrot.lane.b32.xlu0 %v883, 113
    %v889 = vpop.permute.xlu0 %888
    %v890 = vsel %vm102, %v887, %v889
    %v893 = vadd.f32 %v878, %v890
    %v894 = vadd.f32 %v879, %v889
    %s895 = sld [smem:[#allocation4 + $0x5]]
    %v896 = vstv %s895
    %v897 = vadd.f32 %v893, %v896
    %v898 = vadd.f32 %v894, %v896
    %v899 = vmax.f32 %v897, 0.0
    %v900 = vmax.f32 %v898, 0.0
    %s901 = scalar_lea.vmem %s3, 920
    %v902 = vld [vmem:[%s901] sm:$0xff]
    %v903 = vld [vmem:[%s901 + $0x8] sm:$0xff]
    %v904 = vld [vmem:[%s901 + $0x10] sm:$0xff]
    %v905 = vld [vmem:[%s901 + $0x18] sm:$0xff]
    %v906 = vld [vmem:[%s901 + $0x20] sm:$0xff]
    %v907 = vld [vmem:[%s901 + $0x28] sm:$0xff]
    %v908 = vld [vmem:[%s901 + $0x30] sm:$0xff]
    %v909 = vld [vmem:[%s901 + $0x38] sm:$0xff]
    %v910 = vld [vmem:[%s901 + $0x40] sm:$0xff]
    %v911 = vld [vmem:[%s901 + $0x48] sm:$0xff]
    %v912 = vld [vmem:[%s901 + $0x50] sm:$0xff]
    %v913 = vld [vmem:[%s901 + $0x58] sm:$0xff]
    %v914 = vld [vmem:[%s901 + $0x60] sm:$0xff]
    %v915 = vld [vmem:[%s901 + $0x68] sm:$0xff]
    %v916 = vld [vmem:[%s901 + $0x70] sm:$0xff]
    %v917 = vld [vmem:[%s901 + $0x78] sm:$0xff]
    %v918 = vld [vmem:[%s901 + $0x80] sm:$0xff]
    %v919 = vld [vmem:[%s901 + $0x88] sm:$0xff]
    %v920 = vld [vmem:[%s901 + $0x90] sm:$0xff]
    %v921 = vld [vmem:[%s901 + $0x98] sm:$0xff]
    %v922 = vld [vmem:[%s901 + $0xa0] sm:$0xff]
    %v923 = vld [vmem:[%s901 + $0xa8] sm:$0xff]
    %v924 = vld [vmem:[%s901 + $0xb0] sm:$0x1f]
    %v926 = vsel %vm137, %v900, 0
    %v929 = vsel %vm141, %v924, 0
    %931 = vmatprep.subr.mxu0 0.0
    %932 = vmatpush1.msra.mxu0 %v917
    %933 = vmatprep.subr.mxu0 0.0
    %934 = vmatpush1.msra.mxu0 %v916
    %935 = vmatprep.subr.mxu0 0.0
    %936 = vmatpush1.msra.mxu0 %v915
    %937 = vmatprep.subr.mxu0 0.0
    %938 = vmatpush1.msra.mxu0 %v914
    %939 = vmatprep.subr.mxu0 0.0
    %940 = vmatpush1.msra.mxu0 %v913
    %941 = vmatprep.subr.mxu0 0.0
    %942 = vmatpush1.msra.mxu0 %v912
    %943 = vmatprep.subr.mxu0 0.0
    %944 = vmatpush1.msra.mxu0 %v911
    %945 = vmatprep.subr.mxu0 0.0
    %946 = vmatpush1.msra.mxu0 %v910
    %947 = vmatprep.subr.mxu0 0.0
    %948 = vmatpush1.msra.mxu0 %v909
    %949 = vmatprep.subr.mxu0 0.0
    %950 = vmatpush1.msra.mxu0 %v908
    %951 = vmatprep.subr.mxu0 0.0
    %952 = vmatpush1.msra.mxu0 %v907
    %953 = vmatprep.subr.mxu0 0.0
    %954 = vmatpush1.msra.mxu0 %v906
    %955 = vmatprep.subr.mxu0 0.0
    %956 = vmatpush1.msra.mxu0 %v905
    %957 = vmatprep.subr.mxu0 0.0
    %958 = vmatpush1.msra.mxu0 %v904
    %959 = vmatprep.subr.mxu0 0.0
    %960 = vmatpush1.msra.mxu0 %v903
    %961 = vmatprep.subr.mxu0 0.0
    %962 = vmatpush1.msra.mxu0 %v902
    %963 = vmatprep.subr.mxu0 0.0
    %964 = vmatpush2.msra.mxu0 0.0
    %965 = vmatprep.subr.mxu0 0.0
    %966 = vmatpush2.msra.mxu0 0.0
    %967 = vmatprep.subr.mxu0 0.0
    %968 = vmatpush2.msra.mxu0 0.0
    %969 = vmatprep.subr.mxu0 0.0
    %970 = vmatpush2.msra.mxu0 0.0
    %971 = vmatprep.subr.mxu0 0.0
    %972 = vmatpush2.msra.mxu0 0.0
    %973 = vmatprep.subr.mxu0 0.0
    %974 = vmatpush2.msra.mxu0 0.0
    %975 = vmatprep.subr.mxu0 0.0
    %976 = vmatpush2.msra.mxu0 0.0
    %977 = vmatprep.subr.mxu0 0.0
    %978 = vmatpush2.msra.mxu0 0.0
    %979 = vmatprep.subr.mxu0 0.0
    %980 = vmatpush2.msra.mxu0 0.0
    %981 = vmatprep.subr.mxu0 0.0
    %982 = vmatpush2.msra.mxu0 %v929
    %983 = vmatprep.subr.mxu0 0.0
    %984 = vmatpush2.msra.mxu0 %v923
    %985 = vmatprep.subr.mxu0 0.0
    %986 = vmatpush2.msra.mxu0 %v922
    %987 = vmatprep.subr.mxu0 0.0
    %988 = vmatpush2.msra.mxu0 %v921
    %989 = vmatprep.subr.mxu0 0.0
    %990 = vmatpush2.msra.mxu0 %v920
    %991 = vmatprep.subr.mxu0 0.0
    %992 = vmatpush2.msra.mxu0 %v919
    %993 = vmatprep.subr.mxu0 0.0
    %994 = vmatpush2.msra.mxu0 %v918
    %995 = vmatprep.mubr.f32.mxu0 %v926
    %996 = vmatmul.mubr.f32.gmra.mxu0 %v899
    %v997 = vpop.f32.mrf.mxu0
    %v998 = vadd.f32 0.0, %v997
    %v999 = vpop.f32.mrf.mxu0
    %1000 = vdwg.mxu0
    %v1001 = vadd.f32 %v845, %v998
    %s1002 = sld [smem:[#allocation2 + $0x300]]
    %v1003 = vstv %s1002
    %v1004 = vmul.f32 %v1003, %v53
    %v1005 = vmul.f32 %v1003, %v54
    %s1006 = sld [smem:[#allocation2 + $0x301]]
    %v1007 = vstv %s1006
    %v1008 = vmul.f32 %v1007, %v53
    %v1009 = vmul.f32 %v1007, %v54
    %1012 = vrot.lane.b32.xlu0 %v1008, 127
    %v1013 = vpop.permute.xlu0 %1012
    %1014 = vrot.lane.b32.xlu0 %v1009, 127
    %v1015 = vpop.permute.xlu0 %1014
    %v1016 = vsel %vm70, %v1013, %v1015
    %v1019 = vadd.f32 %v1004, %v1016
    %v1020 = vadd.f32 %v1005, %v1015
    %s1021 = sld [smem:[#allocation2 + $0x302]]
    %v1022 = vstv %s1021
    %v1023 = vmul.f32 %v1022, %v53
    %v1024 = vmul.f32 %v1022, %v54
    %1027 = vrot.lane.b32.xlu0 %v1023, 114
    %v1028 = vpop.permute.xlu0 %1027
    %1029 = vrot.lane.b32.xlu0 %v1024, 114
    %v1030 = vpop.permute.xlu0 %1029
    %v1031 = vsel %vm86, %v1028, %v1030
    %v1034 = vadd.f32 %v1019, %v1031
    %v1035 = vadd.f32 %v1020, %v1030
    %s1036 = sld [smem:[#allocation2 + $0x303]]
    %v1037 = vstv %s1036
    %v1038 = vmul.f32 %v1037, %v53
    %v1039 = vmul.f32 %v1037, %v54
    %1042 = vrot.lane.b32.xlu0 %v1038, 113
    %v1043 = vpop.permute.xlu0 %1042
    %1044 = vrot.lane.b32.xlu0 %v1039, 113
    %v1045 = vpop.permute.xlu0 %1044
    %v1046 = vsel %vm102, %v1043, %v1045
    %v1049 = vadd.f32 %v1034, %v1046
    %v1050 = vadd.f32 %v1035, %v1045
    %s1051 = sld [smem:[#allocation4 + $0x6]]
    %v1052 = vstv %s1051
    %v1053 = vadd.f32 %v1049, %v1052
    %v1054 = vadd.f32 %v1050, %v1052
    %v1055 = vmax.f32 %v1053, 0.0
    %v1056 = vmax.f32 %v1054, 0.0
    %s1057 = scalar_lea.vmem %s3, 1104
    %v1058 = vld [vmem:[%s1057] sm:$0xff]
    %v1059 = vld [vmem:[%s1057 + $0x8] sm:$0xff]
    %v1060 = vld [vmem:[%s1057 + $0x10] sm:$0xff]
    %v1061 = vld [vmem:[%s1057 + $0x18] sm:$0xff]
    %v1062 = vld [vmem:[%s1057 + $0x20] sm:$0xff]
    %v1063 = vld [vmem:[%s1057 + $0x28] sm:$0xff]
    %v1064 = vld [vmem:[%s1057 + $0x30] sm:$0xff]
    %v1065 = vld [vmem:[%s1057 + $0x38] sm:$0xff]
    %v1066 = vld [vmem:[%s1057 + $0x40] sm:$0xff]
    %v1067 = vld [vmem:[%s1057 + $0x48] sm:$0xff]
    %v1068 = vld [vmem:[%s1057 + $0x50] sm:$0xff]
    %v1069 = vld [vmem:[%s1057 + $0x58] sm:$0xff]
    %v1070 = vld [vmem:[%s1057 + $0x60] sm:$0xff]
    %v1071 = vld [vmem:[%s1057 + $0x68] sm:$0xff]
    %v1072 = vld [vmem:[%s1057 + $0x70] sm:$0xff]
    %v1073 = vld [vmem:[%s1057 + $0x78] sm:$0xff]
    %v1074 = vld [vmem:[%s1057 + $0x80] sm:$0xff]
    %v1075 = vld [vmem:[%s1057 + $0x88] sm:$0xff]
    %v1076 = vld [vmem:[%s1057 + $0x90] sm:$0xff]
    %v1077 = vld [vmem:[%s1057 + $0x98] sm:$0xff]
    %v1078 = vld [vmem:[%s1057 + $0xa0] sm:$0xff]
    %v1079 = vld [vmem:[%s1057 + $0xa8] sm:$0xff]
    %v1080 = vld [vmem:[%s1057 + $0xb0] sm:$0x1f]
    %v1082 = vsel %vm137, %v1056, 0
    %v1085 = vsel %vm141, %v1080, 0
    %1087 = vmatprep.subr.mxu0 0.0
    %1088 = vmatpush1.msra.mxu0 %v1073
    %1089 = vmatprep.subr.mxu0 0.0
    %1090 = vmatpush1.msra.mxu0 %v1072
    %1091 = vmatprep.subr.mxu0 0.0
    %1092 = vmatpush1.msra.mxu0 %v1071
    %1093 = vmatprep.subr.mxu0 0.0
    %1094 = vmatpush1.msra.mxu0 %v1070
    %1095 = vmatprep.subr.mxu0 0.0
    %1096 = vmatpush1.msra.mxu0 %v1069
    %1097 = vmatprep.subr.mxu0 0.0
    %1098 = vmatpush1.msra.mxu0 %v1068
    %1099 = vmatprep.subr.mxu0 0.0
    %1100 = vmatpush1.msra.mxu0 %v1067
    %1101 = vmatprep.subr.mxu0 0.0
    %1102 = vmatpush1.msra.mxu0 %v1066
    %1103 = vmatprep.subr.mxu0 0.0
    %1104 = vmatpush1.msra.mxu0 %v1065
    %1105 = vmatprep.subr.mxu0 0.0
    %1106 = vmatpush1.msra.mxu0 %v1064
    %1107 = vmatprep.subr.mxu0 0.0
    %1108 = vmatpush1.msra.mxu0 %v1063
    %1109 = vmatprep.subr.mxu0 0.0
    %1110 = vmatpush1.msra.mxu0 %v1062
    %1111 = vmatprep.subr.mxu0 0.0
    %1112 = vmatpush1.msra.mxu0 %v1061
    %1113 = vmatprep.subr.mxu0 0.0
    %1114 = vmatpush1.msra.mxu0 %v1060
    %1115 = vmatprep.subr.mxu0 0.0
    %1116 = vmatpush1.msra.mxu0 %v1059
    %1117 = vmatprep.subr.mxu0 0.0
    %1118 = vmatpush1.msra.mxu0 %v1058
    %1119 = vmatprep.subr.mxu0 0.0
    %1120 = vmatpush2.msra.mxu0 0.0
    %1121 = vmatprep.subr.mxu0 0.0
    %1122 = vmatpush2.msra.mxu0 0.0
    %1123 = vmatprep.subr.mxu0 0.0
    %1124 = vmatpush2.msra.mxu0 0.0
    %1125 = vmatprep.subr.mxu0 0.0
    %1126 = vmatpush2.msra.mxu0 0.0
    %1127 = vmatprep.subr.mxu0 0.0
    %1128 = vmatpush2.msra.mxu0 0.0
    %1129 = vmatprep.subr.mxu0 0.0
    %1130 = vmatpush2.msra.mxu0 0.0
    %1131 = vmatprep.subr.mxu0 0.0
    %1132 = vmatpush2.msra.mxu0 0.0
    %1133 = vmatprep.subr.mxu0 0.0
    %1134 = vmatpush2.msra.mxu0 0.0
    %1135 = vmatprep.subr.mxu0 0.0
    %1136 = vmatpush2.msra.mxu0 0.0
    %1137 = vmatprep.subr.mxu0 0.0
    %1138 = vmatpush2.msra.mxu0 %v1085
    %1139 = vmatprep.subr.mxu0 0.0
    %1140 = vmatpush2.msra.mxu0 %v1079
    %1141 = vmatprep.subr.mxu0 0.0
    %1142 = vmatpush2.msra.mxu0 %v1078
    %1143 = vmatprep.subr.mxu0 0.0
    %1144 = vmatpush2.msra.mxu0 %v1077
    %1145 = vmatprep.subr.mxu0 0.0
    %1146 = vmatpush2.msra.mxu0 %v1076
    %1147 = vmatprep.subr.mxu0 0.0
    %1148 = vmatpush2.msra.mxu0 %v1075
    %1149 = vmatprep.subr.mxu0 0.0
    %1150 = vmatpush2.msra.mxu0 %v1074
    %1151 = vmatprep.mubr.f32.mxu0 %v1082
    %1152 = vmatmul.mubr.f32.gmra.mxu0 %v1055
    %v1153 = vpop.f32.mrf.mxu0
    %v1154 = vadd.f32 0.0, %v1153
    %v1155 = vpop.f32.mrf.mxu0
    %1156 = vdwg.mxu0
    %v1157 = vadd.f32 %v1001, %v1154
    %s1158 = sld [smem:[#allocation2 + $0x380]]
    %v1159 = vstv %s1158
    %v1160 = vmul.f32 %v1159, %v53
    %v1161 = vmul.f32 %v1159, %v54
    %s1162 = sld [smem:[#allocation2 + $0x381]]
    %v1163 = vstv %s1162
    %v1164 = vmul.f32 %v1163, %v53
    %v1165 = vmul.f32 %v1163, %v54
    %1168 = vrot.lane.b32.xlu0 %v1164, 127
    %v1169 = vpop.permute.xlu0 %1168
    %1170 = vrot.lane.b32.xlu0 %v1165, 127
    %v1171 = vpop.permute.xlu0 %1170
    %v1172 = vsel %vm70, %v1169, %v1171
    %v1175 = vadd.f32 %v1160, %v1172
    %v1176 = vadd.f32 %v1161, %v1171
    %s1177 = sld [smem:[#allocation2 + $0x382]]
    %v1178 = vstv %s1177
    %v1179 = vmul.f32 %v1178, %v53
    %v1180 = vmul.f32 %v1178, %v54
    %1183 = vrot.lane.b32.xlu0 %v1179, 114
    %v1184 = vpop.permute.xlu0 %1183
    %1185 = vrot.lane.b32.xlu0 %v1180, 114
    %v1186 = vpop.permute.xlu0 %1185
    %v1187 = vsel %vm86, %v1184, %v1186
    %v1190 = vadd.f32 %v1175, %v1187
    %v1191 = vadd.f32 %v1176, %v1186
    %s1192 = sld [smem:[#allocation2 + $0x383]]
    %v1193 = vstv %s1192
    %v1194 = vmul.f32 %v1193, %v53
    %v1195 = vmul.f32 %v1193, %v54
    %1198 = vrot.lane.b32.xlu0 %v1194, 113
    %v1199 = vpop.permute.xlu0 %1198
    %1200 = vrot.lane.b32.xlu0 %v1195, 113
    %v1201 = vpop.permute.xlu0 %1200
    %v1202 = vsel %vm102, %v1199, %v1201
    %v1205 = vadd.f32 %v1190, %v1202
    %v1206 = vadd.f32 %v1191, %v1201
    %s1207 = sld [smem:[#allocation4 + $0x7]]
    %v1208 = vstv %s1207
    %v1209 = vadd.f32 %v1205, %v1208
    %v1210 = vadd.f32 %v1206, %v1208
    %v1211 = vmax.f32 %v1209, 0.0
    %v1212 = vmax.f32 %v1210, 0.0
    %s1213 = scalar_lea.vmem %s3, 1288
    %v1214 = vld [vmem:[%s1213] sm:$0xff]
    %v1215 = vld [vmem:[%s1213 + $0x8] sm:$0xff]
    %v1216 = vld [vmem:[%s1213 + $0x10] sm:$0xff]
    %v1217 = vld [vmem:[%s1213 + $0x18] sm:$0xff]
    %v1218 = vld [vmem:[%s1213 + $0x20] sm:$0xff]
    %v1219 = vld [vmem:[%s1213 + $0x28] sm:$0xff]
    %v1220 = vld [vmem:[%s1213 + $0x30] sm:$0xff]
    %v1221 = vld [vmem:[%s1213 + $0x38] sm:$0xff]
    %v1222 = vld [vmem:[%s1213 + $0x40] sm:$0xff]
    %v1223 = vld [vmem:[%s1213 + $0x48] sm:$0xff]
    %v1224 = vld [vmem:[%s1213 + $0x50] sm:$0xff]
    %v1225 = vld [vmem:[%s1213 + $0x58] sm:$0xff]
    %v1226 = vld [vmem:[%s1213 + $0x60] sm:$0xff]
    %v1227 = vld [vmem:[%s1213 + $0x68] sm:$0xff]
    %v1228 = vld [vmem:[%s1213 + $0x70] sm:$0xff]
    %v1229 = vld [vmem:[%s1213 + $0x78] sm:$0xff]
    %v1230 = vld [vmem:[%s1213 + $0x80] sm:$0xff]
    %v1231 = vld [vmem:[%s1213 + $0x88] sm:$0xff]
    %v1232 = vld [vmem:[%s1213 + $0x90] sm:$0xff]
    %v1233 = vld [vmem:[%s1213 + $0x98] sm:$0xff]
    %v1234 = vld [vmem:[%s1213 + $0xa0] sm:$0xff]
    %v1235 = vld [vmem:[%s1213 + $0xa8] sm:$0xff]
    %v1236 = vld [vmem:[%s1213 + $0xb0] sm:$0x1f]
    %v1238 = vsel %vm137, %v1212, 0
    %v1241 = vsel %vm141, %v1236, 0
    %1243 = vmatprep.subr.mxu0 0.0
    %1244 = vmatpush1.msra.mxu0 %v1229
    %1245 = vmatprep.subr.mxu0 0.0
    %1246 = vmatpush1.msra.mxu0 %v1228
    %1247 = vmatprep.subr.mxu0 0.0
    %1248 = vmatpush1.msra.mxu0 %v1227
    %1249 = vmatprep.subr.mxu0 0.0
    %1250 = vmatpush1.msra.mxu0 %v1226
    %1251 = vmatprep.subr.mxu0 0.0
    %1252 = vmatpush1.msra.mxu0 %v1225
    %1253 = vmatprep.subr.mxu0 0.0
    %1254 = vmatpush1.msra.mxu0 %v1224
    %1255 = vmatprep.subr.mxu0 0.0
    %1256 = vmatpush1.msra.mxu0 %v1223
    %1257 = vmatprep.subr.mxu0 0.0
    %1258 = vmatpush1.msra.mxu0 %v1222
    %1259 = vmatprep.subr.mxu0 0.0
    %1260 = vmatpush1.msra.mxu0 %v1221
    %1261 = vmatprep.subr.mxu0 0.0
    %1262 = vmatpush1.msra.mxu0 %v1220
    %1263 = vmatprep.subr.mxu0 0.0
    %1264 = vmatpush1.msra.mxu0 %v1219
    %1265 = vmatprep.subr.mxu0 0.0
    %1266 = vmatpush1.msra.mxu0 %v1218
    %1267 = vmatprep.subr.mxu0 0.0
    %1268 = vmatpush1.msra.mxu0 %v1217
    %1269 = vmatprep.subr.mxu0 0.0
    %1270 = vmatpush1.msra.mxu0 %v1216
    %1271 = vmatprep.subr.mxu0 0.0
    %1272 = vmatpush1.msra.mxu0 %v1215
    %1273 = vmatprep.subr.mxu0 0.0
    %1274 = vmatpush1.msra.mxu0 %v1214
    %1275 = vmatprep.subr.mxu0 0.0
    %1276 = vmatpush2.msra.mxu0 0.0
    %1277 = vmatprep.subr.mxu0 0.0
    %1278 = vmatpush2.msra.mxu0 0.0
    %1279 = vmatprep.subr.mxu0 0.0
    %1280 = vmatpush2.msra.mxu0 0.0
    %1281 = vmatprep.subr.mxu0 0.0
    %1282 = vmatpush2.msra.mxu0 0.0
    %1283 = vmatprep.subr.mxu0 0.0
    %1284 = vmatpush2.msra.mxu0 0.0
    %1285 = vmatprep.subr.mxu0 0.0
    %1286 = vmatpush2.msra.mxu0 0.0
    %1287 = vmatprep.subr.mxu0 0.0
    %1288 = vmatpush2.msra.mxu0 0.0
    %1289 = vmatprep.subr.mxu0 0.0
    %1290 = vmatpush2.msra.mxu0 0.0
    %1291 = vmatprep.subr.mxu0 0.0
    %1292 = vmatpush2.msra.mxu0 0.0
    %1293 = vmatprep.subr.mxu0 0.0
    %1294 = vmatpush2.msra.mxu0 %v1241
    %1295 = vmatprep.subr.mxu0 0.0
    %1296 = vmatpush2.msra.mxu0 %v1235
    %1297 = vmatprep.subr.mxu0 0.0
    %1298 = vmatpush2.msra.mxu0 %v1234
    %1299 = vmatprep.subr.mxu0 0.0
    %1300 = vmatpush2.msra.mxu0 %v1233
    %1301 = vmatprep.subr.mxu0 0.0
    %1302 = vmatpush2.msra.mxu0 %v1232
    %1303 = vmatprep.subr.mxu0 0.0
    %1304 = vmatpush2.msra.mxu0 %v1231
    %1305 = vmatprep.subr.mxu0 0.0
    %1306 = vmatpush2.msra.mxu0 %v1230
    %1307 = vmatprep.mubr.f32.mxu0 %v1238
    %1308 = vmatmul.mubr.f32.gmra.mxu0 %v1211
    %v1309 = vpop.f32.mrf.mxu0
    %v1310 = vadd.f32 0.0, %v1309
    %v1311 = vpop.f32.mrf.mxu0
    %1312 = vdwg.mxu0
    %v1313 = vadd.f32 %v1157, %v1310
    %s1314 = sld [smem:[#allocation2 + $0x400]]
    %v1315 = vstv %s1314
    %v1316 = vmul.f32 %v1315, %v53
    %v1317 = vmul.f32 %v1315, %v54
    %s1318 = sld [smem:[#allocation2 + $0x401]]
    %v1319 = vstv %s1318
    %v1320 = vmul.f32 %v1319, %v53
    %v1321 = vmul.f32 %v1319, %v54
    %1324 = vrot.lane.b32.xlu0 %v1320, 127
    %v1325 = vpop.permute.xlu0 %1324
    %1326 = vrot.lane.b32.xlu0 %v1321, 127
    %v1327 = vpop.permute.xlu0 %1326
    %v1328 = vsel %vm70, %v1325, %v1327
    %v1331 = vadd.f32 %v1316, %v1328
    %v1332 = vadd.f32 %v1317, %v1327
    %s1333 = sld [smem:[#allocation2 + $0x402]]
    %v1334 = vstv %s1333
    %v1335 = vmul.f32 %v1334, %v53
    %v1336 = vmul.f32 %v1334, %v54
    %1339 = vrot.lane.b32.xlu0 %v1335, 114
    %v1340 = vpop.permute.xlu0 %1339
    %1341 = vrot.lane.b32.xlu0 %v1336, 114
    %v1342 = vpop.permute.xlu0 %1341
    %v1343 = vsel %vm86, %v1340, %v1342
    %v1346 = vadd.f32 %v1331, %v1343
    %v1347 = vadd.f32 %v1332, %v1342
    %s1348 = sld [smem:[#allocation2 + $0x403]]
    %v1349 = vstv %s1348
    %v1350 = vmul.f32 %v1349, %v53
    %v1351 = vmul.f32 %v1349, %v54
    %1354 = vrot.lane.b32.xlu0 %v1350, 113
    %v1355 = vpop.permute.xlu0 %1354
    %1356 = vrot.lane.b32.xlu0 %v1351, 113
    %v1357 = vpop.permute.xlu0 %1356
    %v1358 = vsel %vm102, %v1355, %v1357
    %v1361 = vadd.f32 %v1346, %v1358
    %v1362 = vadd.f32 %v1347, %v1357
    %s1363 = sld [smem:[#allocation4 + $0x8]]
    %v1364 = vstv %s1363
    %v1365 = vadd.f32 %v1361, %v1364
    %v1366 = vadd.f32 %v1362, %v1364
    %v1367 = vmax.f32 %v1365, 0.0
    %v1368 = vmax.f32 %v1366, 0.0
    %s1369 = scalar_lea.vmem %s3, 1472
    %v1370 = vld [vmem:[%s1369] sm:$0xff]
    %v1371 = vld [vmem:[%s1369 + $0x8] sm:$0xff]
    %v1372 = vld [vmem:[%s1369 + $0x10] sm:$0xff]
    %v1373 = vld [vmem:[%s1369 + $0x18] sm:$0xff]
    %v1374 = vld [vmem:[%s1369 + $0x20] sm:$0xff]
    %v1375 = vld [vmem:[%s1369 + $0x28] sm:$0xff]
    %v1376 = vld [vmem:[%s1369 + $0x30] sm:$0xff]
    %v1377 = vld [vmem:[%s1369 + $0x38] sm:$0xff]
    %v1378 = vld [vmem:[%s1369 + $0x40] sm:$0xff]
    %v1379 = vld [vmem:[%s1369 + $0x48] sm:$0xff]
    %v1380 = vld [vmem:[%s1369 + $0x50] sm:$0xff]
    %v1381 = vld [vmem:[%s1369 + $0x58] sm:$0xff]
    %v1382 = vld [vmem:[%s1369 + $0x60] sm:$0xff]
    %v1383 = vld [vmem:[%s1369 + $0x68] sm:$0xff]
    %v1384 = vld [vmem:[%s1369 + $0x70] sm:$0xff]
    %v1385 = vld [vmem:[%s1369 + $0x78] sm:$0xff]
    %v1386 = vld [vmem:[%s1369 + $0x80] sm:$0xff]
    %v1387 = vld [vmem:[%s1369 + $0x88] sm:$0xff]
    %v1388 = vld [vmem:[%s1369 + $0x90] sm:$0xff]
    %v1389 = vld [vmem:[%s1369 + $0x98] sm:$0xff]
    %v1390 = vld [vmem:[%s1369 + $0xa0] sm:$0xff]
    %v1391 = vld [vmem:[%s1369 + $0xa8] sm:$0xff]
    %v1392 = vld [vmem:[%s1369 + $0xb0] sm:$0x1f]
    %v1394 = vsel %vm137, %v1368, 0
    %v1397 = vsel %vm141, %v1392, 0
    %1399 = vmatprep.subr.mxu0 0.0
    %1400 = vmatpush1.msra.mxu0 %v1385
    %1401 = vmatprep.subr.mxu0 0.0
    %1402 = vmatpush1.msra.mxu0 %v1384
    %1403 = vmatprep.subr.mxu0 0.0
    %1404 = vmatpush1.msra.mxu0 %v1383
    %1405 = vmatprep.subr.mxu0 0.0
    %1406 = vmatpush1.msra.mxu0 %v1382
    %1407 = vmatprep.subr.mxu0 0.0
    %1408 = vmatpush1.msra.mxu0 %v1381
    %1409 = vmatprep.subr.mxu0 0.0
    %1410 = vmatpush1.msra.mxu0 %v1380
    %1411 = vmatprep.subr.mxu0 0.0
    %1412 = vmatpush1.msra.mxu0 %v1379
    %1413 = vmatprep.subr.mxu0 0.0
    %1414 = vmatpush1.msra.mxu0 %v1378
    %1415 = vmatprep.subr.mxu0 0.0
    %1416 = vmatpush1.msra.mxu0 %v1377
    %1417 = vmatprep.subr.mxu0 0.0
    %1418 = vmatpush1.msra.mxu0 %v1376
    %1419 = vmatprep.subr.mxu0 0.0
    %1420 = vmatpush1.msra.mxu0 %v1375
    %1421 = vmatprep.subr.mxu0 0.0
    %1422 = vmatpush1.msra.mxu0 %v1374
    %1423 = vmatprep.subr.mxu0 0.0
    %1424 = vmatpush1.msra.mxu0 %v1373
    %1425 = vmatprep.subr.mxu0 0.0
    %1426 = vmatpush1.msra.mxu0 %v1372
    %1427 = vmatprep.subr.mxu0 0.0
    %1428 = vmatpush1.msra.mxu0 %v1371
    %1429 = vmatprep.subr.mxu0 0.0
    %1430 = vmatpush1.msra.mxu0 %v1370
    %1431 = vmatprep.subr.mxu0 0.0
    %1432 = vmatpush2.msra.mxu0 0.0
    %1433 = vmatprep.subr.mxu0 0.0
    %1434 = vmatpush2.msra.mxu0 0.0
    %1435 = vmatprep.subr.mxu0 0.0
    %1436 = vmatpush2.msra.mxu0 0.0
    %1437 = vmatprep.subr.mxu0 0.0
    %1438 = vmatpush2.msra.mxu0 0.0
    %1439 = vmatprep.subr.mxu0 0.0
    %1440 = vmatpush2.msra.mxu0 0.0
    %1441 = vmatprep.subr.mxu0 0.0
    %1442 = vmatpush2.msra.mxu0 0.0
    %1443 = vmatprep.subr.mxu0 0.0
    %1444 = vmatpush2.msra.mxu0 0.0
    %1445 = vmatprep.subr.mxu0 0.0
    %1446 = vmatpush2.msra.mxu0 0.0
    %1447 = vmatprep.subr.mxu0 0.0
    %1448 = vmatpush2.msra.mxu0 0.0
    %1449 = vmatprep.subr.mxu0 0.0
    %1450 = vmatpush2.msra.mxu0 %v1397
    %1451 = vmatprep.subr.mxu0 0.0
    %1452 = vmatpush2.msra.mxu0 %v1391
    %1453 = vmatprep.subr.mxu0 0.0
    %1454 = vmatpush2.msra.mxu0 %v1390
    %1455 = vmatprep.subr.mxu0 0.0
    %1456 = vmatpush2.msra.mxu0 %v1389
    %1457 = vmatprep.subr.mxu0 0.0
    %1458 = vmatpush2.msra.mxu0 %v1388
    %1459 = vmatprep.subr.mxu0 0.0
    %1460 = vmatpush2.msra.mxu0 %v1387
    %1461 = vmatprep.subr.mxu0 0.0
    %1462 = vmatpush2.msra.mxu0 %v1386
    %1463 = vmatprep.mubr.f32.mxu0 %v1394
    %1464 = vmatmul.mubr.f32.gmra.mxu0 %v1367
    %v1465 = vpop.f32.mrf.mxu0
    %v1466 = vadd.f32 0.0, %v1465
    %v1467 = vpop.f32.mrf.mxu0
    %1468 = vdwg.mxu0
    %v1469 = vadd.f32 %v1313, %v1466
    %s1470 = sld [smem:[#allocation2 + $0x480]]
    %v1471 = vstv %s1470
    %v1472 = vmul.f32 %v1471, %v53
    %v1473 = vmul.f32 %v1471, %v54
    %s1474 = sld [smem:[#allocation2 + $0x481]]
    %v1475 = vstv %s1474
    %v1476 = vmul.f32 %v1475, %v53
    %v1477 = vmul.f32 %v1475, %v54
    %1480 = vrot.lane.b32.xlu0 %v1476, 127
    %v1481 = vpop.permute.xlu0 %1480
    %1482 = vrot.lane.b32.xlu0 %v1477, 127
    %v1483 = vpop.permute.xlu0 %1482
    %v1484 = vsel %vm70, %v1481, %v1483
    %v1487 = vadd.f32 %v1472, %v1484
    %v1488 = vadd.f32 %v1473, %v1483
    %s1489 = sld [smem:[#allocation2 + $0x482]]
    %v1490 = vstv %s1489
    %v1491 = vmul.f32 %v1490, %v53
    %v1492 = vmul.f32 %v1490, %v54
    %1495 = vrot.lane.b32.xlu0 %v1491, 114
    %v1496 = vpop.permute.xlu0 %1495
    %1497 = vrot.lane.b32.xlu0 %v1492, 114
    %v1498 = vpop.permute.xlu0 %1497
    %v1499 = vsel %vm86, %v1496, %v1498
    %v1502 = vadd.f32 %v1487, %v1499
    %v1503 = vadd.f32 %v1488, %v1498
    %s1504 = sld [smem:[#allocation2 + $0x483]]
    %v1505 = vstv %s1504
    %v1506 = vmul.f32 %v1505, %v53
    %v1507 = vmul.f32 %v1505, %v54
    %1510 = vrot.lane.b32.xlu0 %v1506, 113
    %v1511 = vpop.permute.xlu0 %1510
    %1512 = vrot.lane.b32.xlu0 %v1507, 113
    %v1513 = vpop.permute.xlu0 %1512
    %v1514 = vsel %vm102, %v1511, %v1513
    %v1517 = vadd.f32 %v1502, %v1514
    %v1518 = vadd.f32 %v1503, %v1513
    %s1519 = sld [smem:[#allocation4 + $0x9]]
    %v1520 = vstv %s1519
    %v1521 = vadd.f32 %v1517, %v1520
    %v1522 = vadd.f32 %v1518, %v1520
    %v1523 = vmax.f32 %v1521, 0.0
    %v1524 = vmax.f32 %v1522, 0.0
    %s1525 = scalar_lea.vmem %s3, 1656
    %v1526 = vld [vmem:[%s1525] sm:$0xff]
    %v1527 = vld [vmem:[%s1525 + $0x8] sm:$0xff]
    %v1528 = vld [vmem:[%s1525 + $0x10] sm:$0xff]
    %v1529 = vld [vmem:[%s1525 + $0x18] sm:$0xff]
    %v1530 = vld [vmem:[%s1525 + $0x20] sm:$0xff]
    %v1531 = vld [vmem:[%s1525 + $0x28] sm:$0xff]
    %v1532 = vld [vmem:[%s1525 + $0x30] sm:$0xff]
    %v1533 = vld [vmem:[%s1525 + $0x38] sm:$0xff]
    %v1534 = vld [vmem:[%s1525 + $0x40] sm:$0xff]
    %v1535 = vld [vmem:[%s1525 + $0x48] sm:$0xff]
    %v1536 = vld [vmem:[%s1525 + $0x50] sm:$0xff]
    %v1537 = vld [vmem:[%s1525 + $0x58] sm:$0xff]
    %v1538 = vld [vmem:[%s1525 + $0x60] sm:$0xff]
    %v1539 = vld [vmem:[%s1525 + $0x68] sm:$0xff]
    %v1540 = vld [vmem:[%s1525 + $0x70] sm:$0xff]
    %v1541 = vld [vmem:[%s1525 + $0x78] sm:$0xff]
    %v1542 = vld [vmem:[%s1525 + $0x80] sm:$0xff]
    %v1543 = vld [vmem:[%s1525 + $0x88] sm:$0xff]
    %v1544 = vld [vmem:[%s1525 + $0x90] sm:$0xff]
    %v1545 = vld [vmem:[%s1525 + $0x98] sm:$0xff]
    %v1546 = vld [vmem:[%s1525 + $0xa0] sm:$0xff]
    %v1547 = vld [vmem:[%s1525 + $0xa8] sm:$0xff]
    %v1548 = vld [vmem:[%s1525 + $0xb0] sm:$0x1f]
    %v1550 = vsel %vm137, %v1524, 0
    %v1553 = vsel %vm141, %v1548, 0
    %1555 = vmatprep.subr.mxu0 0.0
    %1556 = vmatpush1.msra.mxu0 %v1541
    %1557 = vmatprep.subr.mxu0 0.0
    %1558 = vmatpush1.msra.mxu0 %v1540
    %1559 = vmatprep.subr.mxu0 0.0
    %1560 = vmatpush1.msra.mxu0 %v1539
    %1561 = vmatprep.subr.mxu0 0.0
    %1562 = vmatpush1.msra.mxu0 %v1538
    %1563 = vmatprep.subr.mxu0 0.0
    %1564 = vmatpush1.msra.mxu0 %v1537
    %1565 = vmatprep.subr.mxu0 0.0
    %1566 = vmatpush1.msra.mxu0 %v1536
    %1567 = vmatprep.subr.mxu0 0.0
    %1568 = vmatpush1.msra.mxu0 %v1535
    %1569 = vmatprep.subr.mxu0 0.0
    %1570 = vmatpush1.msra.mxu0 %v1534
    %1571 = vmatprep.subr.mxu0 0.0
    %1572 = vmatpush1.msra.mxu0 %v1533
    %1573 = vmatprep.subr.mxu0 0.0
    %1574 = vmatpush1.msra.mxu0 %v1532
    %1575 = vmatprep.subr.mxu0 0.0
    %1576 = vmatpush1.msra.mxu0 %v1531
    %1577 = vmatprep.subr.mxu0 0.0
    %1578 = vmatpush1.msra.mxu0 %v1530
    %1579 = vmatprep.subr.mxu0 0.0
    %1580 = vmatpush1.msra.mxu0 %v1529
    %1581 = vmatprep.subr.mxu0 0.0
    %1582 = vmatpush1.msra.mxu0 %v1528
    %1583 = vmatprep.subr.mxu0 0.0
    %1584 = vmatpush1.msra.mxu0 %v1527
    %1585 = vmatprep.subr.mxu0 0.0
    %1586 = vmatpush1.msra.mxu0 %v1526
    %1587 = vmatprep.subr.mxu0 0.0
    %1588 = vmatpush2.msra.mxu0 0.0
    %1589 = vmatprep.subr.mxu0 0.0
    %1590 = vmatpush2.msra.mxu0 0.0
    %1591 = vmatprep.subr.mxu0 0.0
    %1592 = vmatpush2.msra.mxu0 0.0
    %1593 = vmatprep.subr.mxu0 0.0
    %1594 = vmatpush2.msra.mxu0 0.0
    %1595 = vmatprep.subr.mxu0 0.0
    %1596 = vmatpush2.msra.mxu0 0.0
    %1597 = vmatprep.subr.mxu0 0.0
    %1598 = vmatpush2.msra.mxu0 0.0
    %1599 = vmatprep.subr.mxu0 0.0
    %1600 = vmatpush2.msra.mxu0 0.0
    %1601 = vmatprep.subr.mxu0 0.0
    %1602 = vmatpush2.msra.mxu0 0.0
    %1603 = vmatprep.subr.mxu0 0.0
    %1604 = vmatpush2.msra.mxu0 0.0
    %1605 = vmatprep.subr.mxu0 0.0
    %1606 = vmatpush2.msra.mxu0 %v1553
    %1607 = vmatprep.subr.mxu0 0.0
    %1608 = vmatpush2.msra.mxu0 %v1547
    %1609 = vmatprep.subr.mxu0 0.0
    %1610 = vmatpush2.msra.mxu0 %v1546
    %1611 = vmatprep.subr.mxu0 0.0
    %1612 = vmatpush2.msra.mxu0 %v1545
    %1613 = vmatprep.subr.mxu0 0.0
    %1614 = vmatpush2.msra.mxu0 %v1544
    %1615 = vmatprep.subr.mxu0 0.0
    %1616 = vmatpush2.msra.mxu0 %v1543
    %1617 = vmatprep.subr.mxu0 0.0
    %1618 = vmatpush2.msra.mxu0 %v1542
    %1619 = vmatprep.mubr.f32.mxu0 %v1550
    %1620 = vmatmul.mubr.f32.gmra.mxu0 %v1523
    %v1621 = vpop.f32.mrf.mxu0
    %v1622 = vadd.f32 0.0, %v1621
    %v1623 = vpop.f32.mrf.mxu0
    %1624 = vdwg.mxu0
    %v1625 = vadd.f32 %v1469, %v1622
    %s1626 = sld [smem:[#allocation2 + $0x500]]
    %v1627 = vstv %s1626
    %v1628 = vmul.f32 %v1627, %v53
    %v1629 = vmul.f32 %v1627, %v54
    %s1630 = sld [smem:[#allocation2 + $0x501]]
    %v1631 = vstv %s1630
    %v1632 = vmul.f32 %v1631, %v53
    %v1633 = vmul.f32 %v1631, %v54
    %1636 = vrot.lane.b32.xlu0 %v1632, 127
    %v1637 = vpop.permute.xlu0 %1636
    %1638 = vrot.lane.b32.xlu0 %v1633, 127
    %v1639 = vpop.permute.xlu0 %1638
    %v1640 = vsel %vm70, %v1637, %v1639
    %v1643 = vadd.f32 %v1628, %v1640
    %v1644 = vadd.f32 %v1629, %v1639
    %s1645 = sld [smem:[#allocation2 + $0x502]]
    %v1646 = vstv %s1645
    %v1647 = vmul.f32 %v1646, %v53
    %v1648 = vmul.f32 %v1646, %v54
    %1651 = vrot.lane.b32.xlu0 %v1647, 114
    %v1652 = vpop.permute.xlu0 %1651
    %1653 = vrot.lane.b32.xlu0 %v1648, 114
    %v1654 = vpop.permute.xlu0 %1653
    %v1655 = vsel %vm86, %v1652, %v1654
    %v1658 = vadd.f32 %v1643, %v1655
    %v1659 = vadd.f32 %v1644, %v1654
    %s1660 = sld [smem:[#allocation2 + $0x503]]
    %v1661 = vstv %s1660
    %v1662 = vmul.f32 %v1661, %v53
    %v1663 = vmul.f32 %v1661, %v54
    %1666 = vrot.lane.b32.xlu0 %v1662, 113
    %v1667 = vpop.permute.xlu0 %1666
    %1668 = vrot.lane.b32.xlu0 %v1663, 113
    %v1669 = vpop.permute.xlu0 %1668
    %v1670 = vsel %vm102, %v1667, %v1669
    %v1673 = vadd.f32 %v1658, %v1670
    %v1674 = vadd.f32 %v1659, %v1669
    %s1675 = sld [smem:[#allocation4 + $0xa]]
    %v1676 = vstv %s1675
    %v1677 = vadd.f32 %v1673, %v1676
    %v1678 = vadd.f32 %v1674, %v1676
    %v1679 = vmax.f32 %v1677, 0.0
    %v1680 = vmax.f32 %v1678, 0.0
    %s1681 = scalar_lea.vmem %s3, 1840
    %v1682 = vld [vmem:[%s1681] sm:$0xff]
    %v1683 = vld [vmem:[%s1681 + $0x8] sm:$0xff]
    %v1684 = vld [vmem:[%s1681 + $0x10] sm:$0xff]
    %v1685 = vld [vmem:[%s1681 + $0x18] sm:$0xff]
    %v1686 = vld [vmem:[%s1681 + $0x20] sm:$0xff]
    %v1687 = vld [vmem:[%s1681 + $0x28] sm:$0xff]
    %v1688 = vld [vmem:[%s1681 + $0x30] sm:$0xff]
    %v1689 = vld [vmem:[%s1681 + $0x38] sm:$0xff]
    %v1690 = vld [vmem:[%s1681 + $0x40] sm:$0xff]
    %v1691 = vld [vmem:[%s1681 + $0x48] sm:$0xff]
    %v1692 = vld [vmem:[%s1681 + $0x50] sm:$0xff]
    %v1693 = vld [vmem:[%s1681 + $0x58] sm:$0xff]
    %v1694 = vld [vmem:[%s1681 + $0x60] sm:$0xff]
    %v1695 = vld [vmem:[%s1681 + $0x68] sm:$0xff]
    %v1696 = vld [vmem:[%s1681 + $0x70] sm:$0xff]
    %v1697 = vld [vmem:[%s1681 + $0x78] sm:$0xff]
    %v1698 = vld [vmem:[%s1681 + $0x80] sm:$0xff]
    %v1699 = vld [vmem:[%s1681 + $0x88] sm:$0xff]
    %v1700 = vld [vmem:[%s1681 + $0x90] sm:$0xff]
    %v1701 = vld [vmem:[%s1681 + $0x98] sm:$0xff]
    %v1702 = vld [vmem:[%s1681 + $0xa0] sm:$0xff]
    %v1703 = vld [vmem:[%s1681 + $0xa8] sm:$0xff]
    %v1704 = vld [vmem:[%s1681 + $0xb0] sm:$0x1f]
    %v1706 = vsel %vm137, %v1680, 0
    %v1709 = vsel %vm141, %v1704, 0
    %1711 = vmatprep.subr.mxu0 0.0
    %1712 = vmatpush1.msra.mxu0 %v1697
    %1713 = vmatprep.subr.mxu0 0.0
    %1714 = vmatpush1.msra.mxu0 %v1696
    %1715 = vmatprep.subr.mxu0 0.0
    %1716 = vmatpush1.msra.mxu0 %v1695
    %1717 = vmatprep.subr.mxu0 0.0
    %1718 = vmatpush1.msra.mxu0 %v1694
    %1719 = vmatprep.subr.mxu0 0.0
    %1720 = vmatpush1.msra.mxu0 %v1693
    %1721 = vmatprep.subr.mxu0 0.0
    %1722 = vmatpush1.msra.mxu0 %v1692
    %1723 = vmatprep.subr.mxu0 0.0
    %1724 = vmatpush1.msra.mxu0 %v1691
    %1725 = vmatprep.subr.mxu0 0.0
    %1726 = vmatpush1.msra.mxu0 %v1690
    %1727 = vmatprep.subr.mxu0 0.0
    %1728 = vmatpush1.msra.mxu0 %v1689
    %1729 = vmatprep.subr.mxu0 0.0
    %1730 = vmatpush1.msra.mxu0 %v1688
    %1731 = vmatprep.subr.mxu0 0.0
    %1732 = vmatpush1.msra.mxu0 %v1687
    %1733 = vmatprep.subr.mxu0 0.0
    %1734 = vmatpush1.msra.mxu0 %v1686
    %1735 = vmatprep.subr.mxu0 0.0
    %1736 = vmatpush1.msra.mxu0 %v1685
    %1737 = vmatprep.subr.mxu0 0.0
    %1738 = vmatpush1.msra.mxu0 %v1684
    %1739 = vmatprep.subr.mxu0 0.0
    %1740 = vmatpush1.msra.mxu0 %v1683
    %1741 = vmatprep.subr.mxu0 0.0
    %1742 = vmatpush1.msra.mxu0 %v1682
    %1743 = vmatprep.subr.mxu0 0.0
    %1744 = vmatpush2.msra.mxu0 0.0
    %1745 = vmatprep.subr.mxu0 0.0
    %1746 = vmatpush2.msra.mxu0 0.0
    %1747 = vmatprep.subr.mxu0 0.0
    %1748 = vmatpush2.msra.mxu0 0.0
    %1749 = vmatprep.subr.mxu0 0.0
    %1750 = vmatpush2.msra.mxu0 0.0
    %1751 = vmatprep.subr.mxu0 0.0
    %1752 = vmatpush2.msra.mxu0 0.0
    %1753 = vmatprep.subr.mxu0 0.0
    %1754 = vmatpush2.msra.mxu0 0.0
    %1755 = vmatprep.subr.mxu0 0.0
    %1756 = vmatpush2.msra.mxu0 0.0
    %1757 = vmatprep.subr.mxu0 0.0
    %1758 = vmatpush2.msra.mxu0 0.0
    %1759 = vmatprep.subr.mxu0 0.0
    %1760 = vmatpush2.msra.mxu0 0.0
    %1761 = vmatprep.subr.mxu0 0.0
    %1762 = vmatpush2.msra.mxu0 %v1709
    %1763 = vmatprep.subr.mxu0 0.0
    %1764 = vmatpush2.msra.mxu0 %v1703
    %1765 = vmatprep.subr.mxu0 0.0
    %1766 = vmatpush2.msra.mxu0 %v1702
    %1767 = vmatprep.subr.mxu0 0.0
    %1768 = vmatpush2.msra.mxu0 %v1701
    %1769 = vmatprep.subr.mxu0 0.0
    %1770 = vmatpush2.msra.mxu0 %v1700
    %1771 = vmatprep.subr.mxu0 0.0
    %1772 = vmatpush2.msra.mxu0 %v1699
    %1773 = vmatprep.subr.mxu0 0.0
    %1774 = vmatpush2.msra.mxu0 %v1698
    %1775 = vmatprep.mubr.f32.mxu0 %v1706
    %1776 = vmatmul.mubr.f32.gmra.mxu0 %v1679
    %v1777 = vpop.f32.mrf.mxu0
    %v1778 = vadd.f32 0.0, %v1777
    %v1779 = vpop.f32.mrf.mxu0
    %1780 = vdwg.mxu0
    %v1781 = vadd.f32 %v1625, %v1778
    %s1782 = sld [smem:[#allocation2 + $0x580]]
    %v1783 = vstv %s1782
    %v1784 = vmul.f32 %v1783, %v53
    %v1785 = vmul.f32 %v1783, %v54
    %s1786 = sld [smem:[#allocation2 + $0x581]]
    %v1787 = vstv %s1786
    %v1788 = vmul.f32 %v1787, %v53
    %v1789 = vmul.f32 %v1787, %v54
    %1792 = vrot.lane.b32.xlu0 %v1788, 127
    %v1793 = vpop.permute.xlu0 %1792
    %1794 = vrot.lane.b32.xlu0 %v1789, 127
    %v1795 = vpop.permute.xlu0 %1794
    %v1796 = vsel %vm70, %v1793, %v1795
    %v1799 = vadd.f32 %v1784, %v1796
    %v1800 = vadd.f32 %v1785, %v1795
    %s1801 = sld [smem:[#allocation2 + $0x582]]
    %v1802 = vstv %s1801
    %v1803 = vmul.f32 %v1802, %v53
    %v1804 = vmul.f32 %v1802, %v54
    %1807 = vrot.lane.b32.xlu0 %v1803, 114
    %v1808 = vpop.permute.xlu0 %1807
    %1809 = vrot.lane.b32.xlu0 %v1804, 114
    %v1810 = vpop.permute.xlu0 %1809
    %v1811 = vsel %vm86, %v1808, %v1810
    %v1814 = vadd.f32 %v1799, %v1811
    %v1815 = vadd.f32 %v1800, %v1810
    %s1816 = sld [smem:[#allocation2 + $0x583]]
    %v1817 = vstv %s1816
    %v1818 = vmul.f32 %v1817, %v53
    %v1819 = vmul.f32 %v1817, %v54
    %1822 = vrot.lane.b32.xlu0 %v1818, 113
    %v1823 = vpop.permute.xlu0 %1822
    %1824 = vrot.lane.b32.xlu0 %v1819, 113
    %v1825 = vpop.permute.xlu0 %1824
    %v1826 = vsel %vm102, %v1823, %v1825
    %v1829 = vadd.f32 %v1814, %v1826
    %v1830 = vadd.f32 %v1815, %v1825
    %s1831 = sld [smem:[#allocation4 + $0xb]]
    %v1832 = vstv %s1831
    %v1833 = vadd.f32 %v1829, %v1832
    %v1834 = vadd.f32 %v1830, %v1832
    %v1835 = vmax.f32 %v1833, 0.0
    %v1836 = vmax.f32 %v1834, 0.0
    %s1837 = scalar_lea.vmem %s3, 2024
    %v1838 = vld [vmem:[%s1837] sm:$0xff]
    %v1839 = vld [vmem:[%s1837 + $0x8] sm:$0xff]
    %v1840 = vld [vmem:[%s1837 + $0x10] sm:$0xff]
    %v1841 = vld [vmem:[%s1837 + $0x18] sm:$0xff]
    %v1842 = vld [vmem:[%s1837 + $0x20] sm:$0xff]
    %v1843 = vld [vmem:[%s1837 + $0x28] sm:$0xff]
    %v1844 = vld [vmem:[%s1837 + $0x30] sm:$0xff]
    %v1845 = vld [vmem:[%s1837 + $0x38] sm:$0xff]
    %v1846 = vld [vmem:[%s1837 + $0x40] sm:$0xff]
    %v1847 = vld [vmem:[%s1837 + $0x48] sm:$0xff]
    %v1848 = vld [vmem:[%s1837 + $0x50] sm:$0xff]
    %v1849 = vld [vmem:[%s1837 + $0x58] sm:$0xff]
    %v1850 = vld [vmem:[%s1837 + $0x60] sm:$0xff]
    %v1851 = vld [vmem:[%s1837 + $0x68] sm:$0xff]
    %v1852 = vld [vmem:[%s1837 + $0x70] sm:$0xff]
    %v1853 = vld [vmem:[%s1837 + $0x78] sm:$0xff]
    %v1854 = vld [vmem:[%s1837 + $0x80] sm:$0xff]
    %v1855 = vld [vmem:[%s1837 + $0x88] sm:$0xff]
    %v1856 = vld [vmem:[%s1837 + $0x90] sm:$0xff]
    %v1857 = vld [vmem:[%s1837 + $0x98] sm:$0xff]
    %v1858 = vld [vmem:[%s1837 + $0xa0] sm:$0xff]
    %v1859 = vld [vmem:[%s1837 + $0xa8] sm:$0xff]
    %v1860 = vld [vmem:[%s1837 + $0xb0] sm:$0x1f]
    %v1862 = vsel %vm137, %v1836, 0
    %v1865 = vsel %vm141, %v1860, 0
    %1867 = vmatprep.subr.mxu0 0.0
    %1868 = vmatpush1.msra.mxu0 %v1853
    %1869 = vmatprep.subr.mxu0 0.0
    %1870 = vmatpush1.msra.mxu0 %v1852
    %1871 = vmatprep.subr.mxu0 0.0
    %1872 = vmatpush1.msra.mxu0 %v1851
    %1873 = vmatprep.subr.mxu0 0.0
    %1874 = vmatpush1.msra.mxu0 %v1850
    %1875 = vmatprep.subr.mxu0 0.0
    %1876 = vmatpush1.msra.mxu0 %v1849
    %1877 = vmatprep.subr.mxu0 0.0
    %1878 = vmatpush1.msra.mxu0 %v1848
    %1879 = vmatprep.subr.mxu0 0.0
    %1880 = vmatpush1.msra.mxu0 %v1847
    %1881 = vmatprep.subr.mxu0 0.0
    %1882 = vmatpush1.msra.mxu0 %v1846
    %1883 = vmatprep.subr.mxu0 0.0
    %1884 = vmatpush1.msra.mxu0 %v1845
    %1885 = vmatprep.subr.mxu0 0.0
    %1886 = vmatpush1.msra.mxu0 %v1844
    %1887 = vmatprep.subr.mxu0 0.0
    %1888 = vmatpush1.msra.mxu0 %v1843
    %1889 = vmatprep.subr.mxu0 0.0
    %1890 = vmatpush1.msra.mxu0 %v1842
    %1891 = vmatprep.subr.mxu0 0.0
    %1892 = vmatpush1.msra.mxu0 %v1841
    %1893 = vmatprep.subr.mxu0 0.0
    %1894 = vmatpush1.msra.mxu0 %v1840
    %1895 = vmatprep.subr.mxu0 0.0
    %1896 = vmatpush1.msra.mxu0 %v1839
    %1897 = vmatprep.subr.mxu0 0.0
    %1898 = vmatpush1.msra.mxu0 %v1838
    %1899 = vmatprep.subr.mxu0 0.0
    %1900 = vmatpush2.msra.mxu0 0.0
    %1901 = vmatprep.subr.mxu0 0.0
    %1902 = vmatpush2.msra.mxu0 0.0
    %1903 = vmatprep.subr.mxu0 0.0
    %1904 = vmatpush2.msra.mxu0 0.0
    %1905 = vmatprep.subr.mxu0 0.0
    %1906 = vmatpush2.msra.mxu0 0.0
    %1907 = vmatprep.subr.mxu0 0.0
    %1908 = vmatpush2.msra.mxu0 0.0
    %1909 = vmatprep.subr.mxu0 0.0
    %1910 = vmatpush2.msra.mxu0 0.0
    %1911 = vmatprep.subr.mxu0 0.0
    %1912 = vmatpush2.msra.mxu0 0.0
    %1913 = vmatprep.subr.mxu0 0.0
    %1914 = vmatpush2.msra.mxu0 0.0
    %1915 = vmatprep.subr.mxu0 0.0
    %1916 = vmatpush2.msra.mxu0 0.0
    %1917 = vmatprep.subr.mxu0 0.0
    %1918 = vmatpush2.msra.mxu0 %v1865
    %1919 = vmatprep.subr.mxu0 0.0
    %1920 = vmatpush2.msra.mxu0 %v1859
    %1921 = vmatprep.subr.mxu0 0.0
    %1922 = vmatpush2.msra.mxu0 %v1858
    %1923 = vmatprep.subr.mxu0 0.0
    %1924 = vmatpush2.msra.mxu0 %v1857
    %1925 = vmatprep.subr.mxu0 0.0
    %1926 = vmatpush2.msra.mxu0 %v1856
    %1927 = vmatprep.subr.mxu0 0.0
    %1928 = vmatpush2.msra.mxu0 %v1855
    %1929 = vmatprep.subr.mxu0 0.0
    %1930 = vmatpush2.msra.mxu0 %v1854
    %1931 = vmatprep.mubr.f32.mxu0 %v1862
    %1932 = vmatmul.mubr.f32.gmra.mxu0 %v1835
    %v1933 = vpop.f32.mrf.mxu0
    %v1934 = vadd.f32 0.0, %v1933
    %v1935 = vpop.f32.mrf.mxu0
    %1936 = vdwg.mxu0
    %v1937 = vadd.f32 %v1781, %v1934
    %s1938 = sld [smem:[#allocation2 + $0x600]]
    %v1939 = vstv %s1938
    %v1940 = vmul.f32 %v1939, %v53
    %v1941 = vmul.f32 %v1939, %v54
    %s1942 = sld [smem:[#allocation2 + $0x601]]
    %v1943 = vstv %s1942
    %v1944 = vmul.f32 %v1943, %v53
    %v1945 = vmul.f32 %v1943, %v54
    %1948 = vrot.lane.b32.xlu0 %v1944, 127
    %v1949 = vpop.permute.xlu0 %1948
    %1950 = vrot.lane.b32.xlu0 %v1945, 127
    %v1951 = vpop.permute.xlu0 %1950
    %v1952 = vsel %vm70, %v1949, %v1951
    %v1955 = vadd.f32 %v1940, %v1952
    %v1956 = vadd.f32 %v1941, %v1951
    %s1957 = sld [smem:[#allocation2 + $0x602]]
    %v1958 = vstv %s1957
    %v1959 = vmul.f32 %v1958, %v53
    %v1960 = vmul.f32 %v1958, %v54
    %1963 = vrot.lane.b32.xlu0 %v1959, 114
    %v1964 = vpop.permute.xlu0 %1963
    %1965 = vrot.lane.b32.xlu0 %v1960, 114
    %v1966 = vpop.permute.xlu0 %1965
    %v1967 = vsel %vm86, %v1964, %v1966
    %v1970 = vadd.f32 %v1955, %v1967
    %v1971 = vadd.f32 %v1956, %v1966
    %s1972 = sld [smem:[#allocation2 + $0x603]]
    %v1973 = vstv %s1972
    %v1974 = vmul.f32 %v1973, %v53
    %v1975 = vmul.f32 %v1973, %v54
    %1978 = vrot.lane.b32.xlu0 %v1974, 113
    %v1979 = vpop.permute.xlu0 %1978
    %1980 = vrot.lane.b32.xlu0 %v1975, 113
    %v1981 = vpop.permute.xlu0 %1980
    %v1982 = vsel %vm102, %v1979, %v1981
    %v1985 = vadd.f32 %v1970, %v1982
    %v1986 = vadd.f32 %v1971, %v1981
    %s1987 = sld [smem:[#allocation4 + $0xc]]
    %v1988 = vstv %s1987
    %v1989 = vadd.f32 %v1985, %v1988
    %v1990 = vadd.f32 %v1986, %v1988
    %v1991 = vmax.f32 %v1989, 0.0
    %v1992 = vmax.f32 %v1990, 0.0
    %s1993 = scalar_lea.vmem %s3, 2208
    %v1994 = vld [vmem:[%s1993] sm:$0xff]
    %v1995 = vld [vmem:[%s1993 + $0x8] sm:$0xff]
    %v1996 = vld [vmem:[%s1993 + $0x10] sm:$0xff]
    %v1997 = vld [vmem:[%s1993 + $0x18] sm:$0xff]
    %v1998 = vld [vmem:[%s1993 + $0x20] sm:$0xff]
    %v1999 = vld [vmem:[%s1993 + $0x28] sm:$0xff]
    %v2000 = vld [vmem:[%s1993 + $0x30] sm:$0xff]
    %v2001 = vld [vmem:[%s1993 + $0x38] sm:$0xff]
    %v2002 = vld [vmem:[%s1993 + $0x40] sm:$0xff]
    %v2003 = vld [vmem:[%s1993 + $0x48] sm:$0xff]
    %v2004 = vld [vmem:[%s1993 + $0x50] sm:$0xff]
    %v2005 = vld [vmem:[%s1993 + $0x58] sm:$0xff]
    %v2006 = vld [vmem:[%s1993 + $0x60] sm:$0xff]
    %v2007 = vld [vmem:[%s1993 + $0x68] sm:$0xff]
    %v2008 = vld [vmem:[%s1993 + $0x70] sm:$0xff]
    %v2009 = vld [vmem:[%s1993 + $0x78] sm:$0xff]
    %v2010 = vld [vmem:[%s1993 + $0x80] sm:$0xff]
    %v2011 = vld [vmem:[%s1993 + $0x88] sm:$0xff]
    %v2012 = vld [vmem:[%s1993 + $0x90] sm:$0xff]
    %v2013 = vld [vmem:[%s1993 + $0x98] sm:$0xff]
    %v2014 = vld [vmem:[%s1993 + $0xa0] sm:$0xff]
    %v2015 = vld [vmem:[%s1993 + $0xa8] sm:$0xff]
    %v2016 = vld [vmem:[%s1993 + $0xb0] sm:$0x1f]
    %v2018 = vsel %vm137, %v1992, 0
    %v2021 = vsel %vm141, %v2016, 0
    %2023 = vmatprep.subr.mxu0 0.0
    %2024 = vmatpush1.msra.mxu0 %v2009
    %2025 = vmatprep.subr.mxu0 0.0
    %2026 = vmatpush1.msra.mxu0 %v2008
    %2027 = vmatprep.subr.mxu0 0.0
    %2028 = vmatpush1.msra.mxu0 %v2007
    %2029 = vmatprep.subr.mxu0 0.0
    %2030 = vmatpush1.msra.mxu0 %v2006
    %2031 = vmatprep.subr.mxu0 0.0
    %2032 = vmatpush1.msra.mxu0 %v2005
    %2033 = vmatprep.subr.mxu0 0.0
    %2034 = vmatpush1.msra.mxu0 %v2004
    %2035 = vmatprep.subr.mxu0 0.0
    %2036 = vmatpush1.msra.mxu0 %v2003
    %2037 = vmatprep.subr.mxu0 0.0
    %2038 = vmatpush1.msra.mxu0 %v2002
    %2039 = vmatprep.subr.mxu0 0.0
    %2040 = vmatpush1.msra.mxu0 %v2001
    %2041 = vmatprep.subr.mxu0 0.0
    %2042 = vmatpush1.msra.mxu0 %v2000
    %2043 = vmatprep.subr.mxu0 0.0
    %2044 = vmatpush1.msra.mxu0 %v1999
    %2045 = vmatprep.subr.mxu0 0.0
    %2046 = vmatpush1.msra.mxu0 %v1998
    %2047 = vmatprep.subr.mxu0 0.0
    %2048 = vmatpush1.msra.mxu0 %v1997
    %2049 = vmatprep.subr.mxu0 0.0
    %2050 = vmatpush1.msra.mxu0 %v1996
    %2051 = vmatprep.subr.mxu0 0.0
    %2052 = vmatpush1.msra.mxu0 %v1995
    %2053 = vmatprep.subr.mxu0 0.0
    %2054 = vmatpush1.msra.mxu0 %v1994
    %2055 = vmatprep.subr.mxu0 0.0
    %2056 = vmatpush2.msra.mxu0 0.0
    %2057 = vmatprep.subr.mxu0 0.0
    %2058 = vmatpush2.msra.mxu0 0.0
    %2059 = vmatprep.subr.mxu0 0.0
    %2060 = vmatpush2.msra.mxu0 0.0
    %2061 = vmatprep.subr.mxu0 0.0
    %2062 = vmatpush2.msra.mxu0 0.0
    %2063 = vmatprep.subr.mxu0 0.0
    %2064 = vmatpush2.msra.mxu0 0.0
    %2065 = vmatprep.subr.mxu0 0.0
    %2066 = vmatpush2.msra.mxu0 0.0
    %2067 = vmatprep.subr.mxu0 0.0
    %2068 = vmatpush2.msra.mxu0 0.0
    %2069 = vmatprep.subr.mxu0 0.0
    %2070 = vmatpush2.msra.mxu0 0.0
    %2071 = vmatprep.subr.mxu0 0.0
    %2072 = vmatpush2.msra.mxu0 0.0
    %2073 = vmatprep.subr.mxu0 0.0
    %2074 = vmatpush2.msra.mxu0 %v2021
    %2075 = vmatprep.subr.mxu0 0.0
    %2076 = vmatpush2.msra.mxu0 %v2015
    %2077 = vmatprep.subr.mxu0 0.0
    %2078 = vmatpush2.msra.mxu0 %v2014
    %2079 = vmatprep.subr.mxu0 0.0
    %2080 = vmatpush2.msra.mxu0 %v2013
    %2081 = vmatprep.subr.mxu0 0.0
    %2082 = vmatpush2.msra.mxu0 %v2012
    %2083 = vmatprep.subr.mxu0 0.0
    %2084 = vmatpush2.msra.mxu0 %v2011
    %2085 = vmatprep.subr.mxu0 0.0
    %2086 = vmatpush2.msra.mxu0 %v2010
    %2087 = vmatprep.mubr.f32.mxu0 %v2018
    %2088 = vmatmul.mubr.f32.gmra.mxu0 %v1991
    %v2089 = vpop.f32.mrf.mxu0
    %v2090 = vadd.f32 0.0, %v2089
    %v2091 = vpop.f32.mrf.mxu0
    %2092 = vdwg.mxu0
    %v2093 = vadd.f32 %v1937, %v2090
    %s2094 = sld [smem:[#allocation2 + $0x680]]
    %v2095 = vstv %s2094
    %v2096 = vmul.f32 %v2095, %v53
    %v2097 = vmul.f32 %v2095, %v54
    %s2098 = sld [smem:[#allocation2 + $0x681]]
    %v2099 = vstv %s2098
    %v2100 = vmul.f32 %v2099, %v53
    %v2101 = vmul.f32 %v2099, %v54
    %2104 = vrot.lane.b32.xlu0 %v2100, 127
    %v2105 = vpop.permute.xlu0 %2104
    %2106 = vrot.lane.b32.xlu0 %v2101, 127
    %v2107 = vpop.permute.xlu0 %2106
    %v2108 = vsel %vm70, %v2105, %v2107
    %v2111 = vadd.f32 %v2096, %v2108
    %v2112 = vadd.f32 %v2097, %v2107
    %s2113 = sld [smem:[#allocation2 + $0x682]]
    %v2114 = vstv %s2113
    %v2115 = vmul.f32 %v2114, %v53
    %v2116 = vmul.f32 %v2114, %v54
    %2119 = vrot.lane.b32.xlu0 %v2115, 114
    %v2120 = vpop.permute.xlu0 %2119
    %2121 = vrot.lane.b32.xlu0 %v2116, 114
    %v2122 = vpop.permute.xlu0 %2121
    %v2123 = vsel %vm86, %v2120, %v2122
    %v2126 = vadd.f32 %v2111, %v2123
    %v2127 = vadd.f32 %v2112, %v2122
    %s2128 = sld [smem:[#allocation2 + $0x683]]
    %v2129 = vstv %s2128
    %v2130 = vmul.f32 %v2129, %v53
    %v2131 = vmul.f32 %v2129, %v54
    %2134 = vrot.lane.b32.xlu0 %v2130, 113
    %v2135 = vpop.permute.xlu0 %2134
    %2136 = vrot.lane.b32.xlu0 %v2131, 113
    %v2137 = vpop.permute.xlu0 %2136
    %v2138 = vsel %vm102, %v2135, %v2137
    %v2141 = vadd.f32 %v2126, %v2138
    %v2142 = vadd.f32 %v2127, %v2137
    %s2143 = sld [smem:[#allocation4 + $0xd]]
    %v2144 = vstv %s2143
    %v2145 = vadd.f32 %v2141, %v2144
    %v2146 = vadd.f32 %v2142, %v2144
    %v2147 = vmax.f32 %v2145, 0.0
    %v2148 = vmax.f32 %v2146, 0.0
    %s2149 = scalar_lea.vmem %s3, 2392
    %v2150 = vld [vmem:[%s2149] sm:$0xff]
    %v2151 = vld [vmem:[%s2149 + $0x8] sm:$0xff]
    %v2152 = vld [vmem:[%s2149 + $0x10] sm:$0xff]
    %v2153 = vld [vmem:[%s2149 + $0x18] sm:$0xff]
    %v2154 = vld [vmem:[%s2149 + $0x20] sm:$0xff]
    %v2155 = vld [vmem:[%s2149 + $0x28] sm:$0xff]
    %v2156 = vld [vmem:[%s2149 + $0x30] sm:$0xff]
    %v2157 = vld [vmem:[%s2149 + $0x38] sm:$0xff]
    %v2158 = vld [vmem:[%s2149 + $0x40] sm:$0xff]
    %v2159 = vld [vmem:[%s2149 + $0x48] sm:$0xff]
    %v2160 = vld [vmem:[%s2149 + $0x50] sm:$0xff]
    %v2161 = vld [vmem:[%s2149 + $0x58] sm:$0xff]
    %v2162 = vld [vmem:[%s2149 + $0x60] sm:$0xff]
    %v2163 = vld [vmem:[%s2149 + $0x68] sm:$0xff]
    %v2164 = vld [vmem:[%s2149 + $0x70] sm:$0xff]
    %v2165 = vld [vmem:[%s2149 + $0x78] sm:$0xff]
    %v2166 = vld [vmem:[%s2149 + $0x80] sm:$0xff]
    %v2167 = vld [vmem:[%s2149 + $0x88] sm:$0xff]
    %v2168 = vld [vmem:[%s2149 + $0x90] sm:$0xff]
    %v2169 = vld [vmem:[%s2149 + $0x98] sm:$0xff]
    %v2170 = vld [vmem:[%s2149 + $0xa0] sm:$0xff]
    %v2171 = vld [vmem:[%s2149 + $0xa8] sm:$0xff]
    %v2172 = vld [vmem:[%s2149 + $0xb0] sm:$0x1f]
    %v2174 = vsel %vm137, %v2148, 0
    %v2177 = vsel %vm141, %v2172, 0
    %2179 = vmatprep.subr.mxu0 0.0
    %2180 = vmatpush1.msra.mxu0 %v2165
    %2181 = vmatprep.subr.mxu0 0.0
    %2182 = vmatpush1.msra.mxu0 %v2164
    %2183 = vmatprep.subr.mxu0 0.0
    %2184 = vmatpush1.msra.mxu0 %v2163
    %2185 = vmatprep.subr.mxu0 0.0
    %2186 = vmatpush1.msra.mxu0 %v2162
    %2187 = vmatprep.subr.mxu0 0.0
    %2188 = vmatpush1.msra.mxu0 %v2161
    %2189 = vmatprep.subr.mxu0 0.0
    %2190 = vmatpush1.msra.mxu0 %v2160
    %2191 = vmatprep.subr.mxu0 0.0
    %2192 = vmatpush1.msra.mxu0 %v2159
    %2193 = vmatprep.subr.mxu0 0.0
    %2194 = vmatpush1.msra.mxu0 %v2158
    %2195 = vmatprep.subr.mxu0 0.0
    %2196 = vmatpush1.msra.mxu0 %v2157
    %2197 = vmatprep.subr.mxu0 0.0
    %2198 = vmatpush1.msra.mxu0 %v2156
    %2199 = vmatprep.subr.mxu0 0.0
    %2200 = vmatpush1.msra.mxu0 %v2155
    %2201 = vmatprep.subr.mxu0 0.0
    %2202 = vmatpush1.msra.mxu0 %v2154
    %2203 = vmatprep.subr.mxu0 0.0
    %2204 = vmatpush1.msra.mxu0 %v2153
    %2205 = vmatprep.subr.mxu0 0.0
    %2206 = vmatpush1.msra.mxu0 %v2152
    %2207 = vmatprep.subr.mxu0 0.0
    %2208 = vmatpush1.msra.mxu0 %v2151
    %2209 = vmatprep.subr.mxu0 0.0
    %2210 = vmatpush1.msra.mxu0 %v2150
    %2211 = vmatprep.subr.mxu0 0.0
    %2212 = vmatpush2.msra.mxu0 0.0
    %2213 = vmatprep.subr.mxu0 0.0
    %2214 = vmatpush2.msra.mxu0 0.0
    %2215 = vmatprep.subr.mxu0 0.0
    %2216 = vmatpush2.msra.mxu0 0.0
    %2217 = vmatprep.subr.mxu0 0.0
    %2218 = vmatpush2.msra.mxu0 0.0
    %2219 = vmatprep.subr.mxu0 0.0
    %2220 = vmatpush2.msra.mxu0 0.0
    %2221 = vmatprep.subr.mxu0 0.0
    %2222 = vmatpush2.msra.mxu0 0.0
    %2223 = vmatprep.subr.mxu0 0.0
    %2224 = vmatpush2.msra.mxu0 0.0
    %2225 = vmatprep.subr.mxu0 0.0
    %2226 = vmatpush2.msra.mxu0 0.0
    %2227 = vmatprep.subr.mxu0 0.0
    %2228 = vmatpush2.msra.mxu0 0.0
    %2229 = vmatprep.subr.mxu0 0.0
    %2230 = vmatpush2.msra.mxu0 %v2177
    %2231 = vmatprep.subr.mxu0 0.0
    %2232 = vmatpush2.msra.mxu0 %v2171
    %2233 = vmatprep.subr.mxu0 0.0
    %2234 = vmatpush2.msra.mxu0 %v2170
    %2235 = vmatprep.subr.mxu0 0.0
    %2236 = vmatpush2.msra.mxu0 %v2169
    %2237 = vmatprep.subr.mxu0 0.0
    %2238 = vmatpush2.msra.mxu0 %v2168
    %2239 = vmatprep.subr.mxu0 0.0
    %2240 = vmatpush2.msra.mxu0 %v2167
    %2241 = vmatprep.subr.mxu0 0.0
    %2242 = vmatpush2.msra.mxu0 %v2166
    %2243 = vmatprep.mubr.f32.mxu0 %v2174
    %2244 = vmatmul.mubr.f32.gmra.mxu0 %v2147
    %v2245 = vpop.f32.mrf.mxu0
    %v2246 = vadd.f32 0.0, %v2245
    %v2247 = vpop.f32.mrf.mxu0
    %2248 = vdwg.mxu0
    %v2249 = vadd.f32 %v2093, %v2246
    %s2250 = sld [smem:[#allocation2 + $0x700]]
    %v2251 = vstv %s2250
    %v2252 = vmul.f32 %v2251, %v53
    %v2253 = vmul.f32 %v2251, %v54
    %s2254 = sld [smem:[#allocation2 + $0x701]]
    %v2255 = vstv %s2254
    %v2256 = vmul.f32 %v2255, %v53
    %v2257 = vmul.f32 %v2255, %v54
    %2260 = vrot.lane.b32.xlu0 %v2256, 127
    %v2261 = vpop.permute.xlu0 %2260
    %2262 = vrot.lane.b32.xlu0 %v2257, 127
    %v2263 = vpop.permute.xlu0 %2262
    %v2264 = vsel %vm70, %v2261, %v2263
    %v2267 = vadd.f32 %v2252, %v2264
    %v2268 = vadd.f32 %v2253, %v2263
    %s2269 = sld [smem:[#allocation2 + $0x702]]
    %v2270 = vstv %s2269
    %v2271 = vmul.f32 %v2270, %v53
    %v2272 = vmul.f32 %v2270, %v54
    %2275 = vrot.lane.b32.xlu0 %v2271, 114
    %v2276 = vpop.permute.xlu0 %2275
    %2277 = vrot.lane.b32.xlu0 %v2272, 114
    %v2278 = vpop.permute.xlu0 %2277
    %v2279 = vsel %vm86, %v2276, %v2278
    %v2282 = vadd.f32 %v2267, %v2279
    %v2283 = vadd.f32 %v2268, %v2278
    %s2284 = sld [smem:[#allocation2 + $0x703]]
    %v2285 = vstv %s2284
    %v2286 = vmul.f32 %v2285, %v53
    %v2287 = vmul.f32 %v2285, %v54
    %2290 = vrot.lane.b32.xlu0 %v2286, 113
    %v2291 = vpop.permute.xlu0 %2290
    %2292 = vrot.lane.b32.xlu0 %v2287, 113
    %v2293 = vpop.permute.xlu0 %2292
    %v2294 = vsel %vm102, %v2291, %v2293
    %v2297 = vadd.f32 %v2282, %v2294
    %v2298 = vadd.f32 %v2283, %v2293
    %s2299 = sld [smem:[#allocation4 + $0xe]]
    %v2300 = vstv %s2299
    %v2301 = vadd.f32 %v2297, %v2300
    %v2302 = vadd.f32 %v2298, %v2300
    %v2303 = vmax.f32 %v2301, 0.0
    %v2304 = vmax.f32 %v2302, 0.0
    %s2305 = scalar_lea.vmem %s3, 2576
    %v2306 = vld [vmem:[%s2305] sm:$0xff]
    %v2307 = vld [vmem:[%s2305 + $0x8] sm:$0xff]
    %v2308 = vld [vmem:[%s2305 + $0x10] sm:$0xff]
    %v2309 = vld [vmem:[%s2305 + $0x18] sm:$0xff]
    %v2310 = vld [vmem:[%s2305 + $0x20] sm:$0xff]
    %v2311 = vld [vmem:[%s2305 + $0x28] sm:$0xff]
    %v2312 = vld [vmem:[%s2305 + $0x30] sm:$0xff]
    %v2313 = vld [vmem:[%s2305 + $0x38] sm:$0xff]
    %v2314 = vld [vmem:[%s2305 + $0x40] sm:$0xff]
    %v2315 = vld [vmem:[%s2305 + $0x48] sm:$0xff]
    %v2316 = vld [vmem:[%s2305 + $0x50] sm:$0xff]
    %v2317 = vld [vmem:[%s2305 + $0x58] sm:$0xff]
    %v2318 = vld [vmem:[%s2305 + $0x60] sm:$0xff]
    %v2319 = vld [vmem:[%s2305 + $0x68] sm:$0xff]
    %v2320 = vld [vmem:[%s2305 + $0x70] sm:$0xff]
    %v2321 = vld [vmem:[%s2305 + $0x78] sm:$0xff]
    %v2322 = vld [vmem:[%s2305 + $0x80] sm:$0xff]
    %v2323 = vld [vmem:[%s2305 + $0x88] sm:$0xff]
    %v2324 = vld [vmem:[%s2305 + $0x90] sm:$0xff]
    %v2325 = vld [vmem:[%s2305 + $0x98] sm:$0xff]
    %v2326 = vld [vmem:[%s2305 + $0xa0] sm:$0xff]
    %v2327 = vld [vmem:[%s2305 + $0xa8] sm:$0xff]
    %v2328 = vld [vmem:[%s2305 + $0xb0] sm:$0x1f]
    %v2330 = vsel %vm137, %v2304, 0
    %v2333 = vsel %vm141, %v2328, 0
    %2335 = vmatprep.subr.mxu0 0.0
    %2336 = vmatpush1.msra.mxu0 %v2321
    %2337 = vmatprep.subr.mxu0 0.0
    %2338 = vmatpush1.msra.mxu0 %v2320
    %2339 = vmatprep.subr.mxu0 0.0
    %2340 = vmatpush1.msra.mxu0 %v2319
    %2341 = vmatprep.subr.mxu0 0.0
    %2342 = vmatpush1.msra.mxu0 %v2318
    %2343 = vmatprep.subr.mxu0 0.0
    %2344 = vmatpush1.msra.mxu0 %v2317
    %2345 = vmatprep.subr.mxu0 0.0
    %2346 = vmatpush1.msra.mxu0 %v2316
    %2347 = vmatprep.subr.mxu0 0.0
    %2348 = vmatpush1.msra.mxu0 %v2315
    %2349 = vmatprep.subr.mxu0 0.0
    %2350 = vmatpush1.msra.mxu0 %v2314
    %2351 = vmatprep.subr.mxu0 0.0
    %2352 = vmatpush1.msra.mxu0 %v2313
    %2353 = vmatprep.subr.mxu0 0.0
    %2354 = vmatpush1.msra.mxu0 %v2312
    %2355 = vmatprep.subr.mxu0 0.0
    %2356 = vmatpush1.msra.mxu0 %v2311
    %2357 = vmatprep.subr.mxu0 0.0
    %2358 = vmatpush1.msra.mxu0 %v2310
    %2359 = vmatprep.subr.mxu0 0.0
    %2360 = vmatpush1.msra.mxu0 %v2309
    %2361 = vmatprep.subr.mxu0 0.0
    %2362 = vmatpush1.msra.mxu0 %v2308
    %2363 = vmatprep.subr.mxu0 0.0
    %2364 = vmatpush1.msra.mxu0 %v2307
    %2365 = vmatprep.subr.mxu0 0.0
    %2366 = vmatpush1.msra.mxu0 %v2306
    %2367 = vmatprep.subr.mxu0 0.0
    %2368 = vmatpush2.msra.mxu0 0.0
    %2369 = vmatprep.subr.mxu0 0.0
    %2370 = vmatpush2.msra.mxu0 0.0
    %2371 = vmatprep.subr.mxu0 0.0
    %2372 = vmatpush2.msra.mxu0 0.0
    %2373 = vmatprep.subr.mxu0 0.0
    %2374 = vmatpush2.msra.mxu0 0.0
    %2375 = vmatprep.subr.mxu0 0.0
    %2376 = vmatpush2.msra.mxu0 0.0
    %2377 = vmatprep.subr.mxu0 0.0
    %2378 = vmatpush2.msra.mxu0 0.0
    %2379 = vmatprep.subr.mxu0 0.0
    %2380 = vmatpush2.msra.mxu0 0.0
    %2381 = vmatprep.subr.mxu0 0.0
    %2382 = vmatpush2.msra.mxu0 0.0
    %2383 = vmatprep.subr.mxu0 0.0
    %2384 = vmatpush2.msra.mxu0 0.0
    %2385 = vmatprep.subr.mxu0 0.0
    %2386 = vmatpush2.msra.mxu0 %v2333
    %2387 = vmatprep.subr.mxu0 0.0
    %2388 = vmatpush2.msra.mxu0 %v2327
    %2389 = vmatprep.subr.mxu0 0.0
    %2390 = vmatpush2.msra.mxu0 %v2326
    %2391 = vmatprep.subr.mxu0 0.0
    %2392 = vmatpush2.msra.mxu0 %v2325
    %2393 = vmatprep.subr.mxu0 0.0
    %2394 = vmatpush2.msra.mxu0 %v2324
    %2395 = vmatprep.subr.mxu0 0.0
    %2396 = vmatpush2.msra.mxu0 %v2323
    %2397 = vmatprep.subr.mxu0 0.0
    %2398 = vmatpush2.msra.mxu0 %v2322
    %2399 = vmatprep.mubr.f32.mxu0 %v2330
    %2400 = vmatmul.mubr.f32.gmra.mxu0 %v2303
    %v2401 = vpop.f32.mrf.mxu0
    %v2402 = vadd.f32 0.0, %v2401
    %v2403 = vpop.f32.mrf.mxu0
    %2404 = vdwg.mxu0
    %v2405 = vadd.f32 %v2249, %v2402
    %s2406 = sld [smem:[#allocation2 + $0x780]]
    %v2407 = vstv %s2406
    %v2408 = vmul.f32 %v2407, %v53
    %v2409 = vmul.f32 %v2407, %v54
    %s2410 = sld [smem:[#allocation2 + $0x781]]
    %v2411 = vstv %s2410
    %v2412 = vmul.f32 %v2411, %v53
    %v2413 = vmul.f32 %v2411, %v54
    %2416 = vrot.lane.b32.xlu0 %v2412, 127
    %v2417 = vpop.permute.xlu0 %2416
    %2418 = vrot.lane.b32.xlu0 %v2413, 127
    %v2419 = vpop.permute.xlu0 %2418
    %v2420 = vsel %vm70, %v2417, %v2419
    %v2423 = vadd.f32 %v2408, %v2420
    %v2424 = vadd.f32 %v2409, %v2419
    %s2425 = sld [smem:[#allocation2 + $0x782]]
    %v2426 = vstv %s2425
    %v2427 = vmul.f32 %v2426, %v53
    %v2428 = vmul.f32 %v2426, %v54
    %2431 = vrot.lane.b32.xlu0 %v2427, 114
    %v2432 = vpop.permute.xlu0 %2431
    %2433 = vrot.lane.b32.xlu0 %v2428, 114
    %v2434 = vpop.permute.xlu0 %2433
    %v2435 = vsel %vm86, %v2432, %v2434
    %v2438 = vadd.f32 %v2423, %v2435
    %v2439 = vadd.f32 %v2424, %v2434
    %s2440 = sld [smem:[#allocation2 + $0x783]]
    %v2441 = vstv %s2440
    %v2442 = vmul.f32 %v2441, %v53
    %v2443 = vmul.f32 %v2441, %v54
    %2446 = vrot.lane.b32.xlu0 %v2442, 113
    %v2447 = vpop.permute.xlu0 %2446
    %2448 = vrot.lane.b32.xlu0 %v2443, 113
    %v2449 = vpop.permute.xlu0 %2448
    %v2450 = vsel %vm102, %v2447, %v2449
    %v2453 = vadd.f32 %v2438, %v2450
    %v2454 = vadd.f32 %v2439, %v2449
    %s2455 = sld [smem:[#allocation4 + $0xf]]
    %v2456 = vstv %s2455
    %v2457 = vadd.f32 %v2453, %v2456
    %v2458 = vadd.f32 %v2454, %v2456
    %v2459 = vmax.f32 %v2457, 0.0
    %v2460 = vmax.f32 %v2458, 0.0
    %s2461 = scalar_lea.vmem %s3, 2760
    %v2462 = vld [vmem:[%s2461] sm:$0xff]
    %v2463 = vld [vmem:[%s2461 + $0x8] sm:$0xff]
    %v2464 = vld [vmem:[%s2461 + $0x10] sm:$0xff]
    %v2465 = vld [vmem:[%s2461 + $0x18] sm:$0xff]
    %v2466 = vld [vmem:[%s2461 + $0x20] sm:$0xff]
    %v2467 = vld [vmem:[%s2461 + $0x28] sm:$0xff]
    %v2468 = vld [vmem:[%s2461 + $0x30] sm:$0xff]
    %v2469 = vld [vmem:[%s2461 + $0x38] sm:$0xff]
    %v2470 = vld [vmem:[%s2461 + $0x40] sm:$0xff]
    %v2471 = vld [vmem:[%s2461 + $0x48] sm:$0xff]
    %v2472 = vld [vmem:[%s2461 + $0x50] sm:$0xff]
    %v2473 = vld [vmem:[%s2461 + $0x58] sm:$0xff]
    %v2474 = vld [vmem:[%s2461 + $0x60] sm:$0xff]
    %v2475 = vld [vmem:[%s2461 + $0x68] sm:$0xff]
    %v2476 = vld [vmem:[%s2461 + $0x70] sm:$0xff]
    %v2477 = vld [vmem:[%s2461 + $0x78] sm:$0xff]
    %v2478 = vld [vmem:[%s2461 + $0x80] sm:$0xff]
    %v2479 = vld [vmem:[%s2461 + $0x88] sm:$0xff]
    %v2480 = vld [vmem:[%s2461 + $0x90] sm:$0xff]
    %v2481 = vld [vmem:[%s2461 + $0x98] sm:$0xff]
    %v2482 = vld [vmem:[%s2461 + $0xa0] sm:$0xff]
    %v2483 = vld [vmem:[%s2461 + $0xa8] sm:$0xff]
    %v2484 = vld [vmem:[%s2461 + $0xb0] sm:$0x1f]
    %v2486 = vsel %vm137, %v2460, 0
    %v2489 = vsel %vm141, %v2484, 0
    %2491 = vmatprep.subr.mxu0 0.0
    %2492 = vmatpush1.msra.mxu0 %v2477
    %2493 = vmatprep.subr.mxu0 0.0
    %2494 = vmatpush1.msra.mxu0 %v2476
    %2495 = vmatprep.subr.mxu0 0.0
    %2496 = vmatpush1.msra.mxu0 %v2475
    %2497 = vmatprep.subr.mxu0 0.0
    %2498 = vmatpush1.msra.mxu0 %v2474
    %2499 = vmatprep.subr.mxu0 0.0
    %2500 = vmatpush1.msra.mxu0 %v2473
    %2501 = vmatprep.subr.mxu0 0.0
    %2502 = vmatpush1.msra.mxu0 %v2472
    %2503 = vmatprep.subr.mxu0 0.0
    %2504 = vmatpush1.msra.mxu0 %v2471
    %2505 = vmatprep.subr.mxu0 0.0
    %2506 = vmatpush1.msra.mxu0 %v2470
    %2507 = vmatprep.subr.mxu0 0.0
    %2508 = vmatpush1.msra.mxu0 %v2469
    %2509 = vmatprep.subr.mxu0 0.0
    %2510 = vmatpush1.msra.mxu0 %v2468
    %2511 = vmatprep.subr.mxu0 0.0
    %2512 = vmatpush1.msra.mxu0 %v2467
    %2513 = vmatprep.subr.mxu0 0.0
    %2514 = vmatpush1.msra.mxu0 %v2466
    %2515 = vmatprep.subr.mxu0 0.0
    %2516 = vmatpush1.msra.mxu0 %v2465
    %2517 = vmatprep.subr.mxu0 0.0
    %2518 = vmatpush1.msra.mxu0 %v2464
    %2519 = vmatprep.subr.mxu0 0.0
    %2520 = vmatpush1.msra.mxu0 %v2463
    %2521 = vmatprep.subr.mxu0 0.0
    %2522 = vmatpush1.msra.mxu0 %v2462
    %2523 = vmatprep.subr.mxu0 0.0
    %2524 = vmatpush2.msra.mxu0 0.0
    %2525 = vmatprep.subr.mxu0 0.0
    %2526 = vmatpush2.msra.mxu0 0.0
    %2527 = vmatprep.subr.mxu0 0.0
    %2528 = vmatpush2.msra.mxu0 0.0
    %2529 = vmatprep.subr.mxu0 0.0
    %2530 = vmatpush2.msra.mxu0 0.0
    %2531 = vmatprep.subr.mxu0 0.0
    %2532 = vmatpush2.msra.mxu0 0.0
    %2533 = vmatprep.subr.mxu0 0.0
    %2534 = vmatpush2.msra.mxu0 0.0
    %2535 = vmatprep.subr.mxu0 0.0
    %2536 = vmatpush2.msra.mxu0 0.0
    %2537 = vmatprep.subr.mxu0 0.0
    %2538 = vmatpush2.msra.mxu0 0.0
    %2539 = vmatprep.subr.mxu0 0.0
    %2540 = vmatpush2.msra.mxu0 0.0
    %2541 = vmatprep.subr.mxu0 0.0
    %2542 = vmatpush2.msra.mxu0 %v2489
    %2543 = vmatprep.subr.mxu0 0.0
    %2544 = vmatpush2.msra.mxu0 %v2483
    %2545 = vmatprep.subr.mxu0 0.0
    %2546 = vmatpush2.msra.mxu0 %v2482
    %2547 = vmatprep.subr.mxu0 0.0
    %2548 = vmatpush2.msra.mxu0 %v2481
    %2549 = vmatprep.subr.mxu0 0.0
    %2550 = vmatpush2.msra.mxu0 %v2480
    %2551 = vmatprep.subr.mxu0 0.0
    %2552 = vmatpush2.msra.mxu0 %v2479
    %2553 = vmatprep.subr.mxu0 0.0
    %2554 = vmatpush2.msra.mxu0 %v2478
    %2555 = vmatprep.mubr.f32.mxu0 %v2486
    %2556 = vmatmul.mubr.f32.gmra.mxu0 %v2459
    %v2557 = vpop.f32.mrf.mxu0
    %v2558 = vadd.f32 0.0, %v2557
    %v2559 = vpop.f32.mrf.mxu0
    %2560 = vdwg.mxu0
    %v2561 = vadd.f32 %v2405, %v2558
    %v2562 = vmax.f32 %v2561, 0.0
    %v2563 = vld [vmem:[%s5] sm:$0xff]
    %v2564 = vld [vmem:[%s5 + $0x8] sm:$0xff]
    %v2565 = vld [vmem:[%s5 + $0x10] sm:$0xff]
    %v2566 = vld [vmem:[%s5 + $0x18] sm:$0xff]
    %v2567 = vld [vmem:[%s5 + $0x20] sm:$0xff]
    %v2568 = vld [vmem:[%s5 + $0x28] sm:$0xff]
    %v2569 = vld [vmem:[%s5 + $0x30] sm:$0xff]
    %v2570 = vld [vmem:[%s5 + $0x38] sm:$0xff]
    %v2571 = vld [vmem:[%s6] sm:$0x1]
    %v2573 = vlaneseq
    %v2574 = vshrl.u32 %v2573, 7
    %v2575 = vsub.s32 0, %v2574
    %v2576 = vrot.slane %v2571, %v2575
    %vm2578 = vcmask 523264
    %v2580 = vsel %vm2578, %v2562, 0
    %2582 = vmatprep.subr.mxu0 0.0
    %2583 = vmatpush1.msra.mxu0 0.0
    %2584 = vmatprep.subr.mxu0 0.0
    %2585 = vmatpush1.msra.mxu0 0.0
    %2586 = vmatprep.subr.mxu0 0.0
    %2587 = vmatpush1.msra.mxu0 0.0
    %2588 = vmatprep.subr.mxu0 0.0
    %2589 = vmatpush1.msra.mxu0 0.0
    %2590 = vmatprep.subr.mxu0 0.0
    %2591 = vmatpush1.msra.mxu0 0.0
    %2592 = vmatprep.subr.mxu0 0.0
    %2593 = vmatpush1.msra.mxu0 0.0
    %2594 = vmatprep.subr.mxu0 0.0
    %2595 = vmatpush1.msra.mxu0 0.0
    %2596 = vmatprep.subr.mxu0 0.0
    %2597 = vmatpush1.msra.mxu0 0.0
    %2598 = vmatprep.subr.mxu0 0.0
    %2599 = vmatpush1.msra.mxu0 %v2570
    %2600 = vmatprep.subr.mxu0 0.0
    %2601 = vmatpush1.msra.mxu0 %v2569
    %2602 = vmatprep.subr.mxu0 0.0
    %2603 = vmatpush1.msra.mxu0 %v2568
    %2604 = vmatprep.subr.mxu0 0.0
    %2605 = vmatpush1.msra.mxu0 %v2567
    %2606 = vmatprep.subr.mxu0 0.0
    %2607 = vmatpush1.msra.mxu0 %v2566
    %2608 = vmatprep.subr.mxu0 0.0
    %2609 = vmatpush1.msra.mxu0 %v2565
    %2610 = vmatprep.subr.mxu0 0.0
    %2611 = vmatpush1.msra.mxu0 %v2564
    %2612 = vmatprep.subr.mxu0 0.0
    %2613 = vmatpush1.msra.mxu0 %v2563
    %2614 = vmatprep.subr.mxu0 0.0
    %2615 = vmatpush2.msra.mxu0 0.0
    %2616 = vmatprep.subr.mxu0 0.0
    %2617 = vmatpush2.msra.mxu0 0.0
    %2618 = vmatprep.subr.mxu0 0.0
    %2619 = vmatpush2.msra.mxu0 0.0
    %2620 = vmatprep.subr.mxu0 0.0
    %2621 = vmatpush2.msra.mxu0 0.0
    %2622 = vmatprep.subr.mxu0 0.0
    %2623 = vmatpush2.msra.mxu0 0.0
    %2624 = vmatprep.subr.mxu0 0.0
    %2625 = vmatpush2.msra.mxu0 0.0
    %2626 = vmatprep.subr.mxu0 0.0
    %2627 = vmatpush2.msra.mxu0 0.0
    %2628 = vmatprep.subr.mxu0 0.0
    %2629 = vmatpush2.msra.mxu0 0.0
    %2630 = vmatprep.subr.mxu0 0.0
    %2631 = vmatpush2.msra.mxu0 0.0
    %2632 = vmatprep.subr.mxu0 0.0
    %2633 = vmatpush2.msra.mxu0 0.0
    %2634 = vmatprep.subr.mxu0 0.0
    %2635 = vmatpush2.msra.mxu0 0.0
    %2636 = vmatprep.subr.mxu0 0.0
    %2637 = vmatpush2.msra.mxu0 0.0
    %2638 = vmatprep.subr.mxu0 0.0
    %2639 = vmatpush2.msra.mxu0 0.0
    %2640 = vmatprep.subr.mxu0 0.0
    %2641 = vmatpush2.msra.mxu0 0.0
    %2642 = vmatprep.subr.mxu0 0.0
    %2643 = vmatpush2.msra.mxu0 0.0
    %2644 = vmatprep.subr.mxu0 0.0
    %2645 = vmatpush2.msra.mxu0 0.0
    %2646 = vmatprep.mubr.f32.mxu0 0.0
    %2647 = vmatmul.mubr.f32.gmra.mxu0 %v2580
    %v2648 = vpop.f32.mrf.mxu0
    %v2649 = vadd.f32 %v2576, %v2648
    %v2650 = vpop.f32.mrf.mxu0
    %2651 = vdwg.mxu0
    %2652 = vst [vmem:[%s7] sm:$0xff] %v2649
    // Predicated region
    $region38: #{digitnet_forward.1} parent=1 // pred_check
      _
    $region39: #{digitnet_forward.1} parent=1 // pred_check_branch
      %2654 = sbr.rel (0) target = $region41
    $region40: #{digitnet_forward.1} parent=1 // pred_region
      _
    $region41: #{digitnet_forward.1} parent=1 // pred_fallthru
      _
    // Predicated region
    $region42: #{digitnet_forward.1} parent=1 // pred_check
      _
    $region43: #{digitnet_forward.1} parent=1 // pred_check_branch
      %2656 = sbr.rel (0) target = $region45
    $region44: #{digitnet_forward.1} parent=1 // pred_region
      _
    $region45: #{digitnet_forward.1} parent=1 // pred_fallthru
      _
    %2657 = vsyncpa [#allocation3], 1
    %2658 = vsyncpa [#allocation5], 1

</llo_original>
